<compile_context>
chip_gen: v6e
topology: v6e:2x2x1
jax: 0.10.0
libtpu: 0.0.40
codegen_flags: <defaults>
</compile_context>

<pallas_src>
import functools

import numpy as np
import jax
import jax.numpy as jnp
from jax import lax
from jax.experimental import pallas as pl
from jax.experimental.pallas import tpu as pltpu

C1, C2 = 16, 32  # channel widths fixed by the module definition


# ------------------------------- fused kernel ------------------------------- #

def _grayscale_cnn_kernel(
    x_ref,      # (N*H,  W)          input rows (n,i), lanes j (Cin=1)
    r1_ref,     # (3, N*H, N*H)      conv1 row-shift/select per kh
    bw1_ref,    # (3, W, W*C1)       conv1 banded weights per kh
    aff1_ref,   # (3, 1, W*C1)       [bias, gamma, beta], tiled over lanes
    g1_ref,     # (W*C1, C1)         lane -> channel gather (0/1)
    g1t_ref,    # (C1, W*C1)         channel -> lane broadcast (0/1)
    pp1_ref,    # (2, N*H2, N*H)     even/odd row selection, pool1
    cc1_ref,    # (2, W*C1, W2*C1)   even/odd column selection, pool1
    r2_ref,     # (3, N*H2, N*H2)
    bw2_ref,    # (3, W2*C1, W2*C2)
    aff2_ref,   # (3, 1, W2*C2)
    g2_ref,     # (W2*C2, C2)
    g2t_ref,    # (C2, W2*C2)
    pp2_ref,    # (2, N*H4, N*H2)
    cc2_ref,    # (2, W2*C2, W4*C2)
    ffc_ref,    # (H4, N, N*H4)      per-i4 sample-row gather for the fc
    wfc_ref,    # (H4, W4*C2, O)     fc weight slices (NCHW flatten folded in)
    bfc_ref,    # (1, O)
    o_ref,      # (N, O)
    *, eps, count1, count2):

    def dot(a, b):
        return jnp.dot(a, b, preferred_element_type=jnp.float32)

    def conv_bn_relu_pool(x, r_ref, bw_ref, aff_ref, g_ref, gt_ref,
                          pp_ref, cc_ref, count):
        # 3x3 conv (pad=1): three row-shift + banded-weight matmul taps.
        y = dot(dot(r_ref[0], x), bw_ref[0])
        for kh in (1, 2):
            y = y + dot(dot(r_ref[kh], x), bw_ref[kh])
        y = y + aff_ref[0]                                    # conv bias
        # BatchNorm: training-mode batch stats over (n, i, j), biased variance.
        inv_n = 1.0 / count
        mean_c = dot(jnp.sum(y, axis=0, keepdims=True), g_ref[...]) * inv_n
        mean_l = dot(mean_c, gt_ref[...])                     # broadcast to lanes
        cen = y - mean_l
        var_c = dot(jnp.sum(cen * cen, axis=0, keepdims=True), g_ref[...]) * inv_n
        var_l = dot(var_c, gt_ref[...])
        y = cen * lax.rsqrt(var_l + eps) * aff_ref[1] + aff_ref[2]
        y = jnp.maximum(y, 0.0)                               # ReLU
        # 2x2 max-pool: exact 0/1-selection matmuls, rows then columns.
        rmax = jnp.maximum(dot(pp_ref[0], y), dot(pp_ref[1], y))
        return jnp.maximum(dot(rmax, cc_ref[0]), dot(rmax, cc_ref[1]))

    h = conv_bn_relu_pool(x_ref[...], r1_ref, bw1_ref, aff1_ref, g1_ref, g1t_ref,
                          pp1_ref, cc1_ref, count1)
    h = conv_bn_relu_pool(h, r2_ref, bw2_ref, aff2_ref, g2_ref, g2t_ref,
                          pp2_ref, cc2_ref, count2)
    # fc + ReLU (PyTorch x.view(N, -1) NCHW order folded into wfc slices).
    acc = dot(dot(ffc_ref[0], h), wfc_ref[0])
    for i4 in range(1, ffc_ref.shape[0]):
        acc = acc + dot(dot(ffc_ref[i4], h), wfc_ref[i4])
    o_ref[...] = jnp.maximum(acc + bfc_ref[...], 0.0)


# --------------------- one-time constant / weight preparation ---------------- #

def _shift_rows(n_imgs, rows, k):
    # S[(n,i),(n',i')] = 1 iff n'==n and i' == i + k (zero rows where out of range).
    return np.kron(np.eye(n_imgs, dtype=np.float32),
                   np.eye(rows, rows, k, dtype=np.float32))


def _even_odd_rows(n_imgs, rows):
    half = rows // 2
    sel = np.zeros((2, half, rows), np.float32)
    sel[0, np.arange(half), 2 * np.arange(half)] = 1.0
    sel[1, np.arange(half), 2 * np.arange(half) + 1] = 1.0
    eye_n = np.eye(n_imgs, dtype=np.float32)
    return np.stack([np.kron(eye_n, sel[0]), np.kron(eye_n, sel[1])])


def _even_odd_cols(width, chans):
    half = width // 2
    sel = np.zeros((2, width, half), np.float32)
    sel[0, 2 * np.arange(half), np.arange(half)] = 1.0
    sel[1, 2 * np.arange(half) + 1, np.arange(half)] = 1.0
    eye_c = np.eye(chans, dtype=np.float32)
    return np.stack([np.kron(sel[0], eye_c), np.kron(sel[1], eye_c)])


def _channel_gather(width, chans):
    g = np.kron(np.ones((width, 1), np.float32), np.eye(chans, dtype=np.float32))
    return g, g.T.copy()


def _banded_conv_weight(w_oihw, width):
    # B_kh[j_in*Cin + cin, j*Cout + cout] = w[cout, cin, kh, kw], kw = j_in - j + 1.
    cout, cin, kh_sz, kw_sz = w_oihw.shape
    mats = []
    for kh in range(kh_sz):
        b = jnp.zeros((width * cin, width * cout), jnp.float32)
        for kw in range(kw_sz):
            shift = jnp.asarray(np.eye(width, width, 1 - kw, dtype=np.float32))
            b = b + jnp.kron(shift, jnp.transpose(w_oihw[:, :, kh, kw]))
        mats.append(b)
    return jnp.stack(mats)


def _lane_affine(bias, gamma, beta, width):
    return jnp.stack([jnp.tile(bias, width), jnp.tile(gamma, width),
                      jnp.tile(beta, width)])[:, None, :]


def prepare_params(params, image_size, out_dim, batch):
    H, W = image_size
    H2, W2, H4, W4 = H // 2, W // 2, H // 4, W // 4
    N = batch

    g1, g1t = _channel_gather(W, C1)
    g2, g2t = _channel_gather(W2, C2)

    # fc: PyTorch flattens NCHW (c, i4, j4); our rows are (n, i4), lanes (j4, c).
    wfc4 = params['wfc'].reshape(out_dim, C2, H4, W4)
    wfc_slices = jnp.stack([
        jnp.transpose(wfc4[:, :, i4, :], (2, 1, 0)).reshape(W4 * C2, out_dim)
        for i4 in range(H4)])
    eye_n = np.eye(N, dtype=np.float32)
    ffc = np.stack([np.kron(eye_n, np.eye(H4, dtype=np.float32)[i4:i4 + 1])
                    for i4 in range(H4)])

    return dict(
        shapes=(H, W, H2, W2),
        counts=(float(N * H * W), float(N * H2 * W2)),
        r1=jnp.asarray(np.stack([_shift_rows(N, H, kh - 1) for kh in range(3)])),
        bw1=_banded_conv_weight(params['w1'], W),
        aff1=_lane_affine(params['b1'], params['g1'], params['be1'], W),
        g1=jnp.asarray(g1), g1t=jnp.asarray(g1t),
        pp1=jnp.asarray(_even_odd_rows(N, H)),
        cc1=jnp.asarray(_even_odd_cols(W, C1)),
        r2=jnp.asarray(np.stack([_shift_rows(N, H2, kh - 1) for kh in range(3)])),
        bw2=_banded_conv_weight(params['w2'], W2),
        aff2=_lane_affine(params['b2'], params['g2'], params['be2'], W2),
        g2=jnp.asarray(g2), g2t=jnp.asarray(g2t),
        pp2=jnp.asarray(_even_odd_rows(N, H2)),
        cc2=jnp.asarray(_even_odd_cols(W2, C2)),
        ffc=jnp.asarray(ffc),
        wfcs=wfc_slices,
        bfc=params['bfc'].reshape(1, out_dim),
    )


# --------------------------------- forward ---------------------------------- #

def grayscale_cnn_forward(x_nchw, prep, out_dim):
    N = x_nchw.shape[0]
    H, W, _, _ = prep['shapes']
    x2d = x_nchw.reshape(N * H, W).astype(jnp.float32)     # Cin = 1
    count1, count2 = prep['counts']

    args = (x2d, prep['r1'], prep['bw1'], prep['aff1'], prep['g1'], prep['g1t'],
            prep['pp1'], prep['cc1'], prep['r2'], prep['bw2'], prep['aff2'],
            prep['g2'], prep['g2t'], prep['pp2'], prep['cc2'],
            prep['ffc'], prep['wfcs'], prep['bfc'])

    def full_spec(shape):
        nd = len(shape)
        return pl.BlockSpec(shape, lambda i, nd=nd: (0,) * nd)

    kern = functools.partial(_grayscale_cnn_kernel, eps=1e-5,
                             count1=count1, count2=count2)
    return pl.pallas_call(
        kern,
        out_shape=jax.ShapeDtypeStruct((N, out_dim), jnp.float32),
        grid=(1,),
        in_specs=[full_spec(a.shape) for a in args],
        out_specs=pl.BlockSpec((N, out_dim), lambda i: (0, 0)),
        compiler_params=pltpu.CompilerParams(dimension_semantics=("arbitrary",)),
    )(*args)


# --------------------------- pure-JAX reference ------------------------------ #

def reference_forward(x_nchw, p, eps=1e-5):
    def conv(x, w, b):
        y = lax.conv_general_dilated(x, w, (1, 1), ((1, 1), (1, 1)),
                                     dimension_numbers=('NCHW', 'OIHW', 'NCHW'))
        return y + b[None, :, None, None]

    def bn_relu(x, gamma, beta):
        mu = x.mean(axis=(0, 2, 3), keepdims=True)
        var = ((x - mu) ** 2).mean(axis=(0, 2, 3), keepdims=True)
        y = (x - mu) / jnp.sqrt(var + eps)
        y = y * gamma[None, :, None, None] + beta[None, :, None, None]
        return jnp.maximum(y, 0.0)

    def pool(x):
        return lax.reduce_window(x, -jnp.inf, lax.max, (1, 1, 2, 2), (1, 1, 2, 2), 'VALID')

    h = pool(bn_relu(conv(x_nchw, p['w1'], p['b1']), p['g1'], p['be1']))
    h = pool(bn_relu(conv(h, p['w2'], p['b2']), p['g2'], p['be2']))
    h = h.reshape(h.shape[0], -1)
    return jnp.maximum(h @ p['wfc'].T + p['bfc'], 0.0)


# --------------------------------- params ------------------------------------ #

def init_params(key, image_size, out_dim):
    H, W = image_size
    F = 32 * (H // 4) * (W // 4)
    ks = jax.random.split(key, 10)
    return dict(
        w1=0.1 * jax.random.normal(ks[0], (16, 1, 3, 3), jnp.float32),
        b1=0.1 * jax.random.normal(ks[1], (16,), jnp.float32),
        g1=1.0 + 0.1 * jax.random.normal(ks[2], (16,), jnp.float32),
        be1=0.1 * jax.random.normal(ks[3], (16,), jnp.float32),
        w2=0.1 * jax.random.normal(ks[4], (32, 16, 3, 3), jnp.float32),
        b2=0.1 * jax.random.normal(ks[5], (32,), jnp.float32),
        g2=1.0 + 0.1 * jax.random.normal(ks[6], (32,), jnp.float32),
        be2=0.1 * jax.random.normal(ks[7], (32,), jnp.float32),
        wfc=0.05 * jax.random.normal(ks[8], (out_dim, F), jnp.float32),
        bfc=0.05 * jax.random.normal(ks[9], (out_dim,), jnp.float32),
    )


if __name__ == "__main__":
    key = jax.random.PRNGKey(0)
    image_size = (16, 16)
    out_dim = 10
    N = 2
    kx, kp = jax.random.split(key)
    x = jax.random.normal(kx, (N, 1, *image_size), jnp.float32)   # NCHW like PyTorch
    params = init_params(kp, image_size, out_dim)

    prep = prepare_params(params, image_size, out_dim, N)   # one-time weight prep
    out = jax.block_until_ready(grayscale_cnn_forward(x, prep, out_dim))
    ref = jax.block_until_ready(reference_forward(x, params))

    assert out.shape == (N, out_dim), out.shape
    assert jnp.allclose(out, ref, atol=1e-3, rtol=1e-3), float(jnp.max(jnp.abs(out - ref)))
    print("KERNEL_OK")
</pallas_src>

<mosaic_0001>
module attributes {stable_mosaic.version = 11 : i64} {
  func.func @_grayscale_cnn_kernel(%arg0: i32, %arg1: memref<32x16xf32, #tpu.memory_space<vmem>>, %arg2: memref<3x32x32xf32, #tpu.memory_space<vmem>>, %arg3: memref<3x16x256xf32, #tpu.memory_space<vmem>>, %arg4: memref<3x1x256xf32, #tpu.memory_space<vmem>>, %arg5: memref<256x16xf32, #tpu.memory_space<vmem>>, %arg6: memref<16x256xf32, #tpu.memory_space<vmem>>, %arg7: memref<2x16x32xf32, #tpu.memory_space<vmem>>, %arg8: memref<2x256x128xf32, #tpu.memory_space<vmem>>, %arg9: memref<3x16x16xf32, #tpu.memory_space<vmem>>, %arg10: memref<3x128x256xf32, #tpu.memory_space<vmem>>, %arg11: memref<3x1x256xf32, #tpu.memory_space<vmem>>, %arg12: memref<256x32xf32, #tpu.memory_space<vmem>>, %arg13: memref<32x256xf32, #tpu.memory_space<vmem>>, %arg14: memref<2x8x16xf32, #tpu.memory_space<vmem>>, %arg15: memref<2x256x128xf32, #tpu.memory_space<vmem>>, %arg16: memref<4x2x8xf32, #tpu.memory_space<vmem>>, %arg17: memref<4x128x10xf32, #tpu.memory_space<vmem>>, %arg18: memref<1x10xf32, #tpu.memory_space<vmem>>, %arg19: memref<2x10xf32, #tpu.memory_space<vmem>>) attributes {dimension_semantics = [#tpu.dimension_semantics<arbitrary>], iteration_bounds = array<i64: 1>, scalar_prefetch = 0 : i64, scratch_operands = 0 : i64, tpu.core_type = #tpu.core_type<tc>, window_params = [{pipeline_mode = #tpu.pipeline_mode<synchronous>, transform_indices = @transform_0, window_bounds = array<i64: 32, 16>}, {pipeline_mode = #tpu.pipeline_mode<synchronous>, transform_indices = @transform_1, window_bounds = array<i64: 3, 32, 32>}, {pipeline_mode = #tpu.pipeline_mode<synchronous>, transform_indices = @transform_2, window_bounds = array<i64: 3, 16, 256>}, {pipeline_mode = #tpu.pipeline_mode<synchronous>, transform_indices = @transform_3, window_bounds = array<i64: 3, 1, 256>}, {pipeline_mode = #tpu.pipeline_mode<synchronous>, transform_indices = @transform_4, window_bounds = array<i64: 256, 16>}, {pipeline_mode = #tpu.pipeline_mode<synchronous>, transform_indices = @transform_5, window_bounds = array<i64: 16, 256>}, {pipeline_mode = #tpu.pipeline_mode<synchronous>, transform_indices = @transform_6, window_bounds = array<i64: 2, 16, 32>}, {pipeline_mode = #tpu.pipeline_mode<synchronous>, transform_indices = @transform_7, window_bounds = array<i64: 2, 256, 128>}, {pipeline_mode = #tpu.pipeline_mode<synchronous>, transform_indices = @transform_8, window_bounds = array<i64: 3, 16, 16>}, {pipeline_mode = #tpu.pipeline_mode<synchronous>, transform_indices = @transform_9, window_bounds = array<i64: 3, 128, 256>}, {pipeline_mode = #tpu.pipeline_mode<synchronous>, transform_indices = @transform_10, window_bounds = array<i64: 3, 1, 256>}, {pipeline_mode = #tpu.pipeline_mode<synchronous>, transform_indices = @transform_11, window_bounds = array<i64: 256, 32>}, {pipeline_mode = #tpu.pipeline_mode<synchronous>, transform_indices = @transform_12, window_bounds = array<i64: 32, 256>}, {pipeline_mode = #tpu.pipeline_mode<synchronous>, transform_indices = @transform_13, window_bounds = array<i64: 2, 8, 16>}, {pipeline_mode = #tpu.pipeline_mode<synchronous>, transform_indices = @transform_14, window_bounds = array<i64: 2, 256, 128>}, {pipeline_mode = #tpu.pipeline_mode<synchronous>, transform_indices = @transform_15, window_bounds = array<i64: 4, 2, 8>}, {pipeline_mode = #tpu.pipeline_mode<synchronous>, transform_indices = @transform_16, window_bounds = array<i64: 4, 128, 10>}, {pipeline_mode = #tpu.pipeline_mode<synchronous>, transform_indices = @transform_17, window_bounds = array<i64: 1, 10>}, {pipeline_mode = #tpu.pipeline_mode<synchronous>, transform_indices = @transform_18, window_bounds = array<i64: 2, 10>}]} {
    %c0 = arith.constant 0 : index
    %c0_0 = arith.constant 0 : index
    %0 = vector.load %arg1[%c0, %c0_0] : memref<32x16xf32, #tpu.memory_space<vmem>>, vector<32x16xf32>
    %c0_1 = arith.constant 0 : index
    %c0_2 = arith.constant 0 : index
    %c0_3 = arith.constant 0 : index
    %1 = vector.load %arg2[%c0_1, %c0_2, %c0_3] : memref<3x32x32xf32, #tpu.memory_space<vmem>>, vector<1x32x32xf32>
    %2 = vector.shape_cast %1 : vector<1x32x32xf32> to vector<32x32xf32>
    %cst = arith.constant dense<0.000000e+00> : vector<32x16xf32>
    %3 = tpu.matmul %2, %0, %cst {dimension_numbers = #tpu.dot_dimension_numbers<[1], [0], [0], [1], [0, 0, 1, 1], [], []>} : vector<32x32xf32>, vector<32x16xf32>, vector<32x16xf32> -> vector<32x16xf32>
    %c0_4 = arith.constant 0 : index
    %c0_5 = arith.constant 0 : index
    %c0_6 = arith.constant 0 : index
    %4 = vector.load %arg3[%c0_4, %c0_5, %c0_6] : memref<3x16x256xf32, #tpu.memory_space<vmem>>, vector<1x16x256xf32>
    %5 = vector.shape_cast %4 : vector<1x16x256xf32> to vector<16x256xf32>
    %cst_7 = arith.constant dense<0.000000e+00> : vector<32x256xf32>
    %6 = tpu.matmul %3, %5, %cst_7 {dimension_numbers = #tpu.dot_dimension_numbers<[1], [0], [0], [1], [0, 0, 1, 1], [], []>} : vector<32x16xf32>, vector<16x256xf32>, vector<32x256xf32> -> vector<32x256xf32>
    %c1 = arith.constant 1 : index
    %c0_8 = arith.constant 0 : index
    %c0_9 = arith.constant 0 : index
    %7 = vector.load %arg2[%c1, %c0_8, %c0_9] : memref<3x32x32xf32, #tpu.memory_space<vmem>>, vector<1x32x32xf32>
    %8 = vector.shape_cast %7 : vector<1x32x32xf32> to vector<32x32xf32>
    %cst_10 = arith.constant dense<0.000000e+00> : vector<32x16xf32>
    %9 = tpu.matmul %8, %0, %cst_10 {dimension_numbers = #tpu.dot_dimension_numbers<[1], [0], [0], [1], [0, 0, 1, 1], [], []>} : vector<32x32xf32>, vector<32x16xf32>, vector<32x16xf32> -> vector<32x16xf32>
    %c1_11 = arith.constant 1 : index
    %c0_12 = arith.constant 0 : index
    %c0_13 = arith.constant 0 : index
    %10 = vector.load %arg3[%c1_11, %c0_12, %c0_13] : memref<3x16x256xf32, #tpu.memory_space<vmem>>, vector<1x16x256xf32>
    %11 = vector.shape_cast %10 : vector<1x16x256xf32> to vector<16x256xf32>
    %cst_14 = arith.constant dense<0.000000e+00> : vector<32x256xf32>
    %12 = tpu.matmul %9, %11, %cst_14 {dimension_numbers = #tpu.dot_dimension_numbers<[1], [0], [0], [1], [0, 0, 1, 1], [], []>} : vector<32x16xf32>, vector<16x256xf32>, vector<32x256xf32> -> vector<32x256xf32>
    %13 = arith.addf %6, %12 : vector<32x256xf32>
    %c2 = arith.constant 2 : index
    %c0_15 = arith.constant 0 : index
    %c0_16 = arith.constant 0 : index
    %14 = vector.load %arg2[%c2, %c0_15, %c0_16] : memref<3x32x32xf32, #tpu.memory_space<vmem>>, vector<1x32x32xf32>
    %15 = vector.shape_cast %14 : vector<1x32x32xf32> to vector<32x32xf32>
    %cst_17 = arith.constant dense<0.000000e+00> : vector<32x16xf32>
    %16 = tpu.matmul %15, %0, %cst_17 {dimension_numbers = #tpu.dot_dimension_numbers<[1], [0], [0], [1], [0, 0, 1, 1], [], []>} : vector<32x32xf32>, vector<32x16xf32>, vector<32x16xf32> -> vector<32x16xf32>
    %c2_18 = arith.constant 2 : index
    %c0_19 = arith.constant 0 : index
    %c0_20 = arith.constant 0 : index
    %17 = vector.load %arg3[%c2_18, %c0_19, %c0_20] : memref<3x16x256xf32, #tpu.memory_space<vmem>>, vector<1x16x256xf32>
    %18 = vector.shape_cast %17 : vector<1x16x256xf32> to vector<16x256xf32>
    %cst_21 = arith.constant dense<0.000000e+00> : vector<32x256xf32>
    %19 = tpu.matmul %16, %18, %cst_21 {dimension_numbers = #tpu.dot_dimension_numbers<[1], [0], [0], [1], [0, 0, 1, 1], [], []>} : vector<32x16xf32>, vector<16x256xf32>, vector<32x256xf32> -> vector<32x256xf32>
    %20 = arith.addf %13, %19 : vector<32x256xf32>
    %c0_22 = arith.constant 0 : index
    %c0_23 = arith.constant 0 : index
    %c0_24 = arith.constant 0 : index
    %21 = vector.load %arg4[%c0_22, %c0_23, %c0_24] : memref<3x1x256xf32, #tpu.memory_space<vmem>>, vector<1x1x256xf32>
    %22 = vector.shape_cast %21 : vector<1x1x256xf32> to vector<1x256xf32>
    %23 = vector.broadcast %22 : vector<1x256xf32> to vector<32x256xf32>
    %24 = arith.addf %20, %23 : vector<32x256xf32>
    %cst_25 = arith.constant dense<0.000000e+00> : vector<256xf32>
    %25 = vector.multi_reduction <add>, %24, %cst_25 [0] : vector<32x256xf32> to vector<256xf32>
    %26 = vector.shape_cast %25 : vector<256xf32> to vector<1x256xf32>
    %c0_26 = arith.constant 0 : index
    %c0_27 = arith.constant 0 : index
    %27 = vector.load %arg5[%c0_26, %c0_27] : memref<256x16xf32, #tpu.memory_space<vmem>>, vector<256x16xf32>
    %cst_28 = arith.constant dense<0.000000e+00> : vector<1x16xf32>
    %28 = tpu.matmul %26, %27, %cst_28 {dimension_numbers = #tpu.dot_dimension_numbers<[1], [0], [0], [1], [0, 0, 1, 1], [], []>} : vector<1x256xf32>, vector<256x16xf32>, vector<1x16xf32> -> vector<1x16xf32>
    %cst_29 = arith.constant 0.001953125 : f32
    %29 = vector.broadcast %cst_29 : f32 to vector<1x16xf32>
    %30 = arith.mulf %28, %29 : vector<1x16xf32>
    %c0_30 = arith.constant 0 : index
    %c0_31 = arith.constant 0 : index
    %31 = vector.load %arg6[%c0_30, %c0_31] : memref<16x256xf32, #tpu.memory_space<vmem>>, vector<16x256xf32>
    %cst_32 = arith.constant dense<0.000000e+00> : vector<1x256xf32>
    %32 = tpu.matmul %30, %31, %cst_32 {dimension_numbers = #tpu.dot_dimension_numbers<[1], [0], [0], [1], [0, 0, 1, 1], [], []>} : vector<1x16xf32>, vector<16x256xf32>, vector<1x256xf32> -> vector<1x256xf32>
    %33 = vector.broadcast %32 : vector<1x256xf32> to vector<32x256xf32>
    %34 = arith.subf %24, %33 : vector<32x256xf32>
    %35 = arith.mulf %34, %34 : vector<32x256xf32>
    %cst_33 = arith.constant dense<0.000000e+00> : vector<256xf32>
    %36 = vector.multi_reduction <add>, %35, %cst_33 [0] : vector<32x256xf32> to vector<256xf32>
    %37 = vector.shape_cast %36 : vector<256xf32> to vector<1x256xf32>
    %c0_34 = arith.constant 0 : index
    %c0_35 = arith.constant 0 : index
    %38 = vector.load %arg5[%c0_34, %c0_35] : memref<256x16xf32, #tpu.memory_space<vmem>>, vector<256x16xf32>
    %cst_36 = arith.constant dense<0.000000e+00> : vector<1x16xf32>
    %39 = tpu.matmul %37, %38, %cst_36 {dimension_numbers = #tpu.dot_dimension_numbers<[1], [0], [0], [1], [0, 0, 1, 1], [], []>} : vector<1x256xf32>, vector<256x16xf32>, vector<1x16xf32> -> vector<1x16xf32>
    %cst_37 = arith.constant 0.001953125 : f32
    %40 = vector.broadcast %cst_37 : f32 to vector<1x16xf32>
    %41 = arith.mulf %39, %40 : vector<1x16xf32>
    %c0_38 = arith.constant 0 : index
    %c0_39 = arith.constant 0 : index
    %42 = vector.load %arg6[%c0_38, %c0_39] : memref<16x256xf32, #tpu.memory_space<vmem>>, vector<16x256xf32>
    %cst_40 = arith.constant dense<0.000000e+00> : vector<1x256xf32>
    %43 = tpu.matmul %41, %42, %cst_40 {dimension_numbers = #tpu.dot_dimension_numbers<[1], [0], [0], [1], [0, 0, 1, 1], [], []>} : vector<1x16xf32>, vector<16x256xf32>, vector<1x256xf32> -> vector<1x256xf32>
    %cst_41 = arith.constant 9.99999974E-6 : f32
    %44 = vector.broadcast %cst_41 : f32 to vector<1x256xf32>
    %45 = arith.addf %43, %44 : vector<1x256xf32>
    %46 = math.rsqrt %45 : vector<1x256xf32>
    %47 = vector.broadcast %46 : vector<1x256xf32> to vector<32x256xf32>
    %48 = arith.mulf %34, %47 : vector<32x256xf32>
    %c1_42 = arith.constant 1 : index
    %c0_43 = arith.constant 0 : index
    %c0_44 = arith.constant 0 : index
    %49 = vector.load %arg4[%c1_42, %c0_43, %c0_44] : memref<3x1x256xf32, #tpu.memory_space<vmem>>, vector<1x1x256xf32>
    %50 = vector.shape_cast %49 : vector<1x1x256xf32> to vector<1x256xf32>
    %51 = vector.broadcast %50 : vector<1x256xf32> to vector<32x256xf32>
    %52 = arith.mulf %48, %51 : vector<32x256xf32>
    %c2_45 = arith.constant 2 : index
    %c0_46 = arith.constant 0 : index
    %c0_47 = arith.constant 0 : index
    %53 = vector.load %arg4[%c2_45, %c0_46, %c0_47] : memref<3x1x256xf32, #tpu.memory_space<vmem>>, vector<1x1x256xf32>
    %54 = vector.shape_cast %53 : vector<1x1x256xf32> to vector<1x256xf32>
    %55 = vector.broadcast %54 : vector<1x256xf32> to vector<32x256xf32>
    %56 = arith.addf %52, %55 : vector<32x256xf32>
    %cst_48 = arith.constant 0.000000e+00 : f32
    %57 = vector.broadcast %cst_48 : f32 to vector<32x256xf32>
    %58 = arith.maximumf %56, %57 : vector<32x256xf32>
    %c0_49 = arith.constant 0 : index
    %c0_50 = arith.constant 0 : index
    %c0_51 = arith.constant 0 : index
    %59 = vector.load %arg7[%c0_49, %c0_50, %c0_51] : memref<2x16x32xf32, #tpu.memory_space<vmem>>, vector<1x16x32xf32>
    %60 = vector.shape_cast %59 : vector<1x16x32xf32> to vector<16x32xf32>
    %cst_52 = arith.constant dense<0.000000e+00> : vector<16x256xf32>
    %61 = tpu.matmul %60, %58, %cst_52 {dimension_numbers = #tpu.dot_dimension_numbers<[1], [0], [0], [1], [0, 0, 1, 1], [], []>} : vector<16x32xf32>, vector<32x256xf32>, vector<16x256xf32> -> vector<16x256xf32>
    %c1_53 = arith.constant 1 : index
    %c0_54 = arith.constant 0 : index
    %c0_55 = arith.constant 0 : index
    %62 = vector.load %arg7[%c1_53, %c0_54, %c0_55] : memref<2x16x32xf32, #tpu.memory_space<vmem>>, vector<1x16x32xf32>
    %63 = vector.shape_cast %62 : vector<1x16x32xf32> to vector<16x32xf32>
    %cst_56 = arith.constant dense<0.000000e+00> : vector<16x256xf32>
    %64 = tpu.matmul %63, %58, %cst_56 {dimension_numbers = #tpu.dot_dimension_numbers<[1], [0], [0], [1], [0, 0, 1, 1], [], []>} : vector<16x32xf32>, vector<32x256xf32>, vector<16x256xf32> -> vector<16x256xf32>
    %65 = arith.maximumf %61, %64 : vector<16x256xf32>
    %c0_57 = arith.constant 0 : index
    %c0_58 = arith.constant 0 : index
    %c0_59 = arith.constant 0 : index
    %66 = vector.load %arg8[%c0_57, %c0_58, %c0_59] : memref<2x256x128xf32, #tpu.memory_space<vmem>>, vector<1x256x128xf32>
    %67 = vector.shape_cast %66 : vector<1x256x128xf32> to vector<256x128xf32>
    %cst_60 = arith.constant dense<0.000000e+00> : vector<16x128xf32>
    %68 = tpu.matmul %65, %67, %cst_60 {dimension_numbers = #tpu.dot_dimension_numbers<[1], [0], [0], [1], [0, 0, 1, 1], [], []>} : vector<16x256xf32>, vector<256x128xf32>, vector<16x128xf32> -> vector<16x128xf32>
    %c1_61 = arith.constant 1 : index
    %c0_62 = arith.constant 0 : index
    %c0_63 = arith.constant 0 : index
    %69 = vector.load %arg8[%c1_61, %c0_62, %c0_63] : memref<2x256x128xf32, #tpu.memory_space<vmem>>, vector<1x256x128xf32>
    %70 = vector.shape_cast %69 : vector<1x256x128xf32> to vector<256x128xf32>
    %cst_64 = arith.constant dense<0.000000e+00> : vector<16x128xf32>
    %71 = tpu.matmul %65, %70, %cst_64 {dimension_numbers = #tpu.dot_dimension_numbers<[1], [0], [0], [1], [0, 0, 1, 1], [], []>} : vector<16x256xf32>, vector<256x128xf32>, vector<16x128xf32> -> vector<16x128xf32>
    %72 = arith.maximumf %68, %71 : vector<16x128xf32>
    %c0_65 = arith.constant 0 : index
    %c0_66 = arith.constant 0 : index
    %c0_67 = arith.constant 0 : index
    %73 = vector.load %arg9[%c0_65, %c0_66, %c0_67] : memref<3x16x16xf32, #tpu.memory_space<vmem>>, vector<1x16x16xf32>
    %74 = vector.shape_cast %73 : vector<1x16x16xf32> to vector<16x16xf32>
    %cst_68 = arith.constant dense<0.000000e+00> : vector<16x128xf32>
    %75 = tpu.matmul %74, %72, %cst_68 {dimension_numbers = #tpu.dot_dimension_numbers<[1], [0], [0], [1], [0, 0, 1, 1], [], []>} : vector<16x16xf32>, vector<16x128xf32>, vector<16x128xf32> -> vector<16x128xf32>
    %c0_69 = arith.constant 0 : index
    %c0_70 = arith.constant 0 : index
    %c0_71 = arith.constant 0 : index
    %76 = vector.load %arg10[%c0_69, %c0_70, %c0_71] : memref<3x128x256xf32, #tpu.memory_space<vmem>>, vector<1x128x256xf32>
    %77 = vector.shape_cast %76 : vector<1x128x256xf32> to vector<128x256xf32>
    %cst_72 = arith.constant dense<0.000000e+00> : vector<16x256xf32>
    %78 = tpu.matmul %75, %77, %cst_72 {dimension_numbers = #tpu.dot_dimension_numbers<[1], [0], [0], [1], [0, 0, 1, 1], [], []>} : vector<16x128xf32>, vector<128x256xf32>, vector<16x256xf32> -> vector<16x256xf32>
    %c1_73 = arith.constant 1 : index
    %c0_74 = arith.constant 0 : index
    %c0_75 = arith.constant 0 : index
    %79 = vector.load %arg9[%c1_73, %c0_74, %c0_75] : memref<3x16x16xf32, #tpu.memory_space<vmem>>, vector<1x16x16xf32>
    %80 = vector.shape_cast %79 : vector<1x16x16xf32> to vector<16x16xf32>
    %cst_76 = arith.constant dense<0.000000e+00> : vector<16x128xf32>
    %81 = tpu.matmul %80, %72, %cst_76 {dimension_numbers = #tpu.dot_dimension_numbers<[1], [0], [0], [1], [0, 0, 1, 1], [], []>} : vector<16x16xf32>, vector<16x128xf32>, vector<16x128xf32> -> vector<16x128xf32>
    %c1_77 = arith.constant 1 : index
    %c0_78 = arith.constant 0 : index
    %c0_79 = arith.constant 0 : index
    %82 = vector.load %arg10[%c1_77, %c0_78, %c0_79] : memref<3x128x256xf32, #tpu.memory_space<vmem>>, vector<1x128x256xf32>
    %83 = vector.shape_cast %82 : vector<1x128x256xf32> to vector<128x256xf32>
    %cst_80 = arith.constant dense<0.000000e+00> : vector<16x256xf32>
    %84 = tpu.matmul %81, %83, %cst_80 {dimension_numbers = #tpu.dot_dimension_numbers<[1], [0], [0], [1], [0, 0, 1, 1], [], []>} : vector<16x128xf32>, vector<128x256xf32>, vector<16x256xf32> -> vector<16x256xf32>
    %85 = arith.addf %78, %84 : vector<16x256xf32>
    %c2_81 = arith.constant 2 : index
    %c0_82 = arith.constant 0 : index
    %c0_83 = arith.constant 0 : index
    %86 = vector.load %arg9[%c2_81, %c0_82, %c0_83] : memref<3x16x16xf32, #tpu.memory_space<vmem>>, vector<1x16x16xf32>
    %87 = vector.shape_cast %86 : vector<1x16x16xf32> to vector<16x16xf32>
    %cst_84 = arith.constant dense<0.000000e+00> : vector<16x128xf32>
    %88 = tpu.matmul %87, %72, %cst_84 {dimension_numbers = #tpu.dot_dimension_numbers<[1], [0], [0], [1], [0, 0, 1, 1], [], []>} : vector<16x16xf32>, vector<16x128xf32>, vector<16x128xf32> -> vector<16x128xf32>
    %c2_85 = arith.constant 2 : index
    %c0_86 = arith.constant 0 : index
    %c0_87 = arith.constant 0 : index
    %89 = vector.load %arg10[%c2_85, %c0_86, %c0_87] : memref<3x128x256xf32, #tpu.memory_space<vmem>>, vector<1x128x256xf32>
    %90 = vector.shape_cast %89 : vector<1x128x256xf32> to vector<128x256xf32>
    %cst_88 = arith.constant dense<0.000000e+00> : vector<16x256xf32>
    %91 = tpu.matmul %88, %90, %cst_88 {dimension_numbers = #tpu.dot_dimension_numbers<[1], [0], [0], [1], [0, 0, 1, 1], [], []>} : vector<16x128xf32>, vector<128x256xf32>, vector<16x256xf32> -> vector<16x256xf32>
    %92 = arith.addf %85, %91 : vector<16x256xf32>
    %c0_89 = arith.constant 0 : index
    %c0_90 = arith.constant 0 : index
    %c0_91 = arith.constant 0 : index
    %93 = vector.load %arg11[%c0_89, %c0_90, %c0_91] : memref<3x1x256xf32, #tpu.memory_space<vmem>>, vector<1x1x256xf32>
    %94 = vector.shape_cast %93 : vector<1x1x256xf32> to vector<1x256xf32>
    %95 = vector.broadcast %94 : vector<1x256xf32> to vector<16x256xf32>
    %96 = arith.addf %92, %95 : vector<16x256xf32>
    %cst_92 = arith.constant dense<0.000000e+00> : vector<256xf32>
    %97 = vector.multi_reduction <add>, %96, %cst_92 [0] : vector<16x256xf32> to vector<256xf32>
    %98 = vector.shape_cast %97 : vector<256xf32> to vector<1x256xf32>
    %c0_93 = arith.constant 0 : index
    %c0_94 = arith.constant 0 : index
    %99 = vector.load %arg12[%c0_93, %c0_94] : memref<256x32xf32, #tpu.memory_space<vmem>>, vector<256x32xf32>
    %cst_95 = arith.constant dense<0.000000e+00> : vector<1x32xf32>
    %100 = tpu.matmul %98, %99, %cst_95 {dimension_numbers = #tpu.dot_dimension_numbers<[1], [0], [0], [1], [0, 0, 1, 1], [], []>} : vector<1x256xf32>, vector<256x32xf32>, vector<1x32xf32> -> vector<1x32xf32>
    %cst_96 = arith.constant 7.812500e-03 : f32
    %101 = vector.broadcast %cst_96 : f32 to vector<1x32xf32>
    %102 = arith.mulf %100, %101 : vector<1x32xf32>
    %c0_97 = arith.constant 0 : index
    %c0_98 = arith.constant 0 : index
    %103 = vector.load %arg13[%c0_97, %c0_98] : memref<32x256xf32, #tpu.memory_space<vmem>>, vector<32x256xf32>
    %cst_99 = arith.constant dense<0.000000e+00> : vector<1x256xf32>
    %104 = tpu.matmul %102, %103, %cst_99 {dimension_numbers = #tpu.dot_dimension_numbers<[1], [0], [0], [1], [0, 0, 1, 1], [], []>} : vector<1x32xf32>, vector<32x256xf32>, vector<1x256xf32> -> vector<1x256xf32>
    %105 = vector.broadcast %104 : vector<1x256xf32> to vector<16x256xf32>
    %106 = arith.subf %96, %105 : vector<16x256xf32>
    %107 = arith.mulf %106, %106 : vector<16x256xf32>
    %cst_100 = arith.constant dense<0.000000e+00> : vector<256xf32>
    %108 = vector.multi_reduction <add>, %107, %cst_100 [0] : vector<16x256xf32> to vector<256xf32>
    %109 = vector.shape_cast %108 : vector<256xf32> to vector<1x256xf32>
    %c0_101 = arith.constant 0 : index
    %c0_102 = arith.constant 0 : index
    %110 = vector.load %arg12[%c0_101, %c0_102] : memref<256x32xf32, #tpu.memory_space<vmem>>, vector<256x32xf32>
    %cst_103 = arith.constant dense<0.000000e+00> : vector<1x32xf32>
    %111 = tpu.matmul %109, %110, %cst_103 {dimension_numbers = #tpu.dot_dimension_numbers<[1], [0], [0], [1], [0, 0, 1, 1], [], []>} : vector<1x256xf32>, vector<256x32xf32>, vector<1x32xf32> -> vector<1x32xf32>
    %cst_104 = arith.constant 7.812500e-03 : f32
    %112 = vector.broadcast %cst_104 : f32 to vector<1x32xf32>
    %113 = arith.mulf %111, %112 : vector<1x32xf32>
    %c0_105 = arith.constant 0 : index
    %c0_106 = arith.constant 0 : index
    %114 = vector.load %arg13[%c0_105, %c0_106] : memref<32x256xf32, #tpu.memory_space<vmem>>, vector<32x256xf32>
    %cst_107 = arith.constant dense<0.000000e+00> : vector<1x256xf32>
    %115 = tpu.matmul %113, %114, %cst_107 {dimension_numbers = #tpu.dot_dimension_numbers<[1], [0], [0], [1], [0, 0, 1, 1], [], []>} : vector<1x32xf32>, vector<32x256xf32>, vector<1x256xf32> -> vector<1x256xf32>
    %cst_108 = arith.constant 9.99999974E-6 : f32
    %116 = vector.broadcast %cst_108 : f32 to vector<1x256xf32>
    %117 = arith.addf %115, %116 : vector<1x256xf32>
    %118 = math.rsqrt %117 : vector<1x256xf32>
    %119 = vector.broadcast %118 : vector<1x256xf32> to vector<16x256xf32>
    %120 = arith.mulf %106, %119 : vector<16x256xf32>
    %c1_109 = arith.constant 1 : index
    %c0_110 = arith.constant 0 : index
    %c0_111 = arith.constant 0 : index
    %121 = vector.load %arg11[%c1_109, %c0_110, %c0_111] : memref<3x1x256xf32, #tpu.memory_space<vmem>>, vector<1x1x256xf32>
    %122 = vector.shape_cast %121 : vector<1x1x256xf32> to vector<1x256xf32>
    %123 = vector.broadcast %122 : vector<1x256xf32> to vector<16x256xf32>
    %124 = arith.mulf %120, %123 : vector<16x256xf32>
    %c2_112 = arith.constant 2 : index
    %c0_113 = arith.constant 0 : index
    %c0_114 = arith.constant 0 : index
    %125 = vector.load %arg11[%c2_112, %c0_113, %c0_114] : memref<3x1x256xf32, #tpu.memory_space<vmem>>, vector<1x1x256xf32>
    %126 = vector.shape_cast %125 : vector<1x1x256xf32> to vector<1x256xf32>
    %127 = vector.broadcast %126 : vector<1x256xf32> to vector<16x256xf32>
    %128 = arith.addf %124, %127 : vector<16x256xf32>
    %cst_115 = arith.constant 0.000000e+00 : f32
    %129 = vector.broadcast %cst_115 : f32 to vector<16x256xf32>
    %130 = arith.maximumf %128, %129 : vector<16x256xf32>
    %c0_116 = arith.constant 0 : index
    %c0_117 = arith.constant 0 : index
    %c0_118 = arith.constant 0 : index
    %131 = vector.load %arg14[%c0_116, %c0_117, %c0_118] : memref<2x8x16xf32, #tpu.memory_space<vmem>>, vector<1x8x16xf32>
    %132 = vector.shape_cast %131 : vector<1x8x16xf32> to vector<8x16xf32>
    %cst_119 = arith.constant dense<0.000000e+00> : vector<8x256xf32>
    %133 = tpu.matmul %132, %130, %cst_119 {dimension_numbers = #tpu.dot_dimension_numbers<[1], [0], [0], [1], [0, 0, 1, 1], [], []>} : vector<8x16xf32>, vector<16x256xf32>, vector<8x256xf32> -> vector<8x256xf32>
    %c1_120 = arith.constant 1 : index
    %c0_121 = arith.constant 0 : index
    %c0_122 = arith.constant 0 : index
    %134 = vector.load %arg14[%c1_120, %c0_121, %c0_122] : memref<2x8x16xf32, #tpu.memory_space<vmem>>, vector<1x8x16xf32>
    %135 = vector.shape_cast %134 : vector<1x8x16xf32> to vector<8x16xf32>
    %cst_123 = arith.constant dense<0.000000e+00> : vector<8x256xf32>
    %136 = tpu.matmul %135, %130, %cst_123 {dimension_numbers = #tpu.dot_dimension_numbers<[1], [0], [0], [1], [0, 0, 1, 1], [], []>} : vector<8x16xf32>, vector<16x256xf32>, vector<8x256xf32> -> vector<8x256xf32>
    %137 = arith.maximumf %133, %136 : vector<8x256xf32>
    %c0_124 = arith.constant 0 : index
    %c0_125 = arith.constant 0 : index
    %c0_126 = arith.constant 0 : index
    %138 = vector.load %arg15[%c0_124, %c0_125, %c0_126] : memref<2x256x128xf32, #tpu.memory_space<vmem>>, vector<1x256x128xf32>
    %139 = vector.shape_cast %138 : vector<1x256x128xf32> to vector<256x128xf32>
    %cst_127 = arith.constant dense<0.000000e+00> : vector<8x128xf32>
    %140 = tpu.matmul %137, %139, %cst_127 {dimension_numbers = #tpu.dot_dimension_numbers<[1], [0], [0], [1], [0, 0, 1, 1], [], []>} : vector<8x256xf32>, vector<256x128xf32>, vector<8x128xf32> -> vector<8x128xf32>
    %c1_128 = arith.constant 1 : index
    %c0_129 = arith.constant 0 : index
    %c0_130 = arith.constant 0 : index
    %141 = vector.load %arg15[%c1_128, %c0_129, %c0_130] : memref<2x256x128xf32, #tpu.memory_space<vmem>>, vector<1x256x128xf32>
    %142 = vector.shape_cast %141 : vector<1x256x128xf32> to vector<256x128xf32>
    %cst_131 = arith.constant dense<0.000000e+00> : vector<8x128xf32>
    %143 = tpu.matmul %137, %142, %cst_131 {dimension_numbers = #tpu.dot_dimension_numbers<[1], [0], [0], [1], [0, 0, 1, 1], [], []>} : vector<8x256xf32>, vector<256x128xf32>, vector<8x128xf32> -> vector<8x128xf32>
    %144 = arith.maximumf %140, %143 : vector<8x128xf32>
    %c0_132 = arith.constant 0 : index
    %c0_133 = arith.constant 0 : index
    %c0_134 = arith.constant 0 : index
    %145 = vector.load %arg16[%c0_132, %c0_133, %c0_134] : memref<4x2x8xf32, #tpu.memory_space<vmem>>, vector<1x2x8xf32>
    %146 = vector.shape_cast %145 : vector<1x2x8xf32> to vector<2x8xf32>
    %cst_135 = arith.constant dense<0.000000e+00> : vector<2x128xf32>
    %147 = tpu.matmul %146, %144, %cst_135 {dimension_numbers = #tpu.dot_dimension_numbers<[1], [0], [0], [1], [0, 0, 1, 1], [], []>} : vector<2x8xf32>, vector<8x128xf32>, vector<2x128xf32> -> vector<2x128xf32>
    %c0_136 = arith.constant 0 : index
    %c0_137 = arith.constant 0 : index
    %c0_138 = arith.constant 0 : index
    %148 = vector.load %arg17[%c0_136, %c0_137, %c0_138] : memref<4x128x10xf32, #tpu.memory_space<vmem>>, vector<1x128x10xf32>
    %149 = vector.shape_cast %148 : vector<1x128x10xf32> to vector<128x10xf32>
    %cst_139 = arith.constant dense<0.000000e+00> : vector<2x10xf32>
    %150 = tpu.matmul %147, %149, %cst_139 {dimension_numbers = #tpu.dot_dimension_numbers<[1], [0], [0], [1], [0, 0, 1, 1], [], []>} : vector<2x128xf32>, vector<128x10xf32>, vector<2x10xf32> -> vector<2x10xf32>
    %c1_140 = arith.constant 1 : index
    %c0_141 = arith.constant 0 : index
    %c0_142 = arith.constant 0 : index
    %151 = vector.load %arg16[%c1_140, %c0_141, %c0_142] : memref<4x2x8xf32, #tpu.memory_space<vmem>>, vector<1x2x8xf32>
    %152 = vector.shape_cast %151 : vector<1x2x8xf32> to vector<2x8xf32>
    %cst_143 = arith.constant dense<0.000000e+00> : vector<2x128xf32>
    %153 = tpu.matmul %152, %144, %cst_143 {dimension_numbers = #tpu.dot_dimension_numbers<[1], [0], [0], [1], [0, 0, 1, 1], [], []>} : vector<2x8xf32>, vector<8x128xf32>, vector<2x128xf32> -> vector<2x128xf32>
    %c1_144 = arith.constant 1 : index
    %c0_145 = arith.constant 0 : index
    %c0_146 = arith.constant 0 : index
    %154 = vector.load %arg17[%c1_144, %c0_145, %c0_146] : memref<4x128x10xf32, #tpu.memory_space<vmem>>, vector<1x128x10xf32>
    %155 = vector.shape_cast %154 : vector<1x128x10xf32> to vector<128x10xf32>
    %cst_147 = arith.constant dense<0.000000e+00> : vector<2x10xf32>
    %156 = tpu.matmul %153, %155, %cst_147 {dimension_numbers = #tpu.dot_dimension_numbers<[1], [0], [0], [1], [0, 0, 1, 1], [], []>} : vector<2x128xf32>, vector<128x10xf32>, vector<2x10xf32> -> vector<2x10xf32>
    %157 = arith.addf %150, %156 : vector<2x10xf32>
    %c2_148 = arith.constant 2 : index
    %c0_149 = arith.constant 0 : index
    %c0_150 = arith.constant 0 : index
    %158 = vector.load %arg16[%c2_148, %c0_149, %c0_150] : memref<4x2x8xf32, #tpu.memory_space<vmem>>, vector<1x2x8xf32>
    %159 = vector.shape_cast %158 : vector<1x2x8xf32> to vector<2x8xf32>
    %cst_151 = arith.constant dense<0.000000e+00> : vector<2x128xf32>
    %160 = tpu.matmul %159, %144, %cst_151 {dimension_numbers = #tpu.dot_dimension_numbers<[1], [0], [0], [1], [0, 0, 1, 1], [], []>} : vector<2x8xf32>, vector<8x128xf32>, vector<2x128xf32> -> vector<2x128xf32>
    %c2_152 = arith.constant 2 : index
    %c0_153 = arith.constant 0 : index
    %c0_154 = arith.constant 0 : index
    %161 = vector.load %arg17[%c2_152, %c0_153, %c0_154] : memref<4x128x10xf32, #tpu.memory_space<vmem>>, vector<1x128x10xf32>
    %162 = vector.shape_cast %161 : vector<1x128x10xf32> to vector<128x10xf32>
    %cst_155 = arith.constant dense<0.000000e+00> : vector<2x10xf32>
    %163 = tpu.matmul %160, %162, %cst_155 {dimension_numbers = #tpu.dot_dimension_numbers<[1], [0], [0], [1], [0, 0, 1, 1], [], []>} : vector<2x128xf32>, vector<128x10xf32>, vector<2x10xf32> -> vector<2x10xf32>
    %164 = arith.addf %157, %163 : vector<2x10xf32>
    %c3 = arith.constant 3 : index
    %c0_156 = arith.constant 0 : index
    %c0_157 = arith.constant 0 : index
    %165 = vector.load %arg16[%c3, %c0_156, %c0_157] : memref<4x2x8xf32, #tpu.memory_space<vmem>>, vector<1x2x8xf32>
    %166 = vector.shape_cast %165 : vector<1x2x8xf32> to vector<2x8xf32>
    %cst_158 = arith.constant dense<0.000000e+00> : vector<2x128xf32>
    %167 = tpu.matmul %166, %144, %cst_158 {dimension_numbers = #tpu.dot_dimension_numbers<[1], [0], [0], [1], [0, 0, 1, 1], [], []>} : vector<2x8xf32>, vector<8x128xf32>, vector<2x128xf32> -> vector<2x128xf32>
    %c3_159 = arith.constant 3 : index
    %c0_160 = arith.constant 0 : index
    %c0_161 = arith.constant 0 : index
    %168 = vector.load %arg17[%c3_159, %c0_160, %c0_161] : memref<4x128x10xf32, #tpu.memory_space<vmem>>, vector<1x128x10xf32>
    %169 = vector.shape_cast %168 : vector<1x128x10xf32> to vector<128x10xf32>
    %cst_162 = arith.constant dense<0.000000e+00> : vector<2x10xf32>
    %170 = tpu.matmul %167, %169, %cst_162 {dimension_numbers = #tpu.dot_dimension_numbers<[1], [0], [0], [1], [0, 0, 1, 1], [], []>} : vector<2x128xf32>, vector<128x10xf32>, vector<2x10xf32> -> vector<2x10xf32>
    %171 = arith.addf %164, %170 : vector<2x10xf32>
    %c0_163 = arith.constant 0 : index
    %c0_164 = arith.constant 0 : index
    %172 = vector.load %arg18[%c0_163, %c0_164] : memref<1x10xf32, #tpu.memory_space<vmem>>, vector<1x10xf32>
    %173 = vector.broadcast %172 : vector<1x10xf32> to vector<2x10xf32>
    %174 = arith.addf %171, %173 : vector<2x10xf32>
    %cst_165 = arith.constant 0.000000e+00 : f32
    %175 = vector.broadcast %cst_165 : f32 to vector<2x10xf32>
    %176 = arith.maximumf %174, %175 : vector<2x10xf32>
    %c0_166 = arith.constant 0 : index
    %c0_167 = arith.constant 0 : index
    %177 = vector.load %arg19[%c0_166, %c0_167] : memref<2x10xf32, #tpu.memory_space<vmem>>, vector<2x10xf32>
    tpu.vector_store %arg19[%c0_166, %c0_167], %176 {strides = array<i32>} : memref<2x10xf32, #tpu.memory_space<vmem>>, vector<2x10xf32>,
    return
  }
  func.func @transform_0(%arg0: i32) -> (i32, i32) {
    %c0_i32 = arith.constant 0 : i32
    %c0_i32_0 = arith.constant 0 : i32
    %c0_i32_1 = arith.constant 0 : i32
    return %c0_i32, %c0_i32_0 : i32, i32
  }
  func.func @transform_1(%arg0: i32) -> (i32, i32, i32) {
    %c0_i32 = arith.constant 0 : i32
    %c0_i32_0 = arith.constant 0 : i32
    %c0_i32_1 = arith.constant 0 : i32
    %c0_i32_2 = arith.constant 0 : i32
    return %c0_i32, %c0_i32_0, %c0_i32_1 : i32, i32, i32
  }
  func.func @transform_2(%arg0: i32) -> (i32, i32, i32) {
    %c0_i32 = arith.constant 0 : i32
    %c0_i32_0 = arith.constant 0 : i32
    %c0_i32_1 = arith.constant 0 : i32
    %c0_i32_2 = arith.constant 0 : i32
    return %c0_i32, %c0_i32_0, %c0_i32_1 : i32, i32, i32
  }
  func.func @transform_3(%arg0: i32) -> (i32, i32, i32) {
    %c0_i32 = arith.constant 0 : i32
    %c0_i32_0 = arith.constant 0 : i32
    %c0_i32_1 = arith.constant 0 : i32
    %c0_i32_2 = arith.constant 0 : i32
    return %c0_i32, %c0_i32_0, %c0_i32_1 : i32, i32, i32
  }
  func.func @transform_4(%arg0: i32) -> (i32, i32) {
    %c0_i32 = arith.constant 0 : i32
    %c0_i32_0 = arith.constant 0 : i32
    %c0_i32_1 = arith.constant 0 : i32
    return %c0_i32, %c0_i32_0 : i32, i32
  }
  func.func @transform_5(%arg0: i32) -> (i32, i32) {
    %c0_i32 = arith.constant 0 : i32
    %c0_i32_0 = arith.constant 0 : i32
    %c0_i32_1 = arith.constant 0 : i32
    return %c0_i32, %c0_i32_0 : i32, i32
  }
  func.func @transform_6(%arg0: i32) -> (i32, i32, i32) {
    %c0_i32 = arith.constant 0 : i32
    %c0_i32_0 = arith.constant 0 : i32
    %c0_i32_1 = arith.constant 0 : i32
    %c0_i32_2 = arith.constant 0 : i32
    return %c0_i32, %c0_i32_0, %c0_i32_1 : i32, i32, i32
  }
  func.func @transform_7(%arg0: i32) -> (i32, i32, i32) {
    %c0_i32 = arith.constant 0 : i32
    %c0_i32_0 = arith.constant 0 : i32
    %c0_i32_1 = arith.constant 0 : i32
    %c0_i32_2 = arith.constant 0 : i32
    return %c0_i32, %c0_i32_0, %c0_i32_1 : i32, i32, i32
  }
  func.func @transform_8(%arg0: i32) -> (i32, i32, i32) {
    %c0_i32 = arith.constant 0 : i32
    %c0_i32_0 = arith.constant 0 : i32
    %c0_i32_1 = arith.constant 0 : i32
    %c0_i32_2 = arith.constant 0 : i32
    return %c0_i32, %c0_i32_0, %c0_i32_1 : i32, i32, i32
  }
  func.func @transform_9(%arg0: i32) -> (i32, i32, i32) {
    %c0_i32 = arith.constant 0 : i32
    %c0_i32_0 = arith.constant 0 : i32
    %c0_i32_1 = arith.constant 0 : i32
    %c0_i32_2 = arith.constant 0 : i32
    return %c0_i32, %c0_i32_0, %c0_i32_1 : i32, i32, i32
  }
  func.func @transform_10(%arg0: i32) -> (i32, i32, i32) {
    %c0_i32 = arith.constant 0 : i32
    %c0_i32_0 = arith.constant 0 : i32
    %c0_i32_1 = arith.constant 0 : i32
    %c0_i32_2 = arith.constant 0 : i32
    return %c0_i32, %c0_i32_0, %c0_i32_1 : i32, i32, i32
  }
  func.func @transform_11(%arg0: i32) -> (i32, i32) {
    %c0_i32 = arith.constant 0 : i32
    %c0_i32_0 = arith.constant 0 : i32
    %c0_i32_1 = arith.constant 0 : i32
    return %c0_i32, %c0_i32_0 : i32, i32
  }
  func.func @transform_12(%arg0: i32) -> (i32, i32) {
    %c0_i32 = arith.constant 0 : i32
    %c0_i32_0 = arith.constant 0 : i32
    %c0_i32_1 = arith.constant 0 : i32
    return %c0_i32, %c0_i32_0 : i32, i32
  }
  func.func @transform_13(%arg0: i32) -> (i32, i32, i32) {
    %c0_i32 = arith.constant 0 : i32
    %c0_i32_0 = arith.constant 0 : i32
    %c0_i32_1 = arith.constant 0 : i32
    %c0_i32_2 = arith.constant 0 : i32
    return %c0_i32, %c0_i32_0, %c0_i32_1 : i32, i32, i32
  }
  func.func @transform_14(%arg0: i32) -> (i32, i32, i32) {
    %c0_i32 = arith.constant 0 : i32
    %c0_i32_0 = arith.constant 0 : i32
    %c0_i32_1 = arith.constant 0 : i32
    %c0_i32_2 = arith.constant 0 : i32
    return %c0_i32, %c0_i32_0, %c0_i32_1 : i32, i32, i32
  }
  func.func @transform_15(%arg0: i32) -> (i32, i32, i32) {
    %c0_i32 = arith.constant 0 : i32
    %c0_i32_0 = arith.constant 0 : i32
    %c0_i32_1 = arith.constant 0 : i32
    %c0_i32_2 = arith.constant 0 : i32
    return %c0_i32, %c0_i32_0, %c0_i32_1 : i32, i32, i32
  }
  func.func @transform_16(%arg0: i32) -> (i32, i32, i32) {
    %c0_i32 = arith.constant 0 : i32
    %c0_i32_0 = arith.constant 0 : i32
    %c0_i32_1 = arith.constant 0 : i32
    %c0_i32_2 = arith.constant 0 : i32
    return %c0_i32, %c0_i32_0, %c0_i32_1 : i32, i32, i32
  }
  func.func @transform_17(%arg0: i32) -> (i32, i32) {
    %c0_i32 = arith.constant 0 : i32
    %c0_i32_0 = arith.constant 0 : i32
    %c0_i32_1 = arith.constant 0 : i32
    return %c0_i32, %c0_i32_0 : i32, i32
  }
  func.func @transform_18(%arg0: i32) -> (i32, i32) {
    %c0_i32 = arith.constant 0 : i32
    %c0_i32_0 = arith.constant 0 : i32
    %c0_i32_1 = arith.constant 0 : i32
    return %c0_i32, %c0_i32_0 : i32, i32
  }
}

</mosaic_0001>

<llo_original>
// kernel: tpu_custom_call.1
$region0: #{tpu_custom_call.1}
  #allocation0 [shape = 'u32[]', space=smem, size = 0x4, offset = 0x4, fixed_abs, tag = 'smem constant byte address 0x4 - core index']
  #allocation1 [shape = 'u32[144,128]{1,0:T(1,128)}', space=vmem, size = 0x12000, scoped, tag = 'internal scratch']
  %s0 = inlined_call_operand.vmem [shape: f32[32,16], index: 0, kind: input, shape index: {}]
  %s1 = inlined_call_operand.vmem [shape: f32[3,32,32], index: 1, kind: input, shape index: {}]
  %s2 = inlined_call_operand.vmem [shape: f32[3,16,256], index: 2, kind: input, shape index: {}]
  %s3 = inlined_call_operand.hbm [shape: f32[3,1,256], index: 3, kind: input, shape index: {}]
  %s4 = inlined_call_operand.vmem [shape: f32[256,16], index: 4, kind: input, shape index: {}]
  %s5 = inlined_call_operand.vmem [shape: f32[16,256], index: 5, kind: input, shape index: {}]
  %s6 = inlined_call_operand.hbm [shape: f32[2,16,32], index: 6, kind: input, shape index: {}]
  %s7 = inlined_call_operand.hbm [shape: f32[2,256,128], index: 7, kind: input, shape index: {}]
  %s8 = inlined_call_operand.vmem [shape: f32[3,16,16], index: 8, kind: input, shape index: {}]
  %s9 = inlined_call_operand.vmem [shape: f32[3,128,256], index: 9, kind: input, shape index: {}]
  %s10 = inlined_call_operand.hbm [shape: f32[3,1,256], index: 10, kind: input, shape index: {}]
  %s11 = inlined_call_operand.vmem [shape: f32[256,32], index: 11, kind: input, shape index: {}]
  %s12 = inlined_call_operand.vmem [shape: f32[32,256], index: 12, kind: input, shape index: {}]
  %s13 = inlined_call_operand.vmem [shape: f32[2,8,16], index: 13, kind: input, shape index: {}]
  %s14 = inlined_call_operand.hbm [shape: f32[2,256,128], index: 14, kind: input, shape index: {}]
  %s15 = inlined_call_operand.vmem [shape: f32[4,2,8], index: 15, kind: input, shape index: {}]
  %s16 = inlined_call_operand.vmem [shape: f32[4,128,10], index: 16, kind: input, shape index: {}]
  %s17 = inlined_call_operand.vmem [shape: f32[1,10], index: 17, kind: input, shape index: {}]
  %s18 = inlined_call_operand.hbm [shape: f32[2,10], index: 18, kind: output, shape index: {}]
  %s19 = sld [smem:[#allocation0]]
  $region102: #{tpu_custom_call.1} parent=0
    _
  %s21 = ssub.s32 1, %s19
  %s22 = scalar_select 0, %s21, %s19
  $region1: #{tpu_custom_call.1} parent=0
    #allocation2 [shape = 'u8[3072]{0}', space=vmem, size = 0xc00, scoped, tag = 'input window, operand 3, single buffered']
    #allocation3 [shape = 's32[1]{0}', space=sflag, size = 0x4, scoped, tag = 'scoped memory for tpu_custom_call.1']
    #allocation4 [shape = 's32[1]{0}', space=sflag, size = 0x4, scoped, tag = 'scoped memory for tpu_custom_call.1']
    #allocation5 [shape = 'u8[16384]{0}', space=vmem, size = 0x4000, scoped, tag = 'input window, operand 6, single buffered']
    #allocation6 [shape = 's32[1]{0}', space=sflag, size = 0x4, scoped, tag = 'scoped memory for tpu_custom_call.1']
    #allocation7 [shape = 'u8[262144]{0}', space=vmem, size = 0x40000, scoped, tag = 'input window, operand 7, single buffered']
    #allocation8 [shape = 'u8[3072]{0}', space=vmem, size = 0xc00, scoped, tag = 'input window, operand 10, single buffered']
    #allocation9 [shape = 's32[1]{0}', space=sflag, size = 0x4, scoped, tag = 'scoped memory for tpu_custom_call.1']
    #allocation10 [shape = 'u8[262144]{0}', space=vmem, size = 0x40000, scoped, tag = 'input window, operand 14, single buffered']
    #allocation11 [shape = 'u8[1024]{0}', space=vmem, size = 0x400, scoped, tag = 'output window, operand 0, single buffered']
    %23 = vsyncpa [#allocation3], 0
    %24 = vsyncpa [#allocation6], 0
    %25 = vsyncpa [#allocation9], 0
    %26 = vsyncpa [#allocation4], 0
    // Predicated region
    $region2: #{tpu_custom_call.1} parent=1 // pred_check
      _
    $region3: #{tpu_custom_call.1} parent=1 // pred_check_branch
      %28 = sbr.rel (0) target = $region5
    $region4: #{tpu_custom_call.1} parent=1 // pred_region
      _
    $region5: #{tpu_custom_call.1} parent=1 // pred_fallthru
      _
    // Predicated region
    $region6: #{tpu_custom_call.1} parent=1 // pred_check
      _
    $region7: #{tpu_custom_call.1} parent=1 // pred_check_branch
      %30 = sbr.rel (0) target = $region9
    $region8: #{tpu_custom_call.1} parent=1 // pred_region
      _
    $region9: #{tpu_custom_call.1} parent=1 // pred_fallthru
      _
    // Predicated region
    $region10: #{tpu_custom_call.1} parent=1 // pred_check
      _
    $region11: #{tpu_custom_call.1} parent=1 // pred_check_branch
      %32 = sbr.rel (0) target = $region13
    $region12: #{tpu_custom_call.1} parent=1 // pred_region
      _
    $region13: #{tpu_custom_call.1} parent=1 // pred_fallthru
      _
    // Predicated region
    $region14: #{tpu_custom_call.1} parent=1 // pred_check
      _
    $region15: #{tpu_custom_call.1} parent=1 // pred_check_branch
      %34 = sbr.rel (0) target = $region17
    $region16: #{tpu_custom_call.1} parent=1 // pred_region
      %s36 = ssub.s32 96, 96
      %37 = vsyncadd [#allocation3], %s36
      %s38 = sshll.u32 [#allocation2], 4
      %s39 = int_to_ptr.vmem [resolvable:$true] %s38
      %44 = dma.hbm_to_vmem [thread:$0]  %s3, 96, %s39, [#allocation3], 32, 32, 2
    $region17: #{tpu_custom_call.1} parent=1 // pred_fallthru
      _
    // Predicated region
    $region18: #{tpu_custom_call.1} parent=1 // pred_check
      _
    $region19: #{tpu_custom_call.1} parent=1 // pred_check_branch
      %46 = sbr.rel (0) target = $region21
    $region20: #{tpu_custom_call.1} parent=1 // pred_region
      _
    $region21: #{tpu_custom_call.1} parent=1 // pred_fallthru
      _
    // Predicated region
    $region22: #{tpu_custom_call.1} parent=1 // pred_check
      _
    $region23: #{tpu_custom_call.1} parent=1 // pred_check_branch
      %48 = sbr.rel (0) target = $region25
    $region24: #{tpu_custom_call.1} parent=1 // pred_region
      _
    $region25: #{tpu_custom_call.1} parent=1 // pred_fallthru
      _
    // Predicated region
    $region26: #{tpu_custom_call.1} parent=1 // pred_check
      _
    $region27: #{tpu_custom_call.1} parent=1 // pred_check_branch
      %50 = sbr.rel (0) target = $region29
    $region28: #{tpu_custom_call.1} parent=1 // pred_region
      %s52 = ssub.s32 512, 512
      %53 = vsyncadd [#allocation6], %s52
      %s54 = sshll.u32 [#allocation5], 4
      %s55 = int_to_ptr.vmem [resolvable:$true] %s54
      %60 = dma.hbm_to_vmem [thread:$0]  %s6, 512, %s55, [#allocation6], 128, 128, 8
    $region29: #{tpu_custom_call.1} parent=1 // pred_fallthru
      _
    // Predicated region
    $region30: #{tpu_custom_call.1} parent=1 // pred_check
      _
    $region31: #{tpu_custom_call.1} parent=1 // pred_check_branch
      %62 = sbr.rel (0) target = $region33
    $region32: #{tpu_custom_call.1} parent=1 // pred_region
      %s64 = ssub.s32 8192, 8192
      %65 = vsyncadd [#allocation6], %s64
      %s66 = sshll.u32 [#allocation7], 4
      %s67 = int_to_ptr.vmem [resolvable:$true] %s66
      %72 = dma.hbm_to_vmem [thread:$0]  %s7, 8192, %s67, [#allocation6], 128, 128, 8
    $region33: #{tpu_custom_call.1} parent=1 // pred_fallthru
      _
    // Predicated region
    $region34: #{tpu_custom_call.1} parent=1 // pred_check
      _
    $region35: #{tpu_custom_call.1} parent=1 // pred_check_branch
      %74 = sbr.rel (0) target = $region37
    $region36: #{tpu_custom_call.1} parent=1 // pred_region
      _
    $region37: #{tpu_custom_call.1} parent=1 // pred_fallthru
      _
    // Predicated region
    $region38: #{tpu_custom_call.1} parent=1 // pred_check
      _
    $region39: #{tpu_custom_call.1} parent=1 // pred_check_branch
      %76 = sbr.rel (0) target = $region41
    $region40: #{tpu_custom_call.1} parent=1 // pred_region
      _
    $region41: #{tpu_custom_call.1} parent=1 // pred_fallthru
      _
    // Predicated region
    $region42: #{tpu_custom_call.1} parent=1 // pred_check
      _
    $region43: #{tpu_custom_call.1} parent=1 // pred_check_branch
      %78 = sbr.rel (0) target = $region45
    $region44: #{tpu_custom_call.1} parent=1 // pred_region
      %s80 = ssub.s32 96, 96
      %81 = vsyncadd [#allocation9], %s80
      %s82 = sshll.u32 [#allocation8], 4
      %s83 = int_to_ptr.vmem [resolvable:$true] %s82
      %88 = dma.hbm_to_vmem [thread:$0]  %s10, 96, %s83, [#allocation9], 32, 32, 2
    $region45: #{tpu_custom_call.1} parent=1 // pred_fallthru
      _
    // Predicated region
    $region46: #{tpu_custom_call.1} parent=1 // pred_check
      _
    $region47: #{tpu_custom_call.1} parent=1 // pred_check_branch
      %90 = sbr.rel (0) target = $region49
    $region48: #{tpu_custom_call.1} parent=1 // pred_region
      _
    $region49: #{tpu_custom_call.1} parent=1 // pred_fallthru
      _
    // Predicated region
    $region50: #{tpu_custom_call.1} parent=1 // pred_check
      _
    $region51: #{tpu_custom_call.1} parent=1 // pred_check_branch
      %92 = sbr.rel (0) target = $region53
    $region52: #{tpu_custom_call.1} parent=1 // pred_region
      _
    $region53: #{tpu_custom_call.1} parent=1 // pred_fallthru
      _
    // Predicated region
    $region54: #{tpu_custom_call.1} parent=1 // pred_check
      _
    $region55: #{tpu_custom_call.1} parent=1 // pred_check_branch
      %94 = sbr.rel (0) target = $region57
    $region56: #{tpu_custom_call.1} parent=1 // pred_region
      _
    $region57: #{tpu_custom_call.1} parent=1 // pred_fallthru
      _
    // Predicated region
    $region58: #{tpu_custom_call.1} parent=1 // pred_check
      _
    $region59: #{tpu_custom_call.1} parent=1 // pred_check_branch
      %96 = sbr.rel (0) target = $region61
    $region60: #{tpu_custom_call.1} parent=1 // pred_region
      %s98 = ssub.s32 8192, 8192
      %99 = vsyncadd [#allocation9], %s98
      %s100 = sshll.u32 [#allocation10], 4
      %s101 = int_to_ptr.vmem [resolvable:$true] %s100
      %106 = dma.hbm_to_vmem [thread:$0]  %s14, 8192, %s101, [#allocation9], 128, 128, 8
    $region61: #{tpu_custom_call.1} parent=1 // pred_fallthru
      _
    // Predicated region
    $region62: #{tpu_custom_call.1} parent=1 // pred_check
      _
    $region63: #{tpu_custom_call.1} parent=1 // pred_check_branch
      %108 = sbr.rel (0) target = $region65
    $region64: #{tpu_custom_call.1} parent=1 // pred_region
      _
    $region65: #{tpu_custom_call.1} parent=1 // pred_fallthru
      _
    // Predicated region
    $region66: #{tpu_custom_call.1} parent=1 // pred_check
      _
    $region67: #{tpu_custom_call.1} parent=1 // pred_check_branch
      %110 = sbr.rel (0) target = $region69
    $region68: #{tpu_custom_call.1} parent=1 // pred_region
      _
    $region69: #{tpu_custom_call.1} parent=1 // pred_fallthru
      _
    // Predicated region
    $region70: #{tpu_custom_call.1} parent=1 // pred_check
      _
    $region71: #{tpu_custom_call.1} parent=1 // pred_check_branch
      %112 = sbr.rel (0) target = $region73
    $region72: #{tpu_custom_call.1} parent=1 // pred_region
      _
    $region73: #{tpu_custom_call.1} parent=1 // pred_fallthru
      _
    // Predicated region
    $region74: #{tpu_custom_call.1} parent=1 // pred_check
      _
    $region75: #{tpu_custom_call.1} parent=1 // pred_check_branch
      %114 = sbr.rel (0) target = $region77
    $region76: #{tpu_custom_call.1} parent=1 // pred_region
      %115 = dma.done [#allocation3], 96
    $region77: #{tpu_custom_call.1} parent=1 // pred_fallthru
      _
    // Predicated region
    $region78: #{tpu_custom_call.1} parent=1 // pred_check
      _
    $region79: #{tpu_custom_call.1} parent=1 // pred_check_branch
      %117 = sbr.rel (0) target = $region81
    $region80: #{tpu_custom_call.1} parent=1 // pred_region
      %118 = dma.done [#allocation6], 512
    $region81: #{tpu_custom_call.1} parent=1 // pred_fallthru
      _
    // Predicated region
    $region82: #{tpu_custom_call.1} parent=1 // pred_check
      _
    $region83: #{tpu_custom_call.1} parent=1 // pred_check_branch
      %120 = sbr.rel (0) target = $region85
    $region84: #{tpu_custom_call.1} parent=1 // pred_region
      %121 = dma.done [#allocation6], 8192
    $region85: #{tpu_custom_call.1} parent=1 // pred_fallthru
      _
    // Predicated region
    $region86: #{tpu_custom_call.1} parent=1 // pred_check
      _
    $region87: #{tpu_custom_call.1} parent=1 // pred_check_branch
      %123 = sbr.rel (0) target = $region89
    $region88: #{tpu_custom_call.1} parent=1 // pred_region
      %124 = dma.done [#allocation9], 96
    $region89: #{tpu_custom_call.1} parent=1 // pred_fallthru
      _
    // Predicated region
    $region90: #{tpu_custom_call.1} parent=1 // pred_check
      _
    $region91: #{tpu_custom_call.1} parent=1 // pred_check_branch
      %126 = sbr.rel (0) target = $region93
    $region92: #{tpu_custom_call.1} parent=1 // pred_region
      %127 = dma.done [#allocation9], 8192
    $region93: #{tpu_custom_call.1} parent=1 // pred_fallthru
      _
    %v128 = vld [vmem:[%s0] sm:$0xff]
    %v129 = vld [vmem:[%s0 + $0x8] sm:$0xff]
    %v130 = vld [vmem:[%s0 + $0x10] sm:$0xff]
    %v131 = vld [vmem:[%s0 + $0x18] sm:$0xff]
    %v132 = vld [vmem:[%s1] sm:$0xff]
    %v133 = vld [vmem:[%s1 + $0x8] sm:$0xff]
    %v134 = vld [vmem:[%s1 + $0x10] sm:$0xff]
    %v135 = vld [vmem:[%s1 + $0x18] sm:$0xff]
    %vm136 = vcmask 261120
    %v138 = vsel %vm136, %v132, 0
    %v141 = vsel %vm136, %v133, 0
    %v144 = vsel %vm136, %v134, 0
    %v147 = vsel %vm136, %v135, 0
    %149 = vmatprep.subr.mxu0 0.0
    %150 = vmatpush1.msra.mxu0 0.0
    %151 = vmatprep.subr.mxu0 0.0
    %152 = vmatpush1.msra.mxu0 0.0
    %153 = vmatprep.subr.mxu0 0.0
    %154 = vmatpush1.msra.mxu0 0.0
    %155 = vmatprep.subr.mxu0 0.0
    %156 = vmatpush1.msra.mxu0 0.0
    %157 = vmatprep.subr.mxu0 0.0
    %158 = vmatpush1.msra.mxu0 0.0
    %159 = vmatprep.subr.mxu0 0.0
    %160 = vmatpush1.msra.mxu0 0.0
    %161 = vmatprep.subr.mxu0 0.0
    %162 = vmatpush1.msra.mxu0 0.0
    %163 = vmatprep.subr.mxu0 0.0
    %164 = vmatpush1.msra.mxu0 0.0
    %165 = vmatprep.subr.mxu0 0.0
    %166 = vmatpush1.msra.mxu0 0.0
    %167 = vmatprep.subr.mxu0 0.0
    %168 = vmatpush1.msra.mxu0 0.0
    %169 = vmatprep.subr.mxu0 0.0
    %170 = vmatpush1.msra.mxu0 0.0
    %171 = vmatprep.subr.mxu0 0.0
    %172 = vmatpush1.msra.mxu0 0.0
    %173 = vmatprep.subr.mxu0 0.0
    %174 = vmatpush1.msra.mxu0 %v131
    %175 = vmatprep.subr.mxu0 0.0
    %176 = vmatpush1.msra.mxu0 %v130
    %177 = vmatprep.subr.mxu0 0.0
    %178 = vmatpush1.msra.mxu0 %v129
    %179 = vmatprep.subr.mxu0 0.0
    %180 = vmatpush1.msra.mxu0 %v128
    %181 = vmatprep.subr.mxu0 0.0
    %182 = vmatpush2.msra.mxu0 0.0
    %183 = vmatprep.subr.mxu0 0.0
    %184 = vmatpush2.msra.mxu0 0.0
    %185 = vmatprep.subr.mxu0 0.0
    %186 = vmatpush2.msra.mxu0 0.0
    %187 = vmatprep.subr.mxu0 0.0
    %188 = vmatpush2.msra.mxu0 0.0
    %189 = vmatprep.subr.mxu0 0.0
    %190 = vmatpush2.msra.mxu0 0.0
    %191 = vmatprep.subr.mxu0 0.0
    %192 = vmatpush2.msra.mxu0 0.0
    %193 = vmatprep.subr.mxu0 0.0
    %194 = vmatpush2.msra.mxu0 0.0
    %195 = vmatprep.subr.mxu0 0.0
    %196 = vmatpush2.msra.mxu0 0.0
    %197 = vmatprep.subr.mxu0 0.0
    %198 = vmatpush2.msra.mxu0 0.0
    %199 = vmatprep.subr.mxu0 0.0
    %200 = vmatpush2.msra.mxu0 0.0
    %201 = vmatprep.subr.mxu0 0.0
    %202 = vmatpush2.msra.mxu0 0.0
    %203 = vmatprep.subr.mxu0 0.0
    %204 = vmatpush2.msra.mxu0 0.0
    %205 = vmatprep.subr.mxu0 0.0
    %206 = vmatpush2.msra.mxu0 0.0
    %207 = vmatprep.subr.mxu0 0.0
    %208 = vmatpush2.msra.mxu0 0.0
    %209 = vmatprep.subr.mxu0 0.0
    %210 = vmatpush2.msra.mxu0 0.0
    %211 = vmatprep.subr.mxu0 0.0
    %212 = vmatpush2.msra.mxu0 0.0
    %213 = vmatprep.mubr.f32.mxu0 0.0
    %214 = vmatmul.mubr.f32.gmra.mxu0 %v138
    %v215 = vpop.f32.mrf.mxu0
    %v216 = vadd.f32 0.0, %v215
    %v217 = vpop.f32.mrf.mxu0
    %218 = vmatprep.mubr.f32.mxu0 0.0
    %219 = vmatmul.mubr.f32.gmra.mxu0 %v141
    %v220 = vpop.f32.mrf.mxu0
    %v221 = vadd.f32 0.0, %v220
    %v222 = vpop.f32.mrf.mxu0
    %223 = vmatprep.mubr.f32.mxu0 0.0
    %224 = vmatmul.mubr.f32.gmra.mxu0 %v144
    %v225 = vpop.f32.mrf.mxu0
    %v226 = vadd.f32 0.0, %v225
    %v227 = vpop.f32.mrf.mxu0
    %228 = vmatprep.mubr.f32.mxu0 0.0
    %229 = vmatmul.mubr.f32.gmra.mxu0 %v147
    %v230 = vpop.f32.mrf.mxu0
    %v231 = vadd.f32 0.0, %v230
    %v232 = vpop.f32.mrf.mxu0
    %233 = vdwg.mxu0
    %v234 = vld [vmem:[%s2] sm:$0xff]
    %v235 = vld [vmem:[%s2 + $0x8] sm:$0xff]
    %v236 = vld [vmem:[%s2 + $0x10] sm:$0xff]
    %v237 = vld [vmem:[%s2 + $0x18] sm:$0xff]
    %s238 = scalar_lea.vmem %s1, 32
    %v239 = vld [vmem:[%s238] sm:$0xff]
    %v240 = vld [vmem:[%s238 + $0x8] sm:$0xff]
    %v241 = vld [vmem:[%s238 + $0x10] sm:$0xff]
    %v242 = vld [vmem:[%s238 + $0x18] sm:$0xff]
    %v244 = vsel %vm136, %v239, 0
    %v247 = vsel %vm136, %v240, 0
    %v250 = vsel %vm136, %v241, 0
    %v253 = vsel %vm136, %v242, 0
    %255 = vmatprep.subr.mxu0 0.0
    %256 = vmatpush1.msra.mxu0 0.0
    %257 = vmatprep.subr.mxu0 0.0
    %258 = vmatpush1.msra.mxu0 0.0
    %259 = vmatprep.subr.mxu0 0.0
    %260 = vmatpush1.msra.mxu0 0.0
    %261 = vmatprep.subr.mxu0 0.0
    %262 = vmatpush1.msra.mxu0 0.0
    %263 = vmatprep.subr.mxu0 0.0
    %264 = vmatpush1.msra.mxu0 0.0
    %265 = vmatprep.subr.mxu0 0.0
    %266 = vmatpush1.msra.mxu0 0.0
    %267 = vmatprep.subr.mxu0 0.0
    %268 = vmatpush1.msra.mxu0 0.0
    %269 = vmatprep.subr.mxu0 0.0
    %270 = vmatpush1.msra.mxu0 0.0
    %271 = vmatprep.subr.mxu0 0.0
    %272 = vmatpush1.msra.mxu0 0.0
    %273 = vmatprep.subr.mxu0 0.0
    %274 = vmatpush1.msra.mxu0 0.0
    %275 = vmatprep.subr.mxu0 0.0
    %276 = vmatpush1.msra.mxu0 0.0
    %277 = vmatprep.subr.mxu0 0.0
    %278 = vmatpush1.msra.mxu0 0.0
    %279 = vmatprep.subr.mxu0 0.0
    %280 = vmatpush1.msra.mxu0 %v131
    %281 = vmatprep.subr.mxu0 0.0
    %282 = vmatpush1.msra.mxu0 %v130
    %283 = vmatprep.subr.mxu0 0.0
    %284 = vmatpush1.msra.mxu0 %v129
    %285 = vmatprep.subr.mxu0 0.0
    %286 = vmatpush1.msra.mxu0 %v128
    %287 = vmatprep.subr.mxu0 0.0
    %288 = vmatpush2.msra.mxu0 0.0
    %289 = vmatprep.subr.mxu0 0.0
    %290 = vmatpush2.msra.mxu0 0.0
    %291 = vmatprep.subr.mxu0 0.0
    %292 = vmatpush2.msra.mxu0 0.0
    %293 = vmatprep.subr.mxu0 0.0
    %294 = vmatpush2.msra.mxu0 0.0
    %295 = vmatprep.subr.mxu0 0.0
    %296 = vmatpush2.msra.mxu0 0.0
    %297 = vmatprep.subr.mxu0 0.0
    %298 = vmatpush2.msra.mxu0 0.0
    %299 = vmatprep.subr.mxu0 0.0
    %300 = vmatpush2.msra.mxu0 0.0
    %301 = vmatprep.subr.mxu0 0.0
    %302 = vmatpush2.msra.mxu0 0.0
    %303 = vmatprep.subr.mxu0 0.0
    %304 = vmatpush2.msra.mxu0 0.0
    %305 = vmatprep.subr.mxu0 0.0
    %306 = vmatpush2.msra.mxu0 0.0
    %307 = vmatprep.subr.mxu0 0.0
    %308 = vmatpush2.msra.mxu0 0.0
    %309 = vmatprep.subr.mxu0 0.0
    %310 = vmatpush2.msra.mxu0 0.0
    %311 = vmatprep.subr.mxu0 0.0
    %312 = vmatpush2.msra.mxu0 0.0
    %313 = vmatprep.subr.mxu0 0.0
    %314 = vmatpush2.msra.mxu0 0.0
    %315 = vmatprep.subr.mxu0 0.0
    %316 = vmatpush2.msra.mxu0 0.0
    %317 = vmatprep.subr.mxu0 0.0
    %318 = vmatpush2.msra.mxu0 0.0
    %319 = vmatprep.mubr.f32.mxu0 0.0
    %320 = vmatmul.mubr.f32.gmra.mxu0 %v244
    %v321 = vpop.f32.mrf.mxu0
    %v322 = vadd.f32 0.0, %v321
    %v323 = vpop.f32.mrf.mxu0
    %324 = vmatprep.mubr.f32.mxu0 0.0
    %325 = vmatmul.mubr.f32.gmra.mxu0 %v247
    %v326 = vpop.f32.mrf.mxu0
    %v327 = vadd.f32 0.0, %v326
    %v328 = vpop.f32.mrf.mxu0
    %329 = vmatprep.mubr.f32.mxu0 0.0
    %330 = vmatmul.mubr.f32.gmra.mxu0 %v250
    %v331 = vpop.f32.mrf.mxu0
    %v332 = vadd.f32 0.0, %v331
    %v333 = vpop.f32.mrf.mxu0
    %334 = vmatprep.mubr.f32.mxu0 0.0
    %335 = vmatmul.mubr.f32.gmra.mxu0 %v253
    %v336 = vpop.f32.mrf.mxu0
    %v337 = vadd.f32 0.0, %v336
    %v338 = vpop.f32.mrf.mxu0
    %339 = vdwg.mxu0
    %s340 = scalar_lea.vmem %s2, 32
    %v341 = vld [vmem:[%s340] sm:$0xff]
    %v342 = vld [vmem:[%s340 + $0x8] sm:$0xff]
    %v343 = vld [vmem:[%s340 + $0x10] sm:$0xff]
    %v344 = vld [vmem:[%s340 + $0x18] sm:$0xff]
    %vm345 = vcmask 130048
    %v347 = vsel %vm345, %v322, 0
    %v350 = vsel %vm345, %v327, 0
    %v353 = vsel %vm345, %v332, 0
    %v356 = vsel %vm345, %v337, 0
    %358 = vmatprep.subr.mxu0 0.0
    %359 = vmatpush1.msra.mxu0 0.0
    %360 = vmatprep.subr.mxu0 0.0
    %361 = vmatpush1.msra.mxu0 0.0
    %362 = vmatprep.subr.mxu0 0.0
    %363 = vmatpush1.msra.mxu0 0.0
    %364 = vmatprep.subr.mxu0 0.0
    %365 = vmatpush1.msra.mxu0 0.0
    %366 = vmatprep.subr.mxu0 0.0
    %367 = vmatpush1.msra.mxu0 0.0
    %368 = vmatprep.subr.mxu0 0.0
    %369 = vmatpush1.msra.mxu0 0.0
    %370 = vmatprep.subr.mxu0 0.0
    %371 = vmatpush1.msra.mxu0 0.0
    %372 = vmatprep.subr.mxu0 0.0
    %373 = vmatpush1.msra.mxu0 0.0
    %374 = vmatprep.subr.mxu0 0.0
    %375 = vmatpush1.msra.mxu0 0.0
    %376 = vmatprep.subr.mxu0 0.0
    %377 = vmatpush1.msra.mxu0 0.0
    %378 = vmatprep.subr.mxu0 0.0
    %379 = vmatpush1.msra.mxu0 0.0
    %380 = vmatprep.subr.mxu0 0.0
    %381 = vmatpush1.msra.mxu0 0.0
    %382 = vmatprep.subr.mxu0 0.0
    %383 = vmatpush1.msra.mxu0 0.0
    %384 = vmatprep.subr.mxu0 0.0
    %385 = vmatpush1.msra.mxu0 0.0
    %386 = vmatprep.subr.mxu0 %v344
    %387 = vmatpush1.msra.mxu0 %v343
    %388 = vmatprep.subr.mxu0 %v342
    %389 = vmatpush1.msra.mxu0 %v341
    %390 = vmatprep.subr.mxu0 0.0
    %391 = vmatpush2.msra.mxu0 0.0
    %392 = vmatprep.subr.mxu0 0.0
    %393 = vmatpush2.msra.mxu0 0.0
    %394 = vmatprep.subr.mxu0 0.0
    %395 = vmatpush2.msra.mxu0 0.0
    %396 = vmatprep.subr.mxu0 0.0
    %397 = vmatpush2.msra.mxu0 0.0
    %398 = vmatprep.subr.mxu0 0.0
    %399 = vmatpush2.msra.mxu0 0.0
    %400 = vmatprep.subr.mxu0 0.0
    %401 = vmatpush2.msra.mxu0 0.0
    %402 = vmatprep.subr.mxu0 0.0
    %403 = vmatpush2.msra.mxu0 0.0
    %404 = vmatprep.subr.mxu0 0.0
    %405 = vmatpush2.msra.mxu0 0.0
    %406 = vmatprep.subr.mxu0 0.0
    %407 = vmatpush2.msra.mxu0 0.0
    %408 = vmatprep.subr.mxu0 0.0
    %409 = vmatpush2.msra.mxu0 0.0
    %410 = vmatprep.subr.mxu0 0.0
    %411 = vmatpush2.msra.mxu0 0.0
    %412 = vmatprep.subr.mxu0 0.0
    %413 = vmatpush2.msra.mxu0 0.0
    %414 = vmatprep.subr.mxu0 0.0
    %415 = vmatpush2.msra.mxu0 0.0
    %416 = vmatprep.subr.mxu0 0.0
    %417 = vmatpush2.msra.mxu0 0.0
    %418 = vmatprep.subr.mxu0 0.0
    %419 = vmatpush2.msra.mxu0 0.0
    %420 = vmatprep.subr.mxu0 0.0
    %421 = vmatpush2.msra.mxu0 0.0
    %422 = vmatprep.mubr.f32.mxu0 0.0
    %423 = vmatmul.mubr.f32.gmra.mxu0 %v347
    %v424 = vpop.f32.mrf.mxu0
    %v425 = vadd.f32 0.0, %v424
    %v426 = vpop.f32.mrf.mxu0
    %v427 = vadd.f32 0.0, %v426
    %428 = vmatprep.mubr.f32.mxu0 0.0
    %429 = vmatmul.mubr.f32.gmra.mxu0 %v350
    %v430 = vpop.f32.mrf.mxu0
    %v431 = vadd.f32 0.0, %v430
    %v432 = vpop.f32.mrf.mxu0
    %v433 = vadd.f32 0.0, %v432
    %434 = vmatprep.mubr.f32.mxu0 0.0
    %435 = vmatmul.mubr.f32.gmra.mxu0 %v353
    %v436 = vpop.f32.mrf.mxu0
    %v437 = vadd.f32 0.0, %v436
    %v438 = vpop.f32.mrf.mxu0
    %v439 = vadd.f32 0.0, %v438
    %440 = vmatprep.mubr.f32.mxu0 0.0
    %441 = vmatmul.mubr.f32.gmra.mxu0 %v356
    %v442 = vpop.f32.mrf.mxu0
    %v443 = vadd.f32 0.0, %v442
    %v444 = vpop.f32.mrf.mxu0
    %v445 = vadd.f32 0.0, %v444
    %446 = vdwg.mxu0
    %v448 = vsel %vm345, %v216, 0
    %v451 = vsel %vm345, %v221, 0
    %v454 = vsel %vm345, %v226, 0
    %v457 = vsel %vm345, %v231, 0
    %459 = vmatprep.subr.mxu0 0.0
    %460 = vmatpush1.msra.mxu0 0.0
    %461 = vmatprep.subr.mxu0 0.0
    %462 = vmatpush1.msra.mxu0 0.0
    %463 = vmatprep.subr.mxu0 0.0
    %464 = vmatpush1.msra.mxu0 0.0
    %465 = vmatprep.subr.mxu0 0.0
    %466 = vmatpush1.msra.mxu0 0.0
    %467 = vmatprep.subr.mxu0 0.0
    %468 = vmatpush1.msra.mxu0 0.0
    %469 = vmatprep.subr.mxu0 0.0
    %470 = vmatpush1.msra.mxu0 0.0
    %471 = vmatprep.subr.mxu0 0.0
    %472 = vmatpush1.msra.mxu0 0.0
    %473 = vmatprep.subr.mxu0 0.0
    %474 = vmatpush1.msra.mxu0 0.0
    %475 = vmatprep.subr.mxu0 0.0
    %476 = vmatpush1.msra.mxu0 0.0
    %477 = vmatprep.subr.mxu0 0.0
    %478 = vmatpush1.msra.mxu0 0.0
    %479 = vmatprep.subr.mxu0 0.0
    %480 = vmatpush1.msra.mxu0 0.0
    %481 = vmatprep.subr.mxu0 0.0
    %482 = vmatpush1.msra.mxu0 0.0
    %483 = vmatprep.subr.mxu0 0.0
    %484 = vmatpush1.msra.mxu0 0.0
    %485 = vmatprep.subr.mxu0 0.0
    %486 = vmatpush1.msra.mxu0 0.0
    %487 = vmatprep.subr.mxu0 %v237
    %488 = vmatpush1.msra.mxu0 %v236
    %489 = vmatprep.subr.mxu0 %v235
    %490 = vmatpush1.msra.mxu0 %v234
    %491 = vmatprep.subr.mxu0 0.0
    %492 = vmatpush2.msra.mxu0 0.0
    %493 = vmatprep.subr.mxu0 0.0
    %494 = vmatpush2.msra.mxu0 0.0
    %495 = vmatprep.subr.mxu0 0.0
    %496 = vmatpush2.msra.mxu0 0.0
    %497 = vmatprep.subr.mxu0 0.0
    %498 = vmatpush2.msra.mxu0 0.0
    %499 = vmatprep.subr.mxu0 0.0
    %500 = vmatpush2.msra.mxu0 0.0
    %501 = vmatprep.subr.mxu0 0.0
    %502 = vmatpush2.msra.mxu0 0.0
    %503 = vmatprep.subr.mxu0 0.0
    %504 = vmatpush2.msra.mxu0 0.0
    %505 = vmatprep.subr.mxu0 0.0
    %506 = vmatpush2.msra.mxu0 0.0
    %507 = vmatprep.subr.mxu0 0.0
    %508 = vmatpush2.msra.mxu0 0.0
    %509 = vmatprep.subr.mxu0 0.0
    %510 = vmatpush2.msra.mxu0 0.0
    %511 = vmatprep.subr.mxu0 0.0
    %512 = vmatpush2.msra.mxu0 0.0
    %513 = vmatprep.subr.mxu0 0.0
    %514 = vmatpush2.msra.mxu0 0.0
    %515 = vmatprep.subr.mxu0 0.0
    %516 = vmatpush2.msra.mxu0 0.0
    %517 = vmatprep.subr.mxu0 0.0
    %518 = vmatpush2.msra.mxu0 0.0
    %519 = vmatprep.subr.mxu0 0.0
    %520 = vmatpush2.msra.mxu0 0.0
    %521 = vmatprep.subr.mxu0 0.0
    %522 = vmatpush2.msra.mxu0 0.0
    %523 = vmatprep.mubr.f32.mxu0 0.0
    %524 = vmatmul.mubr.f32.gmra.mxu0 %v448
    %v525 = vpop.f32.mrf.mxu0
    %v526 = vadd.f32 %v425, %v525
    %v527 = vpop.f32.mrf.mxu0
    %v528 = vadd.f32 %v427, %v527
    %529 = vmatprep.mubr.f32.mxu0 0.0
    %530 = vmatmul.mubr.f32.gmra.mxu0 %v451
    %v531 = vpop.f32.mrf.mxu0
    %v532 = vadd.f32 %v431, %v531
    %v533 = vpop.f32.mrf.mxu0
    %v534 = vadd.f32 %v433, %v533
    %535 = vmatprep.mubr.f32.mxu0 0.0
    %536 = vmatmul.mubr.f32.gmra.mxu0 %v454
    %v537 = vpop.f32.mrf.mxu0
    %v538 = vadd.f32 %v437, %v537
    %v539 = vpop.f32.mrf.mxu0
    %v540 = vadd.f32 %v439, %v539
    %541 = vmatprep.mubr.f32.mxu0 0.0
    %542 = vmatmul.mubr.f32.gmra.mxu0 %v457
    %v543 = vpop.f32.mrf.mxu0
    %v544 = vadd.f32 %v443, %v543
    %v545 = vpop.f32.mrf.mxu0
    %v546 = vadd.f32 %v445, %v545
    %547 = vdwg.mxu0
    %s548 = scalar_lea.vmem %s1, 64
    %v549 = vld [vmem:[%s548] sm:$0xff]
    %v550 = vld [vmem:[%s548 + $0x8] sm:$0xff]
    %v551 = vld [vmem:[%s548 + $0x10] sm:$0xff]
    %v552 = vld [vmem:[%s548 + $0x18] sm:$0xff]
    %v554 = vsel %vm136, %v549, 0
    %v557 = vsel %vm136, %v550, 0
    %v560 = vsel %vm136, %v551, 0
    %v563 = vsel %vm136, %v552, 0
    %565 = vmatprep.subr.mxu0 0.0
    %566 = vmatpush1.msra.mxu0 0.0
    %567 = vmatprep.subr.mxu0 0.0
    %568 = vmatpush1.msra.mxu0 0.0
    %569 = vmatprep.subr.mxu0 0.0
    %570 = vmatpush1.msra.mxu0 0.0
    %571 = vmatprep.subr.mxu0 0.0
    %572 = vmatpush1.msra.mxu0 0.0
    %573 = vmatprep.subr.mxu0 0.0
    %574 = vmatpush1.msra.mxu0 0.0
    %575 = vmatprep.subr.mxu0 0.0
    %576 = vmatpush1.msra.mxu0 0.0
    %577 = vmatprep.subr.mxu0 0.0
    %578 = vmatpush1.msra.mxu0 0.0
    %579 = vmatprep.subr.mxu0 0.0
    %580 = vmatpush1.msra.mxu0 0.0
    %581 = vmatprep.subr.mxu0 0.0
    %582 = vmatpush1.msra.mxu0 0.0
    %583 = vmatprep.subr.mxu0 0.0
    %584 = vmatpush1.msra.mxu0 0.0
    %585 = vmatprep.subr.mxu0 0.0
    %586 = vmatpush1.msra.mxu0 0.0
    %587 = vmatprep.subr.mxu0 0.0
    %588 = vmatpush1.msra.mxu0 0.0
    %589 = vmatprep.subr.mxu0 0.0
    %590 = vmatpush1.msra.mxu0 %v131
    %591 = vmatprep.subr.mxu0 0.0
    %592 = vmatpush1.msra.mxu0 %v130
    %593 = vmatprep.subr.mxu0 0.0
    %594 = vmatpush1.msra.mxu0 %v129
    %595 = vmatprep.subr.mxu0 0.0
    %596 = vmatpush1.msra.mxu0 %v128
    %597 = vmatprep.subr.mxu0 0.0
    %598 = vmatpush2.msra.mxu0 0.0
    %599 = vmatprep.subr.mxu0 0.0
    %600 = vmatpush2.msra.mxu0 0.0
    %601 = vmatprep.subr.mxu0 0.0
    %602 = vmatpush2.msra.mxu0 0.0
    %603 = vmatprep.subr.mxu0 0.0
    %604 = vmatpush2.msra.mxu0 0.0
    %605 = vmatprep.subr.mxu0 0.0
    %606 = vmatpush2.msra.mxu0 0.0
    %607 = vmatprep.subr.mxu0 0.0
    %608 = vmatpush2.msra.mxu0 0.0
    %609 = vmatprep.subr.mxu0 0.0
    %610 = vmatpush2.msra.mxu0 0.0
    %611 = vmatprep.subr.mxu0 0.0
    %612 = vmatpush2.msra.mxu0 0.0
    %613 = vmatprep.subr.mxu0 0.0
    %614 = vmatpush2.msra.mxu0 0.0
    %615 = vmatprep.subr.mxu0 0.0
    %616 = vmatpush2.msra.mxu0 0.0
    %617 = vmatprep.subr.mxu0 0.0
    %618 = vmatpush2.msra.mxu0 0.0
    %619 = vmatprep.subr.mxu0 0.0
    %620 = vmatpush2.msra.mxu0 0.0
    %621 = vmatprep.subr.mxu0 0.0
    %622 = vmatpush2.msra.mxu0 0.0
    %623 = vmatprep.subr.mxu0 0.0
    %624 = vmatpush2.msra.mxu0 0.0
    %625 = vmatprep.subr.mxu0 0.0
    %626 = vmatpush2.msra.mxu0 0.0
    %627 = vmatprep.subr.mxu0 0.0
    %628 = vmatpush2.msra.mxu0 0.0
    %629 = vmatprep.mubr.f32.mxu0 0.0
    %630 = vmatmul.mubr.f32.gmra.mxu0 %v554
    %v631 = vpop.f32.mrf.mxu0
    %v632 = vadd.f32 0.0, %v631
    %v633 = vpop.f32.mrf.mxu0
    %634 = vmatprep.mubr.f32.mxu0 0.0
    %635 = vmatmul.mubr.f32.gmra.mxu0 %v557
    %v636 = vpop.f32.mrf.mxu0
    %v637 = vadd.f32 0.0, %v636
    %v638 = vpop.f32.mrf.mxu0
    %639 = vmatprep.mubr.f32.mxu0 0.0
    %640 = vmatmul.mubr.f32.gmra.mxu0 %v560
    %v641 = vpop.f32.mrf.mxu0
    %v642 = vadd.f32 0.0, %v641
    %v643 = vpop.f32.mrf.mxu0
    %644 = vmatprep.mubr.f32.mxu0 0.0
    %645 = vmatmul.mubr.f32.gmra.mxu0 %v563
    %v646 = vpop.f32.mrf.mxu0
    %v647 = vadd.f32 0.0, %v646
    %v648 = vpop.f32.mrf.mxu0
    %649 = vdwg.mxu0
    %s650 = scalar_lea.vmem %s2, 64
    %v651 = vld [vmem:[%s650] sm:$0xff]
    %v652 = vld [vmem:[%s650 + $0x8] sm:$0xff]
    %v653 = vld [vmem:[%s650 + $0x10] sm:$0xff]
    %v654 = vld [vmem:[%s650 + $0x18] sm:$0xff]
    %v656 = vsel %vm345, %v632, 0
    %v659 = vsel %vm345, %v637, 0
    %v662 = vsel %vm345, %v642, 0
    %v665 = vsel %vm345, %v647, 0
    %667 = vmatprep.subr.mxu0 0.0
    %668 = vmatpush1.msra.mxu0 0.0
    %669 = vmatprep.subr.mxu0 0.0
    %670 = vmatpush1.msra.mxu0 0.0
    %671 = vmatprep.subr.mxu0 0.0
    %672 = vmatpush1.msra.mxu0 0.0
    %673 = vmatprep.subr.mxu0 0.0
    %674 = vmatpush1.msra.mxu0 0.0
    %675 = vmatprep.subr.mxu0 0.0
    %676 = vmatpush1.msra.mxu0 0.0
    %677 = vmatprep.subr.mxu0 0.0
    %678 = vmatpush1.msra.mxu0 0.0
    %679 = vmatprep.subr.mxu0 0.0
    %680 = vmatpush1.msra.mxu0 0.0
    %681 = vmatprep.subr.mxu0 0.0
    %682 = vmatpush1.msra.mxu0 0.0
    %683 = vmatprep.subr.mxu0 0.0
    %684 = vmatpush1.msra.mxu0 0.0
    %685 = vmatprep.subr.mxu0 0.0
    %686 = vmatpush1.msra.mxu0 0.0
    %687 = vmatprep.subr.mxu0 0.0
    %688 = vmatpush1.msra.mxu0 0.0
    %689 = vmatprep.subr.mxu0 0.0
    %690 = vmatpush1.msra.mxu0 0.0
    %691 = vmatprep.subr.mxu0 0.0
    %692 = vmatpush1.msra.mxu0 0.0
    %693 = vmatprep.subr.mxu0 0.0
    %694 = vmatpush1.msra.mxu0 0.0
    %695 = vmatprep.subr.mxu0 %v654
    %696 = vmatpush1.msra.mxu0 %v653
    %697 = vmatprep.subr.mxu0 %v652
    %698 = vmatpush1.msra.mxu0 %v651
    %699 = vmatprep.subr.mxu0 0.0
    %700 = vmatpush2.msra.mxu0 0.0
    %701 = vmatprep.subr.mxu0 0.0
    %702 = vmatpush2.msra.mxu0 0.0
    %703 = vmatprep.subr.mxu0 0.0
    %704 = vmatpush2.msra.mxu0 0.0
    %705 = vmatprep.subr.mxu0 0.0
    %706 = vmatpush2.msra.mxu0 0.0
    %707 = vmatprep.subr.mxu0 0.0
    %708 = vmatpush2.msra.mxu0 0.0
    %709 = vmatprep.subr.mxu0 0.0
    %710 = vmatpush2.msra.mxu0 0.0
    %711 = vmatprep.subr.mxu0 0.0
    %712 = vmatpush2.msra.mxu0 0.0
    %713 = vmatprep.subr.mxu0 0.0
    %714 = vmatpush2.msra.mxu0 0.0
    %715 = vmatprep.subr.mxu0 0.0
    %716 = vmatpush2.msra.mxu0 0.0
    %717 = vmatprep.subr.mxu0 0.0
    %718 = vmatpush2.msra.mxu0 0.0
    %719 = vmatprep.subr.mxu0 0.0
    %720 = vmatpush2.msra.mxu0 0.0
    %721 = vmatprep.subr.mxu0 0.0
    %722 = vmatpush2.msra.mxu0 0.0
    %723 = vmatprep.subr.mxu0 0.0
    %724 = vmatpush2.msra.mxu0 0.0
    %725 = vmatprep.subr.mxu0 0.0
    %726 = vmatpush2.msra.mxu0 0.0
    %727 = vmatprep.subr.mxu0 0.0
    %728 = vmatpush2.msra.mxu0 0.0
    %729 = vmatprep.subr.mxu0 0.0
    %730 = vmatpush2.msra.mxu0 0.0
    %731 = vmatprep.mubr.f32.mxu0 0.0
    %732 = vmatmul.mubr.f32.gmra.mxu0 %v656
    %v733 = vpop.f32.mrf.mxu0
    %v734 = vadd.f32 0.0, %v733
    %v735 = vpop.f32.mrf.mxu0
    %v736 = vadd.f32 0.0, %v735
    %737 = vmatprep.mubr.f32.mxu0 0.0
    %738 = vmatmul.mubr.f32.gmra.mxu0 %v659
    %v739 = vpop.f32.mrf.mxu0
    %v740 = vadd.f32 0.0, %v739
    %v741 = vpop.f32.mrf.mxu0
    %v742 = vadd.f32 0.0, %v741
    %743 = vmatprep.mubr.f32.mxu0 0.0
    %744 = vmatmul.mubr.f32.gmra.mxu0 %v662
    %v745 = vpop.f32.mrf.mxu0
    %v746 = vadd.f32 0.0, %v745
    %v747 = vpop.f32.mrf.mxu0
    %v748 = vadd.f32 0.0, %v747
    %749 = vmatprep.mubr.f32.mxu0 0.0
    %750 = vmatmul.mubr.f32.gmra.mxu0 %v665
    %v751 = vpop.f32.mrf.mxu0
    %v752 = vadd.f32 0.0, %v751
    %v753 = vpop.f32.mrf.mxu0
    %v754 = vadd.f32 0.0, %v753
    %755 = vdwg.mxu0
    %v756 = vadd.f32 %v526, %v734
    %v757 = vadd.f32 %v528, %v736
    %v758 = vadd.f32 %v532, %v740
    %v759 = vadd.f32 %v534, %v742
    %v760 = vadd.f32 %v538, %v746
    %v761 = vadd.f32 %v540, %v748
    %v762 = vadd.f32 %v544, %v752
    %v763 = vadd.f32 %v546, %v754
    %v764 = vld [vmem:[#allocation2] sm:$0x3]
    %v766 = vlaneseq
    %v767 = vshrl.u32 %v766, 7
    %v768 = vsub.s32 0, %v767
    %v769 = vrot.slane %v764, %v768
    %v770 = vlaneseq
    %v771 = vshrl.u32 %v770, 7
    %v772 = vsub.s32 1, %v771
    %v773 = vrot.slane %v764, %v772
    %v776 = vadd.f32 %v756, %v769
    %v777 = vadd.f32 %v757, %v773
    %v778 = vadd.f32 %v758, %v769
    %v779 = vadd.f32 %v759, %v773
    %v780 = vadd.f32 %v760, %v769
    %v781 = vadd.f32 %v761, %v773
    %v782 = vadd.f32 %v762, %v769
    %v783 = vadd.f32 %v763, %v773
    %v784 = vadd.f32 %v776, %v778
    %v785 = vadd.f32 %v784, %v780
    %v786 = vadd.f32 %v785, %v782
    %v787 = vrot.slane %v786, 4
    %v788 = vadd.f32 %v786, %v787
    %v789 = vrot.slane %v788, 2
    %v790 = vadd.f32 %v788, %v789
    %v791 = vrot.slane %v790, 1
    %v792 = vadd.f32 %v790, %v791
    %v793 = vadd.f32 %v777, %v779
    %v794 = vadd.f32 %v793, %v781
    %v795 = vadd.f32 %v794, %v783
    %v796 = vrot.slane %v795, 4
    %v797 = vadd.f32 %v795, %v796
    %v798 = vrot.slane %v797, 2
    %v799 = vadd.f32 %v797, %v798
    %v800 = vrot.slane %v799, 1
    %v801 = vadd.f32 %v799, %v800
    %v802 = vld [vmem:[%s4] sm:$0xff]
    %v803 = vld [vmem:[%s4 + $0x8] sm:$0xff]
    %v804 = vld [vmem:[%s4 + $0x10] sm:$0xff]
    %v805 = vld [vmem:[%s4 + $0x18] sm:$0xff]
    %v806 = vld [vmem:[%s4 + $0x20] sm:$0xff]
    %v807 = vld [vmem:[%s4 + $0x28] sm:$0xff]
    %v808 = vld [vmem:[%s4 + $0x30] sm:$0xff]
    %v809 = vld [vmem:[%s4 + $0x38] sm:$0xff]
    %v810 = vld [vmem:[%s4 + $0x40] sm:$0xff]
    %v811 = vld [vmem:[%s4 + $0x48] sm:$0xff]
    %v812 = vld [vmem:[%s4 + $0x50] sm:$0xff]
    %v813 = vld [vmem:[%s4 + $0x58] sm:$0xff]
    %v814 = vld [vmem:[%s4 + $0x60] sm:$0xff]
    %v815 = vld [vmem:[%s4 + $0x68] sm:$0xff]
    %v816 = vld [vmem:[%s4 + $0x70] sm:$0xff]
    %v817 = vld [vmem:[%s4 + $0x78] sm:$0xff]
    %v818 = vld [vmem:[%s4 + $0x80] sm:$0xff]
    %v819 = vld [vmem:[%s4 + $0x88] sm:$0xff]
    %v820 = vld [vmem:[%s4 + $0x90] sm:$0xff]
    %v821 = vld [vmem:[%s4 + $0x98] sm:$0xff]
    %v822 = vld [vmem:[%s4 + $0xa0] sm:$0xff]
    %v823 = vld [vmem:[%s4 + $0xa8] sm:$0xff]
    %v824 = vld [vmem:[%s4 + $0xb0] sm:$0xff]
    %v825 = vld [vmem:[%s4 + $0xb8] sm:$0xff]
    %v826 = vld [vmem:[%s4 + $0xc0] sm:$0xff]
    %v827 = vld [vmem:[%s4 + $0xc8] sm:$0xff]
    %v828 = vld [vmem:[%s4 + $0xd0] sm:$0xff]
    %v829 = vld [vmem:[%s4 + $0xd8] sm:$0xff]
    %v830 = vld [vmem:[%s4 + $0xe0] sm:$0xff]
    %v831 = vld [vmem:[%s4 + $0xe8] sm:$0xff]
    %v832 = vld [vmem:[%s4 + $0xf0] sm:$0xff]
    %v833 = vld [vmem:[%s4 + $0xf8] sm:$0xff]
    %834 = vmatprep.subr.mxu0 0.0
    %835 = vmatpush1.msra.mxu0 %v817
    %836 = vmatprep.subr.mxu0 0.0
    %837 = vmatpush1.msra.mxu0 %v816
    %838 = vmatprep.subr.mxu0 0.0
    %839 = vmatpush1.msra.mxu0 %v815
    %840 = vmatprep.subr.mxu0 0.0
    %841 = vmatpush1.msra.mxu0 %v814
    %842 = vmatprep.subr.mxu0 0.0
    %843 = vmatpush1.msra.mxu0 %v813
    %844 = vmatprep.subr.mxu0 0.0
    %845 = vmatpush1.msra.mxu0 %v812
    %846 = vmatprep.subr.mxu0 0.0
    %847 = vmatpush1.msra.mxu0 %v811
    %848 = vmatprep.subr.mxu0 0.0
    %849 = vmatpush1.msra.mxu0 %v810
    %850 = vmatprep.subr.mxu0 0.0
    %851 = vmatpush1.msra.mxu0 %v809
    %852 = vmatprep.subr.mxu0 0.0
    %853 = vmatpush1.msra.mxu0 %v808
    %854 = vmatprep.subr.mxu0 0.0
    %855 = vmatpush1.msra.mxu0 %v807
    %856 = vmatprep.subr.mxu0 0.0
    %857 = vmatpush1.msra.mxu0 %v806
    %858 = vmatprep.subr.mxu0 0.0
    %859 = vmatpush1.msra.mxu0 %v805
    %860 = vmatprep.subr.mxu0 0.0
    %861 = vmatpush1.msra.mxu0 %v804
    %862 = vmatprep.subr.mxu0 0.0
    %863 = vmatpush1.msra.mxu0 %v803
    %864 = vmatprep.subr.mxu0 0.0
    %865 = vmatpush1.msra.mxu0 %v802
    %866 = vmatprep.subr.mxu0 0.0
    %867 = vmatpush2.msra.mxu0 %v833
    %868 = vmatprep.subr.mxu0 0.0
    %869 = vmatpush2.msra.mxu0 %v832
    %870 = vmatprep.subr.mxu0 0.0
    %871 = vmatpush2.msra.mxu0 %v831
    %872 = vmatprep.subr.mxu0 0.0
    %873 = vmatpush2.msra.mxu0 %v830
    %874 = vmatprep.subr.mxu0 0.0
    %875 = vmatpush2.msra.mxu0 %v829
    %876 = vmatprep.subr.mxu0 0.0
    %877 = vmatpush2.msra.mxu0 %v828
    %878 = vmatprep.subr.mxu0 0.0
    %879 = vmatpush2.msra.mxu0 %v827
    %880 = vmatprep.subr.mxu0 0.0
    %881 = vmatpush2.msra.mxu0 %v826
    %882 = vmatprep.subr.mxu0 0.0
    %883 = vmatpush2.msra.mxu0 %v825
    %884 = vmatprep.subr.mxu0 0.0
    %885 = vmatpush2.msra.mxu0 %v824
    %886 = vmatprep.subr.mxu0 0.0
    %887 = vmatpush2.msra.mxu0 %v823
    %888 = vmatprep.subr.mxu0 0.0
    %889 = vmatpush2.msra.mxu0 %v822
    %890 = vmatprep.subr.mxu0 0.0
    %891 = vmatpush2.msra.mxu0 %v821
    %892 = vmatprep.subr.mxu0 0.0
    %893 = vmatpush2.msra.mxu0 %v820
    %894 = vmatprep.subr.mxu0 0.0
    %895 = vmatpush2.msra.mxu0 %v819
    %896 = vmatprep.subr.mxu0 0.0
    %897 = vmatpush2.msra.mxu0 %v818
    %898 = vmatprep.mubr.f32.mxu0 %v801
    %899 = vmatmul.mubr.f32.gmra.mxu0 %v792
    %v900 = vpop.f32.mrf.mxu0
    %v901 = vadd.f32 0.0, %v900
    %v902 = vpop.f32.mrf.mxu0
    %903 = vdwg.mxu0
    %v904 = vmul.f32 %v901, 0.001953125
    %v905 = vld [vmem:[%s5] sm:$0xff]
    %v906 = vld [vmem:[%s5 + $0x8] sm:$0xff]
    %v907 = vld [vmem:[%s5 + $0x10] sm:$0xff]
    %v908 = vld [vmem:[%s5 + $0x18] sm:$0xff]
    %v910 = vsel %vm345, %v904, 0
    %912 = vmatprep.subr.mxu0 0.0
    %913 = vmatpush1.msra.mxu0 0.0
    %914 = vmatprep.subr.mxu0 0.0
    %915 = vmatpush1.msra.mxu0 0.0
    %916 = vmatprep.subr.mxu0 0.0
    %917 = vmatpush1.msra.mxu0 0.0
    %918 = vmatprep.subr.mxu0 0.0
    %919 = vmatpush1.msra.mxu0 0.0
    %920 = vmatprep.subr.mxu0 0.0
    %921 = vmatpush1.msra.mxu0 0.0
    %922 = vmatprep.subr.mxu0 0.0
    %923 = vmatpush1.msra.mxu0 0.0
    %924 = vmatprep.subr.mxu0 0.0
    %925 = vmatpush1.msra.mxu0 0.0
    %926 = vmatprep.subr.mxu0 0.0
    %927 = vmatpush1.msra.mxu0 0.0
    %928 = vmatprep.subr.mxu0 0.0
    %929 = vmatpush1.msra.mxu0 0.0
    %930 = vmatprep.subr.mxu0 0.0
    %931 = vmatpush1.msra.mxu0 0.0
    %932 = vmatprep.subr.mxu0 0.0
    %933 = vmatpush1.msra.mxu0 0.0
    %934 = vmatprep.subr.mxu0 0.0
    %935 = vmatpush1.msra.mxu0 0.0
    %936 = vmatprep.subr.mxu0 0.0
    %937 = vmatpush1.msra.mxu0 0.0
    %938 = vmatprep.subr.mxu0 0.0
    %939 = vmatpush1.msra.mxu0 0.0
    %940 = vmatprep.subr.mxu0 %v908
    %941 = vmatpush1.msra.mxu0 %v907
    %942 = vmatprep.subr.mxu0 %v906
    %943 = vmatpush1.msra.mxu0 %v905
    %944 = vmatprep.subr.mxu0 0.0
    %945 = vmatpush2.msra.mxu0 0.0
    %946 = vmatprep.subr.mxu0 0.0
    %947 = vmatpush2.msra.mxu0 0.0
    %948 = vmatprep.subr.mxu0 0.0
    %949 = vmatpush2.msra.mxu0 0.0
    %950 = vmatprep.subr.mxu0 0.0
    %951 = vmatpush2.msra.mxu0 0.0
    %952 = vmatprep.subr.mxu0 0.0
    %953 = vmatpush2.msra.mxu0 0.0
    %954 = vmatprep.subr.mxu0 0.0
    %955 = vmatpush2.msra.mxu0 0.0
    %956 = vmatprep.subr.mxu0 0.0
    %957 = vmatpush2.msra.mxu0 0.0
    %958 = vmatprep.subr.mxu0 0.0
    %959 = vmatpush2.msra.mxu0 0.0
    %960 = vmatprep.subr.mxu0 0.0
    %961 = vmatpush2.msra.mxu0 0.0
    %962 = vmatprep.subr.mxu0 0.0
    %963 = vmatpush2.msra.mxu0 0.0
    %964 = vmatprep.subr.mxu0 0.0
    %965 = vmatpush2.msra.mxu0 0.0
    %966 = vmatprep.subr.mxu0 0.0
    %967 = vmatpush2.msra.mxu0 0.0
    %968 = vmatprep.subr.mxu0 0.0
    %969 = vmatpush2.msra.mxu0 0.0
    %970 = vmatprep.subr.mxu0 0.0
    %971 = vmatpush2.msra.mxu0 0.0
    %972 = vmatprep.subr.mxu0 0.0
    %973 = vmatpush2.msra.mxu0 0.0
    %974 = vmatprep.subr.mxu0 0.0
    %975 = vmatpush2.msra.mxu0 0.0
    %976 = vmatprep.mubr.f32.mxu0 0.0
    %977 = vmatmul.mubr.f32.gmra.mxu0 %v910
    %v978 = vpop.f32.mrf.mxu0
    %v979 = vadd.f32 0.0, %v978
    %v980 = vpop.f32.mrf.mxu0
    %v981 = vadd.f32 0.0, %v980
    %982 = vdwg.mxu0
    %v983 = vlaneseq
    %v984 = vshrl.u32 %v983, 7
    %v985 = vsub.s32 0, %v984
    %v986 = vrot.slane %v979, %v985
    %v987 = vlaneseq
    %v988 = vshrl.u32 %v987, 7
    %v989 = vsub.s32 0, %v988
    %v990 = vrot.slane %v981, %v989
    %v991 = vsub.f32 %v776, %v986
    %v992 = vsub.f32 %v777, %v990
    %v993 = vsub.f32 %v778, %v986
    %v994 = vsub.f32 %v779, %v990
    %v995 = vsub.f32 %v780, %v986
    %v996 = vsub.f32 %v781, %v990
    %v997 = vsub.f32 %v782, %v986
    %v998 = vsub.f32 %v783, %v990
    %v999 = vmul.f32 %v991, %v991
    %v1000 = vmul.f32 %v992, %v992
    %v1001 = vmul.f32 %v993, %v993
    %v1002 = vmul.f32 %v994, %v994
    %v1003 = vmul.f32 %v995, %v995
    %v1004 = vmul.f32 %v996, %v996
    %v1005 = vmul.f32 %v997, %v997
    %v1006 = vmul.f32 %v998, %v998
    %v1007 = vadd.f32 %v999, %v1001
    %v1008 = vadd.f32 %v1007, %v1003
    %v1009 = vadd.f32 %v1008, %v1005
    %v1010 = vrot.slane %v1009, 4
    %v1011 = vadd.f32 %v1009, %v1010
    %v1012 = vrot.slane %v1011, 2
    %v1013 = vadd.f32 %v1011, %v1012
    %v1014 = vrot.slane %v1013, 1
    %v1015 = vadd.f32 %v1013, %v1014
    %v1016 = vadd.f32 %v1000, %v1002
    %v1017 = vadd.f32 %v1016, %v1004
    %v1018 = vadd.f32 %v1017, %v1006
    %v1019 = vrot.slane %v1018, 4
    %v1020 = vadd.f32 %v1018, %v1019
    %v1021 = vrot.slane %v1020, 2
    %v1022 = vadd.f32 %v1020, %v1021
    %v1023 = vrot.slane %v1022, 1
    %v1024 = vadd.f32 %v1022, %v1023
    %1025 = vmatprep.subr.mxu0 0.0
    %1026 = vmatpush1.msra.mxu0 %v817
    %1027 = vmatprep.subr.mxu0 0.0
    %1028 = vmatpush1.msra.mxu0 %v816
    %1029 = vmatprep.subr.mxu0 0.0
    %1030 = vmatpush1.msra.mxu0 %v815
    %1031 = vmatprep.subr.mxu0 0.0
    %1032 = vmatpush1.msra.mxu0 %v814
    %1033 = vmatprep.subr.mxu0 0.0
    %1034 = vmatpush1.msra.mxu0 %v813
    %1035 = vmatprep.subr.mxu0 0.0
    %1036 = vmatpush1.msra.mxu0 %v812
    %1037 = vmatprep.subr.mxu0 0.0
    %1038 = vmatpush1.msra.mxu0 %v811
    %1039 = vmatprep.subr.mxu0 0.0
    %1040 = vmatpush1.msra.mxu0 %v810
    %1041 = vmatprep.subr.mxu0 0.0
    %1042 = vmatpush1.msra.mxu0 %v809
    %1043 = vmatprep.subr.mxu0 0.0
    %1044 = vmatpush1.msra.mxu0 %v808
    %1045 = vmatprep.subr.mxu0 0.0
    %1046 = vmatpush1.msra.mxu0 %v807
    %1047 = vmatprep.subr.mxu0 0.0
    %1048 = vmatpush1.msra.mxu0 %v806
    %1049 = vmatprep.subr.mxu0 0.0
    %1050 = vmatpush1.msra.mxu0 %v805
    %1051 = vmatprep.subr.mxu0 0.0
    %1052 = vmatpush1.msra.mxu0 %v804
    %1053 = vmatprep.subr.mxu0 0.0
    %1054 = vmatpush1.msra.mxu0 %v803
    %1055 = vmatprep.subr.mxu0 0.0
    %1056 = vmatpush1.msra.mxu0 %v802
    %1057 = vmatprep.subr.mxu0 0.0
    %1058 = vmatpush2.msra.mxu0 %v833
    %1059 = vmatprep.subr.mxu0 0.0
    %1060 = vmatpush2.msra.mxu0 %v832
    %1061 = vmatprep.subr.mxu0 0.0
    %1062 = vmatpush2.msra.mxu0 %v831
    %1063 = vmatprep.subr.mxu0 0.0
    %1064 = vmatpush2.msra.mxu0 %v830
    %1065 = vmatprep.subr.mxu0 0.0
    %1066 = vmatpush2.msra.mxu0 %v829
    %1067 = vmatprep.subr.mxu0 0.0
    %1068 = vmatpush2.msra.mxu0 %v828
    %1069 = vmatprep.subr.mxu0 0.0
    %1070 = vmatpush2.msra.mxu0 %v827
    %1071 = vmatprep.subr.mxu0 0.0
    %1072 = vmatpush2.msra.mxu0 %v826
    %1073 = vmatprep.subr.mxu0 0.0
    %1074 = vmatpush2.msra.mxu0 %v825
    %1075 = vmatprep.subr.mxu0 0.0
    %1076 = vmatpush2.msra.mxu0 %v824
    %1077 = vmatprep.subr.mxu0 0.0
    %1078 = vmatpush2.msra.mxu0 %v823
    %1079 = vmatprep.subr.mxu0 0.0
    %1080 = vmatpush2.msra.mxu0 %v822
    %1081 = vmatprep.subr.mxu0 0.0
    %1082 = vmatpush2.msra.mxu0 %v821
    %1083 = vmatprep.subr.mxu0 0.0
    %1084 = vmatpush2.msra.mxu0 %v820
    %1085 = vmatprep.subr.mxu0 0.0
    %1086 = vmatpush2.msra.mxu0 %v819
    %1087 = vmatprep.subr.mxu0 0.0
    %1088 = vmatpush2.msra.mxu0 %v818
    %1089 = vmatprep.mubr.f32.mxu0 %v1024
    %1090 = vmatmul.mubr.f32.gmra.mxu0 %v1015
    %v1091 = vpop.f32.mrf.mxu0
    %v1092 = vadd.f32 0.0, %v1091
    %v1093 = vpop.f32.mrf.mxu0
    %1094 = vdwg.mxu0
    %v1095 = vmul.f32 %v1092, 0.001953125
    %v1097 = vsel %vm345, %v1095, 0
    %1099 = vmatprep.subr.mxu0 0.0
    %1100 = vmatpush1.msra.mxu0 0.0
    %1101 = vmatprep.subr.mxu0 0.0
    %1102 = vmatpush1.msra.mxu0 0.0
    %1103 = vmatprep.subr.mxu0 0.0
    %1104 = vmatpush1.msra.mxu0 0.0
    %1105 = vmatprep.subr.mxu0 0.0
    %1106 = vmatpush1.msra.mxu0 0.0
    %1107 = vmatprep.subr.mxu0 0.0
    %1108 = vmatpush1.msra.mxu0 0.0
    %1109 = vmatprep.subr.mxu0 0.0
    %1110 = vmatpush1.msra.mxu0 0.0
    %1111 = vmatprep.subr.mxu0 0.0
    %1112 = vmatpush1.msra.mxu0 0.0
    %1113 = vmatprep.subr.mxu0 0.0
    %1114 = vmatpush1.msra.mxu0 0.0
    %1115 = vmatprep.subr.mxu0 0.0
    %1116 = vmatpush1.msra.mxu0 0.0
    %1117 = vmatprep.subr.mxu0 0.0
    %1118 = vmatpush1.msra.mxu0 0.0
    %1119 = vmatprep.subr.mxu0 0.0
    %1120 = vmatpush1.msra.mxu0 0.0
    %1121 = vmatprep.subr.mxu0 0.0
    %1122 = vmatpush1.msra.mxu0 0.0
    %1123 = vmatprep.subr.mxu0 0.0
    %1124 = vmatpush1.msra.mxu0 0.0
    %1125 = vmatprep.subr.mxu0 0.0
    %1126 = vmatpush1.msra.mxu0 0.0
    %1127 = vmatprep.subr.mxu0 %v908
    %1128 = vmatpush1.msra.mxu0 %v907
    %1129 = vmatprep.subr.mxu0 %v906
    %1130 = vmatpush1.msra.mxu0 %v905
    %1131 = vmatprep.subr.mxu0 0.0
    %1132 = vmatpush2.msra.mxu0 0.0
    %1133 = vmatprep.subr.mxu0 0.0
    %1134 = vmatpush2.msra.mxu0 0.0
    %1135 = vmatprep.subr.mxu0 0.0
    %1136 = vmatpush2.msra.mxu0 0.0
    %1137 = vmatprep.subr.mxu0 0.0
    %1138 = vmatpush2.msra.mxu0 0.0
    %1139 = vmatprep.subr.mxu0 0.0
    %1140 = vmatpush2.msra.mxu0 0.0
    %1141 = vmatprep.subr.mxu0 0.0
    %1142 = vmatpush2.msra.mxu0 0.0
    %1143 = vmatprep.subr.mxu0 0.0
    %1144 = vmatpush2.msra.mxu0 0.0
    %1145 = vmatprep.subr.mxu0 0.0
    %1146 = vmatpush2.msra.mxu0 0.0
    %1147 = vmatprep.subr.mxu0 0.0
    %1148 = vmatpush2.msra.mxu0 0.0
    %1149 = vmatprep.subr.mxu0 0.0
    %1150 = vmatpush2.msra.mxu0 0.0
    %1151 = vmatprep.subr.mxu0 0.0
    %1152 = vmatpush2.msra.mxu0 0.0
    %1153 = vmatprep.subr.mxu0 0.0
    %1154 = vmatpush2.msra.mxu0 0.0
    %1155 = vmatprep.subr.mxu0 0.0
    %1156 = vmatpush2.msra.mxu0 0.0
    %1157 = vmatprep.subr.mxu0 0.0
    %1158 = vmatpush2.msra.mxu0 0.0
    %1159 = vmatprep.subr.mxu0 0.0
    %1160 = vmatpush2.msra.mxu0 0.0
    %1161 = vmatprep.subr.mxu0 0.0
    %1162 = vmatpush2.msra.mxu0 0.0
    %1163 = vmatprep.mubr.f32.mxu0 0.0
    %1164 = vmatmul.mubr.f32.gmra.mxu0 %v1097
    %v1165 = vpop.f32.mrf.mxu0
    %v1166 = vadd.f32 1e-05, %v1165
    %v1167 = vpop.f32.mrf.mxu0
    %v1168 = vadd.f32 1e-05, %v1167
    %1169 = vdwg.mxu0
    %v1170 = vrsqrt.pop %v1166
    %v1171 = vrsqrt.pop %v1168
    %v1172 = vlaneseq
    %v1173 = vshrl.u32 %v1172, 7
    %v1174 = vsub.s32 0, %v1173
    %v1175 = vrot.slane %v1170, %v1174
    %v1176 = vlaneseq
    %v1177 = vshrl.u32 %v1176, 7
    %v1178 = vsub.s32 0, %v1177
    %v1179 = vrot.slane %v1171, %v1178
    %v1180 = vmul.f32 %v991, %v1175
    %v1181 = vmul.f32 %v992, %v1179
    %v1182 = vmul.f32 %v993, %v1175
    %v1183 = vmul.f32 %v994, %v1179
    %v1184 = vmul.f32 %v995, %v1175
    %v1185 = vmul.f32 %v996, %v1179
    %v1186 = vmul.f32 %v997, %v1175
    %v1187 = vmul.f32 %v998, %v1179
    %s1188 = scalar_lea.vmem [#allocation2], 2
    %v1189 = vld [vmem:[%s1188] sm:$0x3]
    %v1191 = vlaneseq
    %v1192 = vshrl.u32 %v1191, 7
    %v1193 = vsub.s32 0, %v1192
    %v1194 = vrot.slane %v1189, %v1193
    %v1195 = vlaneseq
    %v1196 = vshrl.u32 %v1195, 7
    %v1197 = vsub.s32 1, %v1196
    %v1198 = vrot.slane %v1189, %v1197
    %v1201 = vmul.f32 %v1180, %v1194
    %v1202 = vmul.f32 %v1181, %v1198
    %v1203 = vmul.f32 %v1182, %v1194
    %v1204 = vmul.f32 %v1183, %v1198
    %v1205 = vmul.f32 %v1184, %v1194
    %v1206 = vmul.f32 %v1185, %v1198
    %v1207 = vmul.f32 %v1186, %v1194
    %v1208 = vmul.f32 %v1187, %v1198
    %s1209 = scalar_lea.vmem [#allocation2], 4
    %v1210 = vld [vmem:[%s1209] sm:$0x3]
    %v1212 = vlaneseq
    %v1213 = vshrl.u32 %v1212, 7
    %v1214 = vsub.s32 0, %v1213
    %v1215 = vrot.slane %v1210, %v1214
    %v1216 = vlaneseq
    %v1217 = vshrl.u32 %v1216, 7
    %v1218 = vsub.s32 1, %v1217
    %v1219 = vrot.slane %v1210, %v1218
    %v1222 = vadd.f32 %v1201, %v1215
    %v1223 = vadd.f32 %v1202, %v1219
    %v1224 = vadd.f32 %v1203, %v1215
    %v1225 = vadd.f32 %v1204, %v1219
    %v1226 = vadd.f32 %v1205, %v1215
    %v1227 = vadd.f32 %v1206, %v1219
    %v1228 = vadd.f32 %v1207, %v1215
    %v1229 = vadd.f32 %v1208, %v1219
    %v1230 = vmax.f32 %v1222, 0.0
    %v1231 = vmax.f32 %v1223, 0.0
    %v1232 = vmax.f32 %v1224, 0.0
    %v1233 = vmax.f32 %v1225, 0.0
    %v1234 = vmax.f32 %v1226, 0.0
    %v1235 = vmax.f32 %v1227, 0.0
    %v1236 = vmax.f32 %v1228, 0.0
    %v1237 = vmax.f32 %v1229, 0.0
    %v1238 = vld [vmem:[#allocation5] sm:$0xff]
    %v1239 = vld [vmem:[#allocation5 + $0x8] sm:$0xff]
    %v1241 = vsel %vm136, %v1238, 0
    %v1244 = vsel %vm136, %v1239, 0
    %1246 = vmatprep.subr.mxu0 0.0
    %1247 = vmatpush1.msra.mxu0 0.0
    %1248 = vmatprep.subr.mxu0 0.0
    %1249 = vmatpush1.msra.mxu0 0.0
    %1250 = vmatprep.subr.mxu0 0.0
    %1251 = vmatpush1.msra.mxu0 0.0
    %1252 = vmatprep.subr.mxu0 0.0
    %1253 = vmatpush1.msra.mxu0 0.0
    %1254 = vmatprep.subr.mxu0 0.0
    %1255 = vmatpush1.msra.mxu0 0.0
    %1256 = vmatprep.subr.mxu0 0.0
    %1257 = vmatpush1.msra.mxu0 0.0
    %1258 = vmatprep.subr.mxu0 0.0
    %1259 = vmatpush1.msra.mxu0 0.0
    %1260 = vmatprep.subr.mxu0 0.0
    %1261 = vmatpush1.msra.mxu0 0.0
    %1262 = vmatprep.subr.mxu0 0.0
    %1263 = vmatpush1.msra.mxu0 0.0
    %1264 = vmatprep.subr.mxu0 0.0
    %1265 = vmatpush1.msra.mxu0 0.0
    %1266 = vmatprep.subr.mxu0 0.0
    %1267 = vmatpush1.msra.mxu0 0.0
    %1268 = vmatprep.subr.mxu0 0.0
    %1269 = vmatpush1.msra.mxu0 0.0
    %1270 = vmatprep.subr.mxu0 %v1237
    %1271 = vmatpush1.msra.mxu0 %v1236
    %1272 = vmatprep.subr.mxu0 %v1235
    %1273 = vmatpush1.msra.mxu0 %v1234
    %1274 = vmatprep.subr.mxu0 %v1233
    %1275 = vmatpush1.msra.mxu0 %v1232
    %1276 = vmatprep.subr.mxu0 %v1231
    %1277 = vmatpush1.msra.mxu0 %v1230
    %1278 = vmatprep.subr.mxu0 0.0
    %1279 = vmatpush2.msra.mxu0 0.0
    %1280 = vmatprep.subr.mxu0 0.0
    %1281 = vmatpush2.msra.mxu0 0.0
    %1282 = vmatprep.subr.mxu0 0.0
    %1283 = vmatpush2.msra.mxu0 0.0
    %1284 = vmatprep.subr.mxu0 0.0
    %1285 = vmatpush2.msra.mxu0 0.0
    %1286 = vmatprep.subr.mxu0 0.0
    %1287 = vmatpush2.msra.mxu0 0.0
    %1288 = vmatprep.subr.mxu0 0.0
    %1289 = vmatpush2.msra.mxu0 0.0
    %1290 = vmatprep.subr.mxu0 0.0
    %1291 = vmatpush2.msra.mxu0 0.0
    %1292 = vmatprep.subr.mxu0 0.0
    %1293 = vmatpush2.msra.mxu0 0.0
    %1294 = vmatprep.subr.mxu0 0.0
    %1295 = vmatpush2.msra.mxu0 0.0
    %1296 = vmatprep.subr.mxu0 0.0
    %1297 = vmatpush2.msra.mxu0 0.0
    %1298 = vmatprep.subr.mxu0 0.0
    %1299 = vmatpush2.msra.mxu0 0.0
    %1300 = vmatprep.subr.mxu0 0.0
    %1301 = vmatpush2.msra.mxu0 0.0
    %1302 = vmatprep.subr.mxu0 0.0
    %1303 = vmatpush2.msra.mxu0 0.0
    %1304 = vmatprep.subr.mxu0 0.0
    %1305 = vmatpush2.msra.mxu0 0.0
    %1306 = vmatprep.subr.mxu0 0.0
    %1307 = vmatpush2.msra.mxu0 0.0
    %1308 = vmatprep.subr.mxu0 0.0
    %1309 = vmatpush2.msra.mxu0 0.0
    %1310 = vmatprep.mubr.f32.mxu0 0.0
    %1311 = vmatmul.mubr.f32.gmra.mxu0 %v1241
    %v1312 = vpop.f32.mrf.mxu0
    %v1313 = vadd.f32 0.0, %v1312
    %v1314 = vpop.f32.mrf.mxu0
    %v1315 = vadd.f32 0.0, %v1314
    %1316 = vmatprep.mubr.f32.mxu0 0.0
    %1317 = vmatmul.mubr.f32.gmra.mxu0 %v1244
    %v1318 = vpop.f32.mrf.mxu0
    %v1319 = vadd.f32 0.0, %v1318
    %v1320 = vpop.f32.mrf.mxu0
    %v1321 = vadd.f32 0.0, %v1320
    %1322 = vdwg.mxu0
    %s1323 = scalar_lea.vmem [#allocation5], 16
    %v1324 = vld [vmem:[%s1323] sm:$0xff]
    %v1325 = vld [vmem:[%s1323 + $0x8] sm:$0xff]
    %v1327 = vsel %vm136, %v1324, 0
    %v1330 = vsel %vm136, %v1325, 0
    %1332 = vmatprep.subr.mxu0 0.0
    %1333 = vmatpush1.msra.mxu0 0.0
    %1334 = vmatprep.subr.mxu0 0.0
    %1335 = vmatpush1.msra.mxu0 0.0
    %1336 = vmatprep.subr.mxu0 0.0
    %1337 = vmatpush1.msra.mxu0 0.0
    %1338 = vmatprep.subr.mxu0 0.0
    %1339 = vmatpush1.msra.mxu0 0.0
    %1340 = vmatprep.subr.mxu0 0.0
    %1341 = vmatpush1.msra.mxu0 0.0
    %1342 = vmatprep.subr.mxu0 0.0
    %1343 = vmatpush1.msra.mxu0 0.0
    %1344 = vmatprep.subr.mxu0 0.0
    %1345 = vmatpush1.msra.mxu0 0.0
    %1346 = vmatprep.subr.mxu0 0.0
    %1347 = vmatpush1.msra.mxu0 0.0
    %1348 = vmatprep.subr.mxu0 0.0
    %1349 = vmatpush1.msra.mxu0 0.0
    %1350 = vmatprep.subr.mxu0 0.0
    %1351 = vmatpush1.msra.mxu0 0.0
    %1352 = vmatprep.subr.mxu0 0.0
    %1353 = vmatpush1.msra.mxu0 0.0
    %1354 = vmatprep.subr.mxu0 0.0
    %1355 = vmatpush1.msra.mxu0 0.0
    %1356 = vmatprep.subr.mxu0 %v1237
    %1357 = vmatpush1.msra.mxu0 %v1236
    %1358 = vmatprep.subr.mxu0 %v1235
    %1359 = vmatpush1.msra.mxu0 %v1234
    %1360 = vmatprep.subr.mxu0 %v1233
    %1361 = vmatpush1.msra.mxu0 %v1232
    %1362 = vmatprep.subr.mxu0 %v1231
    %1363 = vmatpush1.msra.mxu0 %v1230
    %1364 = vmatprep.subr.mxu0 0.0
    %1365 = vmatpush2.msra.mxu0 0.0
    %1366 = vmatprep.subr.mxu0 0.0
    %1367 = vmatpush2.msra.mxu0 0.0
    %1368 = vmatprep.subr.mxu0 0.0
    %1369 = vmatpush2.msra.mxu0 0.0
    %1370 = vmatprep.subr.mxu0 0.0
    %1371 = vmatpush2.msra.mxu0 0.0
    %1372 = vmatprep.subr.mxu0 0.0
    %1373 = vmatpush2.msra.mxu0 0.0
    %1374 = vmatprep.subr.mxu0 0.0
    %1375 = vmatpush2.msra.mxu0 0.0
    %1376 = vmatprep.subr.mxu0 0.0
    %1377 = vmatpush2.msra.mxu0 0.0
    %1378 = vmatprep.subr.mxu0 0.0
    %1379 = vmatpush2.msra.mxu0 0.0
    %1380 = vmatprep.subr.mxu0 0.0
    %1381 = vmatpush2.msra.mxu0 0.0
    %1382 = vmatprep.subr.mxu0 0.0
    %1383 = vmatpush2.msra.mxu0 0.0
    %1384 = vmatprep.subr.mxu0 0.0
    %1385 = vmatpush2.msra.mxu0 0.0
    %1386 = vmatprep.subr.mxu0 0.0
    %1387 = vmatpush2.msra.mxu0 0.0
    %1388 = vmatprep.subr.mxu0 0.0
    %1389 = vmatpush2.msra.mxu0 0.0
    %1390 = vmatprep.subr.mxu0 0.0
    %1391 = vmatpush2.msra.mxu0 0.0
    %1392 = vmatprep.subr.mxu0 0.0
    %1393 = vmatpush2.msra.mxu0 0.0
    %1394 = vmatprep.subr.mxu0 0.0
    %1395 = vmatpush2.msra.mxu0 0.0
    %1396 = vmatprep.mubr.f32.mxu0 0.0
    %1397 = vmatmul.mubr.f32.gmra.mxu0 %v1327
    %v1398 = vpop.f32.mrf.mxu0
    %v1399 = vadd.f32 0.0, %v1398
    %v1400 = vpop.f32.mrf.mxu0
    %v1401 = vadd.f32 0.0, %v1400
    %1402 = vmatprep.mubr.f32.mxu0 0.0
    %1403 = vmatmul.mubr.f32.gmra.mxu0 %v1330
    %v1404 = vpop.f32.mrf.mxu0
    %v1405 = vadd.f32 0.0, %v1404
    %v1406 = vpop.f32.mrf.mxu0
    %v1407 = vadd.f32 0.0, %v1406
    %1408 = vdwg.mxu0
    %v1409 = vmax.f32 %v1313, %v1399
    %v1410 = vmax.f32 %v1315, %v1401
    %v1411 = vmax.f32 %v1319, %v1405
    %v1412 = vmax.f32 %v1321, %v1407
    %v1413 = vld [vmem:[#allocation7] sm:$0xff]
    %v1414 = vld [vmem:[#allocation7 + $0x8] sm:$0xff]
    %v1415 = vld [vmem:[#allocation7 + $0x10] sm:$0xff]
    %v1416 = vld [vmem:[#allocation7 + $0x18] sm:$0xff]
    %v1417 = vld [vmem:[#allocation7 + $0x20] sm:$0xff]
    %v1418 = vld [vmem:[#allocation7 + $0x28] sm:$0xff]
    %v1419 = vld [vmem:[#allocation7 + $0x30] sm:$0xff]
    %v1420 = vld [vmem:[#allocation7 + $0x38] sm:$0xff]
    %v1421 = vld [vmem:[#allocation7 + $0x40] sm:$0xff]
    %v1422 = vld [vmem:[#allocation7 + $0x48] sm:$0xff]
    %v1423 = vld [vmem:[#allocation7 + $0x50] sm:$0xff]
    %v1424 = vld [vmem:[#allocation7 + $0x58] sm:$0xff]
    %v1425 = vld [vmem:[#allocation7 + $0x60] sm:$0xff]
    %v1426 = vld [vmem:[#allocation7 + $0x68] sm:$0xff]
    %v1427 = vld [vmem:[#allocation7 + $0x70] sm:$0xff]
    %v1428 = vld [vmem:[#allocation7 + $0x78] sm:$0xff]
    %v1429 = vld [vmem:[#allocation7 + $0x80] sm:$0xff]
    %v1430 = vld [vmem:[#allocation7 + $0x88] sm:$0xff]
    %v1431 = vld [vmem:[#allocation7 + $0x90] sm:$0xff]
    %v1432 = vld [vmem:[#allocation7 + $0x98] sm:$0xff]
    %v1433 = vld [vmem:[#allocation7 + $0xa0] sm:$0xff]
    %v1434 = vld [vmem:[#allocation7 + $0xa8] sm:$0xff]
    %v1435 = vld [vmem:[#allocation7 + $0xb0] sm:$0xff]
    %v1436 = vld [vmem:[#allocation7 + $0xb8] sm:$0xff]
    %v1437 = vld [vmem:[#allocation7 + $0xc0] sm:$0xff]
    %v1438 = vld [vmem:[#allocation7 + $0xc8] sm:$0xff]
    %v1439 = vld [vmem:[#allocation7 + $0xd0] sm:$0xff]
    %v1440 = vld [vmem:[#allocation7 + $0xd8] sm:$0xff]
    %v1441 = vld [vmem:[#allocation7 + $0xe0] sm:$0xff]
    %v1442 = vld [vmem:[#allocation7 + $0xe8] sm:$0xff]
    %v1443 = vld [vmem:[#allocation7 + $0xf0] sm:$0xff]
    %v1444 = vld [vmem:[#allocation7 + $0xf8] sm:$0xff]
    %1445 = vmatprep.subr.mxu0 0.0
    %1446 = vmatpush1.msra.mxu0 %v1428
    %1447 = vmatprep.subr.mxu0 0.0
    %1448 = vmatpush1.msra.mxu0 %v1427
    %1449 = vmatprep.subr.mxu0 0.0
    %1450 = vmatpush1.msra.mxu0 %v1426
    %1451 = vmatprep.subr.mxu0 0.0
    %1452 = vmatpush1.msra.mxu0 %v1425
    %1453 = vmatprep.subr.mxu0 0.0
    %1454 = vmatpush1.msra.mxu0 %v1424
    %1455 = vmatprep.subr.mxu0 0.0
    %1456 = vmatpush1.msra.mxu0 %v1423
    %1457 = vmatprep.subr.mxu0 0.0
    %1458 = vmatpush1.msra.mxu0 %v1422
    %1459 = vmatprep.subr.mxu0 0.0
    %1460 = vmatpush1.msra.mxu0 %v1421
    %1461 = vmatprep.subr.mxu0 0.0
    %1462 = vmatpush1.msra.mxu0 %v1420
    %1463 = vmatprep.subr.mxu0 0.0
    %1464 = vmatpush1.msra.mxu0 %v1419
    %1465 = vmatprep.subr.mxu0 0.0
    %1466 = vmatpush1.msra.mxu0 %v1418
    %1467 = vmatprep.subr.mxu0 0.0
    %1468 = vmatpush1.msra.mxu0 %v1417
    %1469 = vmatprep.subr.mxu0 0.0
    %1470 = vmatpush1.msra.mxu0 %v1416
    %1471 = vmatprep.subr.mxu0 0.0
    %1472 = vmatpush1.msra.mxu0 %v1415
    %1473 = vmatprep.subr.mxu0 0.0
    %1474 = vmatpush1.msra.mxu0 %v1414
    %1475 = vmatprep.subr.mxu0 0.0
    %1476 = vmatpush1.msra.mxu0 %v1413
    %1477 = vmatprep.subr.mxu0 0.0
    %1478 = vmatpush2.msra.mxu0 %v1444
    %1479 = vmatprep.subr.mxu0 0.0
    %1480 = vmatpush2.msra.mxu0 %v1443
    %1481 = vmatprep.subr.mxu0 0.0
    %1482 = vmatpush2.msra.mxu0 %v1442
    %1483 = vmatprep.subr.mxu0 0.0
    %1484 = vmatpush2.msra.mxu0 %v1441
    %1485 = vmatprep.subr.mxu0 0.0
    %1486 = vmatpush2.msra.mxu0 %v1440
    %1487 = vmatprep.subr.mxu0 0.0
    %1488 = vmatpush2.msra.mxu0 %v1439
    %1489 = vmatprep.subr.mxu0 0.0
    %1490 = vmatpush2.msra.mxu0 %v1438
    %1491 = vmatprep.subr.mxu0 0.0
    %1492 = vmatpush2.msra.mxu0 %v1437
    %1493 = vmatprep.subr.mxu0 0.0
    %1494 = vmatpush2.msra.mxu0 %v1436
    %1495 = vmatprep.subr.mxu0 0.0
    %1496 = vmatpush2.msra.mxu0 %v1435
    %1497 = vmatprep.subr.mxu0 0.0
    %1498 = vmatpush2.msra.mxu0 %v1434
    %1499 = vmatprep.subr.mxu0 0.0
    %1500 = vmatpush2.msra.mxu0 %v1433
    %1501 = vmatprep.subr.mxu0 0.0
    %1502 = vmatpush2.msra.mxu0 %v1432
    %1503 = vmatprep.subr.mxu0 0.0
    %1504 = vmatpush2.msra.mxu0 %v1431
    %1505 = vmatprep.subr.mxu0 0.0
    %1506 = vmatpush2.msra.mxu0 %v1430
    %1507 = vmatprep.subr.mxu0 0.0
    %1508 = vmatpush2.msra.mxu0 %v1429
    %1509 = vmatprep.mubr.f32.mxu0 %v1410
    %1510 = vmatmul.mubr.f32.gmra.mxu0 %v1409
    %v1511 = vpop.f32.mrf.mxu0
    %v1512 = vadd.f32 0.0, %v1511
    %v1513 = vpop.f32.mrf.mxu0
    %1514 = vmatprep.mubr.f32.mxu0 %v1412
    %1515 = vmatmul.mubr.f32.gmra.mxu0 %v1411
    %v1516 = vpop.f32.mrf.mxu0
    %v1517 = vadd.f32 0.0, %v1516
    %v1518 = vpop.f32.mrf.mxu0
    %1519 = vdwg.mxu0
    %s1520 = scalar_lea.vmem [#allocation7], 256
    %v1521 = vld [vmem:[%s1520] sm:$0xff]
    %v1522 = vld [vmem:[%s1520 + $0x8] sm:$0xff]
    %v1523 = vld [vmem:[%s1520 + $0x10] sm:$0xff]
    %v1524 = vld [vmem:[%s1520 + $0x18] sm:$0xff]
    %v1525 = vld [vmem:[%s1520 + $0x20] sm:$0xff]
    %v1526 = vld [vmem:[%s1520 + $0x28] sm:$0xff]
    %v1527 = vld [vmem:[%s1520 + $0x30] sm:$0xff]
    %v1528 = vld [vmem:[%s1520 + $0x38] sm:$0xff]
    %v1529 = vld [vmem:[%s1520 + $0x40] sm:$0xff]
    %v1530 = vld [vmem:[%s1520 + $0x48] sm:$0xff]
    %v1531 = vld [vmem:[%s1520 + $0x50] sm:$0xff]
    %v1532 = vld [vmem:[%s1520 + $0x58] sm:$0xff]
    %v1533 = vld [vmem:[%s1520 + $0x60] sm:$0xff]
    %v1534 = vld [vmem:[%s1520 + $0x68] sm:$0xff]
    %v1535 = vld [vmem:[%s1520 + $0x70] sm:$0xff]
    %v1536 = vld [vmem:[%s1520 + $0x78] sm:$0xff]
    %v1537 = vld [vmem:[%s1520 + $0x80] sm:$0xff]
    %v1538 = vld [vmem:[%s1520 + $0x88] sm:$0xff]
    %v1539 = vld [vmem:[%s1520 + $0x90] sm:$0xff]
    %v1540 = vld [vmem:[%s1520 + $0x98] sm:$0xff]
    %v1541 = vld [vmem:[%s1520 + $0xa0] sm:$0xff]
    %v1542 = vld [vmem:[%s1520 + $0xa8] sm:$0xff]
    %v1543 = vld [vmem:[%s1520 + $0xb0] sm:$0xff]
    %v1544 = vld [vmem:[%s1520 + $0xb8] sm:$0xff]
    %v1545 = vld [vmem:[%s1520 + $0xc0] sm:$0xff]
    %v1546 = vld [vmem:[%s1520 + $0xc8] sm:$0xff]
    %v1547 = vld [vmem:[%s1520 + $0xd0] sm:$0xff]
    %v1548 = vld [vmem:[%s1520 + $0xd8] sm:$0xff]
    %v1549 = vld [vmem:[%s1520 + $0xe0] sm:$0xff]
    %v1550 = vld [vmem:[%s1520 + $0xe8] sm:$0xff]
    %v1551 = vld [vmem:[%s1520 + $0xf0] sm:$0xff]
    %v1552 = vld [vmem:[%s1520 + $0xf8] sm:$0xff]
    %1553 = vmatprep.subr.mxu0 0.0
    %1554 = vmatpush1.msra.mxu0 %v1536
    %1555 = vmatprep.subr.mxu0 0.0
    %1556 = vmatpush1.msra.mxu0 %v1535
    %1557 = vmatprep.subr.mxu0 0.0
    %1558 = vmatpush1.msra.mxu0 %v1534
    %1559 = vmatprep.subr.mxu0 0.0
    %1560 = vmatpush1.msra.mxu0 %v1533
    %1561 = vmatprep.subr.mxu0 0.0
    %1562 = vmatpush1.msra.mxu0 %v1532
    %1563 = vmatprep.subr.mxu0 0.0
    %1564 = vmatpush1.msra.mxu0 %v1531
    %1565 = vmatprep.subr.mxu0 0.0
    %1566 = vmatpush1.msra.mxu0 %v1530
    %1567 = vmatprep.subr.mxu0 0.0
    %1568 = vmatpush1.msra.mxu0 %v1529
    %1569 = vmatprep.subr.mxu0 0.0
    %1570 = vmatpush1.msra.mxu0 %v1528
    %1571 = vmatprep.subr.mxu0 0.0
    %1572 = vmatpush1.msra.mxu0 %v1527
    %1573 = vmatprep.subr.mxu0 0.0
    %1574 = vmatpush1.msra.mxu0 %v1526
    %1575 = vmatprep.subr.mxu0 0.0
    %1576 = vmatpush1.msra.mxu0 %v1525
    %1577 = vmatprep.subr.mxu0 0.0
    %1578 = vmatpush1.msra.mxu0 %v1524
    %1579 = vmatprep.subr.mxu0 0.0
    %1580 = vmatpush1.msra.mxu0 %v1523
    %1581 = vmatprep.subr.mxu0 0.0
    %1582 = vmatpush1.msra.mxu0 %v1522
    %1583 = vmatprep.subr.mxu0 0.0
    %1584 = vmatpush1.msra.mxu0 %v1521
    %1585 = vmatprep.subr.mxu0 0.0
    %1586 = vmatpush2.msra.mxu0 %v1552
    %1587 = vmatprep.subr.mxu0 0.0
    %1588 = vmatpush2.msra.mxu0 %v1551
    %1589 = vmatprep.subr.mxu0 0.0
    %1590 = vmatpush2.msra.mxu0 %v1550
    %1591 = vmatprep.subr.mxu0 0.0
    %1592 = vmatpush2.msra.mxu0 %v1549
    %1593 = vmatprep.subr.mxu0 0.0
    %1594 = vmatpush2.msra.mxu0 %v1548
    %1595 = vmatprep.subr.mxu0 0.0
    %1596 = vmatpush2.msra.mxu0 %v1547
    %1597 = vmatprep.subr.mxu0 0.0
    %1598 = vmatpush2.msra.mxu0 %v1546
    %1599 = vmatprep.subr.mxu0 0.0
    %1600 = vmatpush2.msra.mxu0 %v1545
    %1601 = vmatprep.subr.mxu0 0.0
    %1602 = vmatpush2.msra.mxu0 %v1544
    %1603 = vmatprep.subr.mxu0 0.0
    %1604 = vmatpush2.msra.mxu0 %v1543
    %1605 = vmatprep.subr.mxu0 0.0
    %1606 = vmatpush2.msra.mxu0 %v1542
    %1607 = vmatprep.subr.mxu0 0.0
    %1608 = vmatpush2.msra.mxu0 %v1541
    %1609 = vmatprep.subr.mxu0 0.0
    %1610 = vmatpush2.msra.mxu0 %v1540
    %1611 = vmatprep.subr.mxu0 0.0
    %1612 = vmatpush2.msra.mxu0 %v1539
    %1613 = vmatprep.subr.mxu0 0.0
    %1614 = vmatpush2.msra.mxu0 %v1538
    %1615 = vmatprep.subr.mxu0 0.0
    %1616 = vmatpush2.msra.mxu0 %v1537
    %1617 = vmatprep.mubr.f32.mxu0 %v1410
    %1618 = vmatmul.mubr.f32.gmra.mxu0 %v1409
    %v1619 = vpop.f32.mrf.mxu0
    %v1620 = vadd.f32 0.0, %v1619
    %v1621 = vpop.f32.mrf.mxu0
    %1622 = vmatprep.mubr.f32.mxu0 %v1412
    %1623 = vmatmul.mubr.f32.gmra.mxu0 %v1411
    %v1624 = vpop.f32.mrf.mxu0
    %v1625 = vadd.f32 0.0, %v1624
    %v1626 = vpop.f32.mrf.mxu0
    %1627 = vdwg.mxu0
    %v1628 = vmax.f32 %v1512, %v1620
    %v1629 = vmax.f32 %v1517, %v1625
    %v1630 = vld [vmem:[%s8] sm:$0xff]
    %v1631 = vld [vmem:[%s8 + $0x8] sm:$0xff]
    %v1633 = vsel %vm345, %v1630, 0
    %v1636 = vsel %vm345, %v1631, 0
    %1638 = vmatprep.subr.mxu0 0.0
    %1639 = vmatpush1.msra.mxu0 0.0
    %1640 = vmatprep.subr.mxu0 0.0
    %1641 = vmatpush1.msra.mxu0 0.0
    %1642 = vmatprep.subr.mxu0 0.0
    %1643 = vmatpush1.msra.mxu0 0.0
    %1644 = vmatprep.subr.mxu0 0.0
    %1645 = vmatpush1.msra.mxu0 0.0
    %1646 = vmatprep.subr.mxu0 0.0
    %1647 = vmatpush1.msra.mxu0 0.0
    %1648 = vmatprep.subr.mxu0 0.0
    %1649 = vmatpush1.msra.mxu0 0.0
    %1650 = vmatprep.subr.mxu0 0.0
    %1651 = vmatpush1.msra.mxu0 0.0
    %1652 = vmatprep.subr.mxu0 0.0
    %1653 = vmatpush1.msra.mxu0 0.0
    %1654 = vmatprep.subr.mxu0 0.0
    %1655 = vmatpush1.msra.mxu0 0.0
    %1656 = vmatprep.subr.mxu0 0.0
    %1657 = vmatpush1.msra.mxu0 0.0
    %1658 = vmatprep.subr.mxu0 0.0
    %1659 = vmatpush1.msra.mxu0 0.0
    %1660 = vmatprep.subr.mxu0 0.0
    %1661 = vmatpush1.msra.mxu0 0.0
    %1662 = vmatprep.subr.mxu0 0.0
    %1663 = vmatpush1.msra.mxu0 0.0
    %1664 = vmatprep.subr.mxu0 0.0
    %1665 = vmatpush1.msra.mxu0 0.0
    %1666 = vmatprep.subr.mxu0 0.0
    %1667 = vmatpush1.msra.mxu0 %v1629
    %1668 = vmatprep.subr.mxu0 0.0
    %1669 = vmatpush1.msra.mxu0 %v1628
    %1670 = vmatprep.subr.mxu0 0.0
    %1671 = vmatpush2.msra.mxu0 0.0
    %1672 = vmatprep.subr.mxu0 0.0
    %1673 = vmatpush2.msra.mxu0 0.0
    %1674 = vmatprep.subr.mxu0 0.0
    %1675 = vmatpush2.msra.mxu0 0.0
    %1676 = vmatprep.subr.mxu0 0.0
    %1677 = vmatpush2.msra.mxu0 0.0
    %1678 = vmatprep.subr.mxu0 0.0
    %1679 = vmatpush2.msra.mxu0 0.0
    %1680 = vmatprep.subr.mxu0 0.0
    %1681 = vmatpush2.msra.mxu0 0.0
    %1682 = vmatprep.subr.mxu0 0.0
    %1683 = vmatpush2.msra.mxu0 0.0
    %1684 = vmatprep.subr.mxu0 0.0
    %1685 = vmatpush2.msra.mxu0 0.0
    %1686 = vmatprep.subr.mxu0 0.0
    %1687 = vmatpush2.msra.mxu0 0.0
    %1688 = vmatprep.subr.mxu0 0.0
    %1689 = vmatpush2.msra.mxu0 0.0
    %1690 = vmatprep.subr.mxu0 0.0
    %1691 = vmatpush2.msra.mxu0 0.0
    %1692 = vmatprep.subr.mxu0 0.0
    %1693 = vmatpush2.msra.mxu0 0.0
    %1694 = vmatprep.subr.mxu0 0.0
    %1695 = vmatpush2.msra.mxu0 0.0
    %1696 = vmatprep.subr.mxu0 0.0
    %1697 = vmatpush2.msra.mxu0 0.0
    %1698 = vmatprep.subr.mxu0 0.0
    %1699 = vmatpush2.msra.mxu0 0.0
    %1700 = vmatprep.subr.mxu0 0.0
    %1701 = vmatpush2.msra.mxu0 0.0
    %1702 = vmatprep.mubr.f32.mxu0 0.0
    %1703 = vmatmul.mubr.f32.gmra.mxu0 %v1633
    %v1704 = vpop.f32.mrf.mxu0
    %v1705 = vadd.f32 0.0, %v1704
    %v1706 = vpop.f32.mrf.mxu0
    %1707 = vmatprep.mubr.f32.mxu0 0.0
    %1708 = vmatmul.mubr.f32.gmra.mxu0 %v1636
    %v1709 = vpop.f32.mrf.mxu0
    %v1710 = vadd.f32 0.0, %v1709
    %v1711 = vpop.f32.mrf.mxu0
    %1712 = vdwg.mxu0
    %v1713 = vld [vmem:[%s9] sm:$0xff]
    %v1714 = vld [vmem:[%s9 + $0x8] sm:$0xff]
    %v1715 = vld [vmem:[%s9 + $0x10] sm:$0xff]
    %v1716 = vld [vmem:[%s9 + $0x18] sm:$0xff]
    %v1717 = vld [vmem:[%s9 + $0x20] sm:$0xff]
    %v1718 = vld [vmem:[%s9 + $0x28] sm:$0xff]
    %v1719 = vld [vmem:[%s9 + $0x30] sm:$0xff]
    %v1720 = vld [vmem:[%s9 + $0x38] sm:$0xff]
    %v1721 = vld [vmem:[%s9 + $0x40] sm:$0xff]
    %v1722 = vld [vmem:[%s9 + $0x48] sm:$0xff]
    %v1723 = vld [vmem:[%s9 + $0x50] sm:$0xff]
    %v1724 = vld [vmem:[%s9 + $0x58] sm:$0xff]
    %v1725 = vld [vmem:[%s9 + $0x60] sm:$0xff]
    %v1726 = vld [vmem:[%s9 + $0x68] sm:$0xff]
    %v1727 = vld [vmem:[%s9 + $0x70] sm:$0xff]
    %v1728 = vld [vmem:[%s9 + $0x78] sm:$0xff]
    %v1729 = vld [vmem:[%s9 + $0x80] sm:$0xff]
    %v1730 = vld [vmem:[%s9 + $0x88] sm:$0xff]
    %v1731 = vld [vmem:[%s9 + $0x90] sm:$0xff]
    %v1732 = vld [vmem:[%s9 + $0x98] sm:$0xff]
    %v1733 = vld [vmem:[%s9 + $0xa0] sm:$0xff]
    %v1734 = vld [vmem:[%s9 + $0xa8] sm:$0xff]
    %v1735 = vld [vmem:[%s9 + $0xb0] sm:$0xff]
    %v1736 = vld [vmem:[%s9 + $0xb8] sm:$0xff]
    %v1737 = vld [vmem:[%s9 + $0xc0] sm:$0xff]
    %v1738 = vld [vmem:[%s9 + $0xc8] sm:$0xff]
    %v1739 = vld [vmem:[%s9 + $0xd0] sm:$0xff]
    %v1740 = vld [vmem:[%s9 + $0xd8] sm:$0xff]
    %v1741 = vld [vmem:[%s9 + $0xe0] sm:$0xff]
    %v1742 = vld [vmem:[%s9 + $0xe8] sm:$0xff]
    %v1743 = vld [vmem:[%s9 + $0xf0] sm:$0xff]
    %v1744 = vld [vmem:[%s9 + $0xf8] sm:$0xff]
    %s1745 = scalar_lea.vmem %s8, 16
    %v1746 = vld [vmem:[%s1745] sm:$0xff]
    %v1747 = vld [vmem:[%s1745 + $0x8] sm:$0xff]
    %v1749 = vsel %vm345, %v1746, 0
    %v1752 = vsel %vm345, %v1747, 0
    %1754 = vmatprep.subr.mxu0 0.0
    %1755 = vmatpush1.msra.mxu0 0.0
    %1756 = vmatprep.subr.mxu0 0.0
    %1757 = vmatpush1.msra.mxu0 0.0
    %1758 = vmatprep.subr.mxu0 0.0
    %1759 = vmatpush1.msra.mxu0 0.0
    %1760 = vmatprep.subr.mxu0 0.0
    %1761 = vmatpush1.msra.mxu0 0.0
    %1762 = vmatprep.subr.mxu0 0.0
    %1763 = vmatpush1.msra.mxu0 0.0
    %1764 = vmatprep.subr.mxu0 0.0
    %1765 = vmatpush1.msra.mxu0 0.0
    %1766 = vmatprep.subr.mxu0 0.0
    %1767 = vmatpush1.msra.mxu0 0.0
    %1768 = vmatprep.subr.mxu0 0.0
    %1769 = vmatpush1.msra.mxu0 0.0
    %1770 = vmatprep.subr.mxu0 0.0
    %1771 = vmatpush1.msra.mxu0 0.0
    %1772 = vmatprep.subr.mxu0 0.0
    %1773 = vmatpush1.msra.mxu0 0.0
    %1774 = vmatprep.subr.mxu0 0.0
    %1775 = vmatpush1.msra.mxu0 0.0
    %1776 = vmatprep.subr.mxu0 0.0
    %1777 = vmatpush1.msra.mxu0 0.0
    %1778 = vmatprep.subr.mxu0 0.0
    %1779 = vmatpush1.msra.mxu0 0.0
    %1780 = vmatprep.subr.mxu0 0.0
    %1781 = vmatpush1.msra.mxu0 0.0
    %1782 = vmatprep.subr.mxu0 0.0
    %1783 = vmatpush1.msra.mxu0 %v1629
    %1784 = vmatprep.subr.mxu0 0.0
    %1785 = vmatpush1.msra.mxu0 %v1628
    %1786 = vmatprep.subr.mxu0 0.0
    %1787 = vmatpush2.msra.mxu0 0.0
    %1788 = vmatprep.subr.mxu0 0.0
    %1789 = vmatpush2.msra.mxu0 0.0
    %1790 = vmatprep.subr.mxu0 0.0
    %1791 = vmatpush2.msra.mxu0 0.0
    %1792 = vmatprep.subr.mxu0 0.0
    %1793 = vmatpush2.msra.mxu0 0.0
    %1794 = vmatprep.subr.mxu0 0.0
    %1795 = vmatpush2.msra.mxu0 0.0
    %1796 = vmatprep.subr.mxu0 0.0
    %1797 = vmatpush2.msra.mxu0 0.0
    %1798 = vmatprep.subr.mxu0 0.0
    %1799 = vmatpush2.msra.mxu0 0.0
    %1800 = vmatprep.subr.mxu0 0.0
    %1801 = vmatpush2.msra.mxu0 0.0
    %1802 = vmatprep.subr.mxu0 0.0
    %1803 = vmatpush2.msra.mxu0 0.0
    %1804 = vmatprep.subr.mxu0 0.0
    %1805 = vmatpush2.msra.mxu0 0.0
    %1806 = vmatprep.subr.mxu0 0.0
    %1807 = vmatpush2.msra.mxu0 0.0
    %1808 = vmatprep.subr.mxu0 0.0
    %1809 = vmatpush2.msra.mxu0 0.0
    %1810 = vmatprep.subr.mxu0 0.0
    %1811 = vmatpush2.msra.mxu0 0.0
    %1812 = vmatprep.subr.mxu0 0.0
    %1813 = vmatpush2.msra.mxu0 0.0
    %1814 = vmatprep.subr.mxu0 0.0
    %1815 = vmatpush2.msra.mxu0 0.0
    %1816 = vmatprep.subr.mxu0 0.0
    %1817 = vmatpush2.msra.mxu0 0.0
    %1818 = vmatprep.mubr.f32.mxu0 0.0
    %1819 = vmatmul.mubr.f32.gmra.mxu0 %v1749
    %v1820 = vpop.f32.mrf.mxu0
    %v1821 = vadd.f32 0.0, %v1820
    %v1822 = vpop.f32.mrf.mxu0
    %1823 = vmatprep.mubr.f32.mxu0 0.0
    %1824 = vmatmul.mubr.f32.gmra.mxu0 %v1752
    %v1825 = vpop.f32.mrf.mxu0
    %v1826 = vadd.f32 0.0, %v1825
    %v1827 = vpop.f32.mrf.mxu0
    %1828 = vdwg.mxu0
    %s1829 = scalar_lea.vmem %s9, 256
    %v1830 = vld [vmem:[%s1829] sm:$0xff]
    %v1831 = vld [vmem:[%s1829 + $0x8] sm:$0xff]
    %v1832 = vld [vmem:[%s1829 + $0x10] sm:$0xff]
    %v1833 = vld [vmem:[%s1829 + $0x18] sm:$0xff]
    %v1834 = vld [vmem:[%s1829 + $0x20] sm:$0xff]
    %v1835 = vld [vmem:[%s1829 + $0x28] sm:$0xff]
    %v1836 = vld [vmem:[%s1829 + $0x30] sm:$0xff]
    %v1837 = vld [vmem:[%s1829 + $0x38] sm:$0xff]
    %v1838 = vld [vmem:[%s1829 + $0x40] sm:$0xff]
    %v1839 = vld [vmem:[%s1829 + $0x48] sm:$0xff]
    %v1840 = vld [vmem:[%s1829 + $0x50] sm:$0xff]
    %v1841 = vld [vmem:[%s1829 + $0x58] sm:$0xff]
    %v1842 = vld [vmem:[%s1829 + $0x60] sm:$0xff]
    %v1843 = vld [vmem:[%s1829 + $0x68] sm:$0xff]
    %v1844 = vld [vmem:[%s1829 + $0x70] sm:$0xff]
    %v1845 = vld [vmem:[%s1829 + $0x78] sm:$0xff]
    %v1846 = vld [vmem:[%s1829 + $0x80] sm:$0xff]
    %v1847 = vld [vmem:[%s1829 + $0x88] sm:$0xff]
    %v1848 = vld [vmem:[%s1829 + $0x90] sm:$0xff]
    %v1849 = vld [vmem:[%s1829 + $0x98] sm:$0xff]
    %v1850 = vld [vmem:[%s1829 + $0xa0] sm:$0xff]
    %v1851 = vld [vmem:[%s1829 + $0xa8] sm:$0xff]
    %v1852 = vld [vmem:[%s1829 + $0xb0] sm:$0xff]
    %v1853 = vld [vmem:[%s1829 + $0xb8] sm:$0xff]
    %v1854 = vld [vmem:[%s1829 + $0xc0] sm:$0xff]
    %v1855 = vld [vmem:[%s1829 + $0xc8] sm:$0xff]
    %v1856 = vld [vmem:[%s1829 + $0xd0] sm:$0xff]
    %v1857 = vld [vmem:[%s1829 + $0xd8] sm:$0xff]
    %v1858 = vld [vmem:[%s1829 + $0xe0] sm:$0xff]
    %v1859 = vld [vmem:[%s1829 + $0xe8] sm:$0xff]
    %v1860 = vld [vmem:[%s1829 + $0xf0] sm:$0xff]
    %v1861 = vld [vmem:[%s1829 + $0xf8] sm:$0xff]
    %1862 = vmatprep.subr.mxu0 %v1861
    %1863 = vmatpush1.msra.mxu0 %v1860
    %1864 = vmatprep.subr.mxu0 %v1859
    %1865 = vmatpush1.msra.mxu0 %v1858
    %1866 = vmatprep.subr.mxu0 %v1857
    %1867 = vmatpush1.msra.mxu0 %v1856
    %1868 = vmatprep.subr.mxu0 %v1855
    %1869 = vmatpush1.msra.mxu0 %v1854
    %1870 = vmatprep.subr.mxu0 %v1853
    %1871 = vmatpush1.msra.mxu0 %v1852
    %1872 = vmatprep.subr.mxu0 %v1851
    %1873 = vmatpush1.msra.mxu0 %v1850
    %1874 = vmatprep.subr.mxu0 %v1849
    %1875 = vmatpush1.msra.mxu0 %v1848
    %1876 = vmatprep.subr.mxu0 %v1847
    %1877 = vmatpush1.msra.mxu0 %v1846
    %1878 = vmatprep.subr.mxu0 %v1845
    %1879 = vmatpush1.msra.mxu0 %v1844
    %1880 = vmatprep.subr.mxu0 %v1843
    %1881 = vmatpush1.msra.mxu0 %v1842
    %1882 = vmatprep.subr.mxu0 %v1841
    %1883 = vmatpush1.msra.mxu0 %v1840
    %1884 = vmatprep.subr.mxu0 %v1839
    %1885 = vmatpush1.msra.mxu0 %v1838
    %1886 = vmatprep.subr.mxu0 %v1837
    %1887 = vmatpush1.msra.mxu0 %v1836
    %1888 = vmatprep.subr.mxu0 %v1835
    %1889 = vmatpush1.msra.mxu0 %v1834
    %1890 = vmatprep.subr.mxu0 %v1833
    %1891 = vmatpush1.msra.mxu0 %v1832
    %1892 = vmatprep.subr.mxu0 %v1831
    %1893 = vmatpush1.msra.mxu0 %v1830
    %1894 = vmatprep.subr.mxu0 0.0
    %1895 = vmatpush2.msra.mxu0 0.0
    %1896 = vmatprep.subr.mxu0 0.0
    %1897 = vmatpush2.msra.mxu0 0.0
    %1898 = vmatprep.subr.mxu0 0.0
    %1899 = vmatpush2.msra.mxu0 0.0
    %1900 = vmatprep.subr.mxu0 0.0
    %1901 = vmatpush2.msra.mxu0 0.0
    %1902 = vmatprep.subr.mxu0 0.0
    %1903 = vmatpush2.msra.mxu0 0.0
    %1904 = vmatprep.subr.mxu0 0.0
    %1905 = vmatpush2.msra.mxu0 0.0
    %1906 = vmatprep.subr.mxu0 0.0
    %1907 = vmatpush2.msra.mxu0 0.0
    %1908 = vmatprep.subr.mxu0 0.0
    %1909 = vmatpush2.msra.mxu0 0.0
    %1910 = vmatprep.subr.mxu0 0.0
    %1911 = vmatpush2.msra.mxu0 0.0
    %1912 = vmatprep.subr.mxu0 0.0
    %1913 = vmatpush2.msra.mxu0 0.0
    %1914 = vmatprep.subr.mxu0 0.0
    %1915 = vmatpush2.msra.mxu0 0.0
    %1916 = vmatprep.subr.mxu0 0.0
    %1917 = vmatpush2.msra.mxu0 0.0
    %1918 = vmatprep.subr.mxu0 0.0
    %1919 = vmatpush2.msra.mxu0 0.0
    %1920 = vmatprep.subr.mxu0 0.0
    %1921 = vmatpush2.msra.mxu0 0.0
    %1922 = vmatprep.subr.mxu0 0.0
    %1923 = vmatpush2.msra.mxu0 0.0
    %1924 = vmatprep.subr.mxu0 0.0
    %1925 = vmatpush2.msra.mxu0 0.0
    %1926 = vmatprep.mubr.f32.mxu0 0.0
    %1927 = vmatmul.mubr.f32.gmra.mxu0 %v1821
    %v1928 = vpop.f32.mrf.mxu0
    %v1929 = vadd.f32 0.0, %v1928
    %v1930 = vpop.f32.mrf.mxu0
    %v1931 = vadd.f32 0.0, %v1930
    %1932 = vmatprep.mubr.f32.mxu0 0.0
    %1933 = vmatmul.mubr.f32.gmra.mxu0 %v1826
    %v1934 = vpop.f32.mrf.mxu0
    %v1935 = vadd.f32 0.0, %v1934
    %v1936 = vpop.f32.mrf.mxu0
    %v1937 = vadd.f32 0.0, %v1936
    %1938 = vdwg.mxu0
    %1939 = vmatprep.subr.mxu0 %v1744
    %1940 = vmatpush1.msra.mxu0 %v1743
    %1941 = vmatprep.subr.mxu0 %v1742
    %1942 = vmatpush1.msra.mxu0 %v1741
    %1943 = vmatprep.subr.mxu0 %v1740
    %1944 = vmatpush1.msra.mxu0 %v1739
    %1945 = vmatprep.subr.mxu0 %v1738
    %1946 = vmatpush1.msra.mxu0 %v1737
    %1947 = vmatprep.subr.mxu0 %v1736
    %1948 = vmatpush1.msra.mxu0 %v1735
    %1949 = vmatprep.subr.mxu0 %v1734
    %1950 = vmatpush1.msra.mxu0 %v1733
    %1951 = vmatprep.subr.mxu0 %v1732
    %1952 = vmatpush1.msra.mxu0 %v1731
    %1953 = vmatprep.subr.mxu0 %v1730
    %1954 = vmatpush1.msra.mxu0 %v1729
    %1955 = vmatprep.subr.mxu0 %v1728
    %1956 = vmatpush1.msra.mxu0 %v1727
    %1957 = vmatprep.subr.mxu0 %v1726
    %1958 = vmatpush1.msra.mxu0 %v1725
    %1959 = vmatprep.subr.mxu0 %v1724
    %1960 = vmatpush1.msra.mxu0 %v1723
    %1961 = vmatprep.subr.mxu0 %v1722
    %1962 = vmatpush1.msra.mxu0 %v1721
    %1963 = vmatprep.subr.mxu0 %v1720
    %1964 = vmatpush1.msra.mxu0 %v1719
    %1965 = vmatprep.subr.mxu0 %v1718
    %1966 = vmatpush1.msra.mxu0 %v1717
    %1967 = vmatprep.subr.mxu0 %v1716
    %1968 = vmatpush1.msra.mxu0 %v1715
    %1969 = vmatprep.subr.mxu0 %v1714
    %1970 = vmatpush1.msra.mxu0 %v1713
    %1971 = vmatprep.subr.mxu0 0.0
    %1972 = vmatpush2.msra.mxu0 0.0
    %1973 = vmatprep.subr.mxu0 0.0
    %1974 = vmatpush2.msra.mxu0 0.0
    %1975 = vmatprep.subr.mxu0 0.0
    %1976 = vmatpush2.msra.mxu0 0.0
    %1977 = vmatprep.subr.mxu0 0.0
    %1978 = vmatpush2.msra.mxu0 0.0
    %1979 = vmatprep.subr.mxu0 0.0
    %1980 = vmatpush2.msra.mxu0 0.0
    %1981 = vmatprep.subr.mxu0 0.0
    %1982 = vmatpush2.msra.mxu0 0.0
    %1983 = vmatprep.subr.mxu0 0.0
    %1984 = vmatpush2.msra.mxu0 0.0
    %1985 = vmatprep.subr.mxu0 0.0
    %1986 = vmatpush2.msra.mxu0 0.0
    %1987 = vmatprep.subr.mxu0 0.0
    %1988 = vmatpush2.msra.mxu0 0.0
    %1989 = vmatprep.subr.mxu0 0.0
    %1990 = vmatpush2.msra.mxu0 0.0
    %1991 = vmatprep.subr.mxu0 0.0
    %1992 = vmatpush2.msra.mxu0 0.0
    %1993 = vmatprep.subr.mxu0 0.0
    %1994 = vmatpush2.msra.mxu0 0.0
    %1995 = vmatprep.subr.mxu0 0.0
    %1996 = vmatpush2.msra.mxu0 0.0
    %1997 = vmatprep.subr.mxu0 0.0
    %1998 = vmatpush2.msra.mxu0 0.0
    %1999 = vmatprep.subr.mxu0 0.0
    %2000 = vmatpush2.msra.mxu0 0.0
    %2001 = vmatprep.subr.mxu0 0.0
    %2002 = vmatpush2.msra.mxu0 0.0
    %2003 = vmatprep.mubr.f32.mxu0 0.0
    %2004 = vmatmul.mubr.f32.gmra.mxu0 %v1705
    %v2005 = vpop.f32.mrf.mxu0
    %v2006 = vadd.f32 %v1929, %v2005
    %v2007 = vpop.f32.mrf.mxu0
    %v2008 = vadd.f32 %v1931, %v2007
    %2009 = vmatprep.mubr.f32.mxu0 0.0
    %2010 = vmatmul.mubr.f32.gmra.mxu0 %v1710
    %v2011 = vpop.f32.mrf.mxu0
    %v2012 = vadd.f32 %v1935, %v2011
    %v2013 = vpop.f32.mrf.mxu0
    %v2014 = vadd.f32 %v1937, %v2013
    %2015 = vdwg.mxu0
    %s2016 = scalar_lea.vmem %s8, 32
    %v2017 = vld [vmem:[%s2016] sm:$0xff]
    %v2018 = vld [vmem:[%s2016 + $0x8] sm:$0xff]
    %v2020 = vsel %vm345, %v2017, 0
    %v2023 = vsel %vm345, %v2018, 0
    %2025 = vmatprep.subr.mxu0 0.0
    %2026 = vmatpush1.msra.mxu0 0.0
    %2027 = vmatprep.subr.mxu0 0.0
    %2028 = vmatpush1.msra.mxu0 0.0
    %2029 = vmatprep.subr.mxu0 0.0
    %2030 = vmatpush1.msra.mxu0 0.0
    %2031 = vmatprep.subr.mxu0 0.0
    %2032 = vmatpush1.msra.mxu0 0.0
    %2033 = vmatprep.subr.mxu0 0.0
    %2034 = vmatpush1.msra.mxu0 0.0
    %2035 = vmatprep.subr.mxu0 0.0
    %2036 = vmatpush1.msra.mxu0 0.0
    %2037 = vmatprep.subr.mxu0 0.0
    %2038 = vmatpush1.msra.mxu0 0.0
    %2039 = vmatprep.subr.mxu0 0.0
    %2040 = vmatpush1.msra.mxu0 0.0
    %2041 = vmatprep.subr.mxu0 0.0
    %2042 = vmatpush1.msra.mxu0 0.0
    %2043 = vmatprep.subr.mxu0 0.0
    %2044 = vmatpush1.msra.mxu0 0.0
    %2045 = vmatprep.subr.mxu0 0.0
    %2046 = vmatpush1.msra.mxu0 0.0
    %2047 = vmatprep.subr.mxu0 0.0
    %2048 = vmatpush1.msra.mxu0 0.0
    %2049 = vmatprep.subr.mxu0 0.0
    %2050 = vmatpush1.msra.mxu0 0.0
    %2051 = vmatprep.subr.mxu0 0.0
    %2052 = vmatpush1.msra.mxu0 0.0
    %2053 = vmatprep.subr.mxu0 0.0
    %2054 = vmatpush1.msra.mxu0 %v1629
    %2055 = vmatprep.subr.mxu0 0.0
    %2056 = vmatpush1.msra.mxu0 %v1628
    %2057 = vmatprep.subr.mxu0 0.0
    %2058 = vmatpush2.msra.mxu0 0.0
    %2059 = vmatprep.subr.mxu0 0.0
    %2060 = vmatpush2.msra.mxu0 0.0
    %2061 = vmatprep.subr.mxu0 0.0
    %2062 = vmatpush2.msra.mxu0 0.0
    %2063 = vmatprep.subr.mxu0 0.0
    %2064 = vmatpush2.msra.mxu0 0.0
    %2065 = vmatprep.subr.mxu0 0.0
    %2066 = vmatpush2.msra.mxu0 0.0
    %2067 = vmatprep.subr.mxu0 0.0
    %2068 = vmatpush2.msra.mxu0 0.0
    %2069 = vmatprep.subr.mxu0 0.0
    %2070 = vmatpush2.msra.mxu0 0.0
    %2071 = vmatprep.subr.mxu0 0.0
    %2072 = vmatpush2.msra.mxu0 0.0
    %2073 = vmatprep.subr.mxu0 0.0
    %2074 = vmatpush2.msra.mxu0 0.0
    %2075 = vmatprep.subr.mxu0 0.0
    %2076 = vmatpush2.msra.mxu0 0.0
    %2077 = vmatprep.subr.mxu0 0.0
    %2078 = vmatpush2.msra.mxu0 0.0
    %2079 = vmatprep.subr.mxu0 0.0
    %2080 = vmatpush2.msra.mxu0 0.0
    %2081 = vmatprep.subr.mxu0 0.0
    %2082 = vmatpush2.msra.mxu0 0.0
    %2083 = vmatprep.subr.mxu0 0.0
    %2084 = vmatpush2.msra.mxu0 0.0
    %2085 = vmatprep.subr.mxu0 0.0
    %2086 = vmatpush2.msra.mxu0 0.0
    %2087 = vmatprep.subr.mxu0 0.0
    %2088 = vmatpush2.msra.mxu0 0.0
    %2089 = vmatprep.mubr.f32.mxu0 0.0
    %2090 = vmatmul.mubr.f32.gmra.mxu0 %v2020
    %v2091 = vpop.f32.mrf.mxu0
    %v2092 = vadd.f32 0.0, %v2091
    %v2093 = vpop.f32.mrf.mxu0
    %2094 = vmatprep.mubr.f32.mxu0 0.0
    %2095 = vmatmul.mubr.f32.gmra.mxu0 %v2023
    %v2096 = vpop.f32.mrf.mxu0
    %v2097 = vadd.f32 0.0, %v2096
    %v2098 = vpop.f32.mrf.mxu0
    %2099 = vdwg.mxu0
    %s2100 = scalar_lea.vmem %s9, 512
    %v2101 = vld [vmem:[%s2100] sm:$0xff]
    %v2102 = vld [vmem:[%s2100 + $0x8] sm:$0xff]
    %v2103 = vld [vmem:[%s2100 + $0x10] sm:$0xff]
    %v2104 = vld [vmem:[%s2100 + $0x18] sm:$0xff]
    %v2105 = vld [vmem:[%s2100 + $0x20] sm:$0xff]
    %v2106 = vld [vmem:[%s2100 + $0x28] sm:$0xff]
    %v2107 = vld [vmem:[%s2100 + $0x30] sm:$0xff]
    %v2108 = vld [vmem:[%s2100 + $0x38] sm:$0xff]
    %v2109 = vld [vmem:[%s2100 + $0x40] sm:$0xff]
    %v2110 = vld [vmem:[%s2100 + $0x48] sm:$0xff]
    %v2111 = vld [vmem:[%s2100 + $0x50] sm:$0xff]
    %v2112 = vld [vmem:[%s2100 + $0x58] sm:$0xff]
    %v2113 = vld [vmem:[%s2100 + $0x60] sm:$0xff]
    %v2114 = vld [vmem:[%s2100 + $0x68] sm:$0xff]
    %v2115 = vld [vmem:[%s2100 + $0x70] sm:$0xff]
    %v2116 = vld [vmem:[%s2100 + $0x78] sm:$0xff]
    %v2117 = vld [vmem:[%s2100 + $0x80] sm:$0xff]
    %v2118 = vld [vmem:[%s2100 + $0x88] sm:$0xff]
    %v2119 = vld [vmem:[%s2100 + $0x90] sm:$0xff]
    %v2120 = vld [vmem:[%s2100 + $0x98] sm:$0xff]
    %v2121 = vld [vmem:[%s2100 + $0xa0] sm:$0xff]
    %v2122 = vld [vmem:[%s2100 + $0xa8] sm:$0xff]
    %v2123 = vld [vmem:[%s2100 + $0xb0] sm:$0xff]
    %v2124 = vld [vmem:[%s2100 + $0xb8] sm:$0xff]
    %v2125 = vld [vmem:[%s2100 + $0xc0] sm:$0xff]
    %v2126 = vld [vmem:[%s2100 + $0xc8] sm:$0xff]
    %v2127 = vld [vmem:[%s2100 + $0xd0] sm:$0xff]
    %v2128 = vld [vmem:[%s2100 + $0xd8] sm:$0xff]
    %v2129 = vld [vmem:[%s2100 + $0xe0] sm:$0xff]
    %v2130 = vld [vmem:[%s2100 + $0xe8] sm:$0xff]
    %v2131 = vld [vmem:[%s2100 + $0xf0] sm:$0xff]
    %v2132 = vld [vmem:[%s2100 + $0xf8] sm:$0xff]
    %2133 = vmatprep.subr.mxu0 %v2132
    %2134 = vmatpush1.msra.mxu0 %v2131
    %2135 = vmatprep.subr.mxu0 %v2130
    %2136 = vmatpush1.msra.mxu0 %v2129
    %2137 = vmatprep.subr.mxu0 %v2128
    %2138 = vmatpush1.msra.mxu0 %v2127
    %2139 = vmatprep.subr.mxu0 %v2126
    %2140 = vmatpush1.msra.mxu0 %v2125
    %2141 = vmatprep.subr.mxu0 %v2124
    %2142 = vmatpush1.msra.mxu0 %v2123
    %2143 = vmatprep.subr.mxu0 %v2122
    %2144 = vmatpush1.msra.mxu0 %v2121
    %2145 = vmatprep.subr.mxu0 %v2120
    %2146 = vmatpush1.msra.mxu0 %v2119
    %2147 = vmatprep.subr.mxu0 %v2118
    %2148 = vmatpush1.msra.mxu0 %v2117
    %2149 = vmatprep.subr.mxu0 %v2116
    %2150 = vmatpush1.msra.mxu0 %v2115
    %2151 = vmatprep.subr.mxu0 %v2114
    %2152 = vmatpush1.msra.mxu0 %v2113
    %2153 = vmatprep.subr.mxu0 %v2112
    %2154 = vmatpush1.msra.mxu0 %v2111
    %2155 = vmatprep.subr.mxu0 %v2110
    %2156 = vmatpush1.msra.mxu0 %v2109
    %2157 = vmatprep.subr.mxu0 %v2108
    %2158 = vmatpush1.msra.mxu0 %v2107
    %2159 = vmatprep.subr.mxu0 %v2106
    %2160 = vmatpush1.msra.mxu0 %v2105
    %2161 = vmatprep.subr.mxu0 %v2104
    %2162 = vmatpush1.msra.mxu0 %v2103
    %2163 = vmatprep.subr.mxu0 %v2102
    %2164 = vmatpush1.msra.mxu0 %v2101
    %2165 = vmatprep.subr.mxu0 0.0
    %2166 = vmatpush2.msra.mxu0 0.0
    %2167 = vmatprep.subr.mxu0 0.0
    %2168 = vmatpush2.msra.mxu0 0.0
    %2169 = vmatprep.subr.mxu0 0.0
    %2170 = vmatpush2.msra.mxu0 0.0
    %2171 = vmatprep.subr.mxu0 0.0
    %2172 = vmatpush2.msra.mxu0 0.0
    %2173 = vmatprep.subr.mxu0 0.0
    %2174 = vmatpush2.msra.mxu0 0.0
    %2175 = vmatprep.subr.mxu0 0.0
    %2176 = vmatpush2.msra.mxu0 0.0
    %2177 = vmatprep.subr.mxu0 0.0
    %2178 = vmatpush2.msra.mxu0 0.0
    %2179 = vmatprep.subr.mxu0 0.0
    %2180 = vmatpush2.msra.mxu0 0.0
    %2181 = vmatprep.subr.mxu0 0.0
    %2182 = vmatpush2.msra.mxu0 0.0
    %2183 = vmatprep.subr.mxu0 0.0
    %2184 = vmatpush2.msra.mxu0 0.0
    %2185 = vmatprep.subr.mxu0 0.0
    %2186 = vmatpush2.msra.mxu0 0.0
    %2187 = vmatprep.subr.mxu0 0.0
    %2188 = vmatpush2.msra.mxu0 0.0
    %2189 = vmatprep.subr.mxu0 0.0
    %2190 = vmatpush2.msra.mxu0 0.0
    %2191 = vmatprep.subr.mxu0 0.0
    %2192 = vmatpush2.msra.mxu0 0.0
    %2193 = vmatprep.subr.mxu0 0.0
    %2194 = vmatpush2.msra.mxu0 0.0
    %2195 = vmatprep.subr.mxu0 0.0
    %2196 = vmatpush2.msra.mxu0 0.0
    %2197 = vmatprep.mubr.f32.mxu0 0.0
    %2198 = vmatmul.mubr.f32.gmra.mxu0 %v2092
    %v2199 = vpop.f32.mrf.mxu0
    %v2200 = vadd.f32 0.0, %v2199
    %v2201 = vpop.f32.mrf.mxu0
    %v2202 = vadd.f32 0.0, %v2201
    %2203 = vmatprep.mubr.f32.mxu0 0.0
    %2204 = vmatmul.mubr.f32.gmra.mxu0 %v2097
    %v2205 = vpop.f32.mrf.mxu0
    %v2206 = vadd.f32 0.0, %v2205
    %v2207 = vpop.f32.mrf.mxu0
    %v2208 = vadd.f32 0.0, %v2207
    %2209 = vdwg.mxu0
    %v2210 = vadd.f32 %v2006, %v2200
    %v2211 = vadd.f32 %v2008, %v2202
    %v2212 = vadd.f32 %v2012, %v2206
    %v2213 = vadd.f32 %v2014, %v2208
    %v2214 = vld [vmem:[#allocation8] sm:$0x3]
    %v2216 = vlaneseq
    %v2217 = vshrl.u32 %v2216, 7
    %v2218 = vsub.s32 0, %v2217
    %v2219 = vrot.slane %v2214, %v2218
    %v2220 = vlaneseq
    %v2221 = vshrl.u32 %v2220, 7
    %v2222 = vsub.s32 1, %v2221
    %v2223 = vrot.slane %v2214, %v2222
    %v2226 = vadd.f32 %v2210, %v2219
    %v2227 = vadd.f32 %v2211, %v2223
    %v2228 = vadd.f32 %v2212, %v2219
    %v2229 = vadd.f32 %v2213, %v2223
    %v2230 = vadd.f32 %v2226, %v2228
    %v2231 = vrot.slane %v2230, 4
    %v2232 = vadd.f32 %v2230, %v2231
    %v2233 = vrot.slane %v2232, 2
    %v2234 = vadd.f32 %v2232, %v2233
    %v2235 = vrot.slane %v2234, 1
    %v2236 = vadd.f32 %v2234, %v2235
    %v2237 = vadd.f32 %v2227, %v2229
    %v2238 = vrot.slane %v2237, 4
    %v2239 = vadd.f32 %v2237, %v2238
    %v2240 = vrot.slane %v2239, 2
    %v2241 = vadd.f32 %v2239, %v2240
    %v2242 = vrot.slane %v2241, 1
    %v2243 = vadd.f32 %v2241, %v2242
    %v2244 = vld [vmem:[%s11] sm:$0xff]
    %v2245 = vld [vmem:[%s11 + $0x8] sm:$0xff]
    %v2246 = vld [vmem:[%s11 + $0x10] sm:$0xff]
    %v2247 = vld [vmem:[%s11 + $0x18] sm:$0xff]
    %v2248 = vld [vmem:[%s11 + $0x20] sm:$0xff]
    %v2249 = vld [vmem:[%s11 + $0x28] sm:$0xff]
    %v2250 = vld [vmem:[%s11 + $0x30] sm:$0xff]
    %v2251 = vld [vmem:[%s11 + $0x38] sm:$0xff]
    %v2252 = vld [vmem:[%s11 + $0x40] sm:$0xff]
    %v2253 = vld [vmem:[%s11 + $0x48] sm:$0xff]
    %v2254 = vld [vmem:[%s11 + $0x50] sm:$0xff]
    %v2255 = vld [vmem:[%s11 + $0x58] sm:$0xff]
    %v2256 = vld [vmem:[%s11 + $0x60] sm:$0xff]
    %v2257 = vld [vmem:[%s11 + $0x68] sm:$0xff]
    %v2258 = vld [vmem:[%s11 + $0x70] sm:$0xff]
    %v2259 = vld [vmem:[%s11 + $0x78] sm:$0xff]
    %v2260 = vld [vmem:[%s11 + $0x80] sm:$0xff]
    %v2261 = vld [vmem:[%s11 + $0x88] sm:$0xff]
    %v2262 = vld [vmem:[%s11 + $0x90] sm:$0xff]
    %v2263 = vld [vmem:[%s11 + $0x98] sm:$0xff]
    %v2264 = vld [vmem:[%s11 + $0xa0] sm:$0xff]
    %v2265 = vld [vmem:[%s11 + $0xa8] sm:$0xff]
    %v2266 = vld [vmem:[%s11 + $0xb0] sm:$0xff]
    %v2267 = vld [vmem:[%s11 + $0xb8] sm:$0xff]
    %v2268 = vld [vmem:[%s11 + $0xc0] sm:$0xff]
    %v2269 = vld [vmem:[%s11 + $0xc8] sm:$0xff]
    %v2270 = vld [vmem:[%s11 + $0xd0] sm:$0xff]
    %v2271 = vld [vmem:[%s11 + $0xd8] sm:$0xff]
    %v2272 = vld [vmem:[%s11 + $0xe0] sm:$0xff]
    %v2273 = vld [vmem:[%s11 + $0xe8] sm:$0xff]
    %v2274 = vld [vmem:[%s11 + $0xf0] sm:$0xff]
    %v2275 = vld [vmem:[%s11 + $0xf8] sm:$0xff]
    %2276 = vmatprep.subr.mxu0 0.0
    %2277 = vmatpush1.msra.mxu0 %v2259
    %2278 = vmatprep.subr.mxu0 0.0
    %2279 = vmatpush1.msra.mxu0 %v2258
    %2280 = vmatprep.subr.mxu0 0.0
    %2281 = vmatpush1.msra.mxu0 %v2257
    %2282 = vmatprep.subr.mxu0 0.0
    %2283 = vmatpush1.msra.mxu0 %v2256
    %2284 = vmatprep.subr.mxu0 0.0
    %2285 = vmatpush1.msra.mxu0 %v2255
    %2286 = vmatprep.subr.mxu0 0.0
    %2287 = vmatpush1.msra.mxu0 %v2254
    %2288 = vmatprep.subr.mxu0 0.0
    %2289 = vmatpush1.msra.mxu0 %v2253
    %2290 = vmatprep.subr.mxu0 0.0
    %2291 = vmatpush1.msra.mxu0 %v2252
    %2292 = vmatprep.subr.mxu0 0.0
    %2293 = vmatpush1.msra.mxu0 %v2251
    %2294 = vmatprep.subr.mxu0 0.0
    %2295 = vmatpush1.msra.mxu0 %v2250
    %2296 = vmatprep.subr.mxu0 0.0
    %2297 = vmatpush1.msra.mxu0 %v2249
    %2298 = vmatprep.subr.mxu0 0.0
    %2299 = vmatpush1.msra.mxu0 %v2248
    %2300 = vmatprep.subr.mxu0 0.0
    %2301 = vmatpush1.msra.mxu0 %v2247
    %2302 = vmatprep.subr.mxu0 0.0
    %2303 = vmatpush1.msra.mxu0 %v2246
    %2304 = vmatprep.subr.mxu0 0.0
    %2305 = vmatpush1.msra.mxu0 %v2245
    %2306 = vmatprep.subr.mxu0 0.0
    %2307 = vmatpush1.msra.mxu0 %v2244
    %2308 = vmatprep.subr.mxu0 0.0
    %2309 = vmatpush2.msra.mxu0 %v2275
    %2310 = vmatprep.subr.mxu0 0.0
    %2311 = vmatpush2.msra.mxu0 %v2274
    %2312 = vmatprep.subr.mxu0 0.0
    %2313 = vmatpush2.msra.mxu0 %v2273
    %2314 = vmatprep.subr.mxu0 0.0
    %2315 = vmatpush2.msra.mxu0 %v2272
    %2316 = vmatprep.subr.mxu0 0.0
    %2317 = vmatpush2.msra.mxu0 %v2271
    %2318 = vmatprep.subr.mxu0 0.0
    %2319 = vmatpush2.msra.mxu0 %v2270
    %2320 = vmatprep.subr.mxu0 0.0
    %2321 = vmatpush2.msra.mxu0 %v2269
    %2322 = vmatprep.subr.mxu0 0.0
    %2323 = vmatpush2.msra.mxu0 %v2268
    %2324 = vmatprep.subr.mxu0 0.0
    %2325 = vmatpush2.msra.mxu0 %v2267
    %2326 = vmatprep.subr.mxu0 0.0
    %2327 = vmatpush2.msra.mxu0 %v2266
    %2328 = vmatprep.subr.mxu0 0.0
    %2329 = vmatpush2.msra.mxu0 %v2265
    %2330 = vmatprep.subr.mxu0 0.0
    %2331 = vmatpush2.msra.mxu0 %v2264
    %2332 = vmatprep.subr.mxu0 0.0
    %2333 = vmatpush2.msra.mxu0 %v2263
    %2334 = vmatprep.subr.mxu0 0.0
    %2335 = vmatpush2.msra.mxu0 %v2262
    %2336 = vmatprep.subr.mxu0 0.0
    %2337 = vmatpush2.msra.mxu0 %v2261
    %2338 = vmatprep.subr.mxu0 0.0
    %2339 = vmatpush2.msra.mxu0 %v2260
    %2340 = vmatprep.mubr.f32.mxu0 %v2243
    %2341 = vmatmul.mubr.f32.gmra.mxu0 %v2236
    %v2342 = vpop.f32.mrf.mxu0
    %v2343 = vadd.f32 0.0, %v2342
    %v2344 = vpop.f32.mrf.mxu0
    %2345 = vdwg.mxu0
    %v2346 = vmul.f32 %v2343, 0.0078125
    %v2347 = vld [vmem:[%s12] sm:$0xff]
    %v2348 = vld [vmem:[%s12 + $0x8] sm:$0xff]
    %v2349 = vld [vmem:[%s12 + $0x10] sm:$0xff]
    %v2350 = vld [vmem:[%s12 + $0x18] sm:$0xff]
    %v2351 = vld [vmem:[%s12 + $0x20] sm:$0xff]
    %v2352 = vld [vmem:[%s12 + $0x28] sm:$0xff]
    %v2353 = vld [vmem:[%s12 + $0x30] sm:$0xff]
    %v2354 = vld [vmem:[%s12 + $0x38] sm:$0xff]
    %v2356 = vsel %vm136, %v2346, 0
    %2358 = vmatprep.subr.mxu0 0.0
    %2359 = vmatpush1.msra.mxu0 0.0
    %2360 = vmatprep.subr.mxu0 0.0
    %2361 = vmatpush1.msra.mxu0 0.0
    %2362 = vmatprep.subr.mxu0 0.0
    %2363 = vmatpush1.msra.mxu0 0.0
    %2364 = vmatprep.subr.mxu0 0.0
    %2365 = vmatpush1.msra.mxu0 0.0
    %2366 = vmatprep.subr.mxu0 0.0
    %2367 = vmatpush1.msra.mxu0 0.0
    %2368 = vmatprep.subr.mxu0 0.0
    %2369 = vmatpush1.msra.mxu0 0.0
    %2370 = vmatprep.subr.mxu0 0.0
    %2371 = vmatpush1.msra.mxu0 0.0
    %2372 = vmatprep.subr.mxu0 0.0
    %2373 = vmatpush1.msra.mxu0 0.0
    %2374 = vmatprep.subr.mxu0 0.0
    %2375 = vmatpush1.msra.mxu0 0.0
    %2376 = vmatprep.subr.mxu0 0.0
    %2377 = vmatpush1.msra.mxu0 0.0
    %2378 = vmatprep.subr.mxu0 0.0
    %2379 = vmatpush1.msra.mxu0 0.0
    %2380 = vmatprep.subr.mxu0 0.0
    %2381 = vmatpush1.msra.mxu0 0.0
    %2382 = vmatprep.subr.mxu0 %v2354
    %2383 = vmatpush1.msra.mxu0 %v2353
    %2384 = vmatprep.subr.mxu0 %v2352
    %2385 = vmatpush1.msra.mxu0 %v2351
    %2386 = vmatprep.subr.mxu0 %v2350
    %2387 = vmatpush1.msra.mxu0 %v2349
    %2388 = vmatprep.subr.mxu0 %v2348
    %2389 = vmatpush1.msra.mxu0 %v2347
    %2390 = vmatprep.subr.mxu0 0.0
    %2391 = vmatpush2.msra.mxu0 0.0
    %2392 = vmatprep.subr.mxu0 0.0
    %2393 = vmatpush2.msra.mxu0 0.0
    %2394 = vmatprep.subr.mxu0 0.0
    %2395 = vmatpush2.msra.mxu0 0.0
    %2396 = vmatprep.subr.mxu0 0.0
    %2397 = vmatpush2.msra.mxu0 0.0
    %2398 = vmatprep.subr.mxu0 0.0
    %2399 = vmatpush2.msra.mxu0 0.0
    %2400 = vmatprep.subr.mxu0 0.0
    %2401 = vmatpush2.msra.mxu0 0.0
    %2402 = vmatprep.subr.mxu0 0.0
    %2403 = vmatpush2.msra.mxu0 0.0
    %2404 = vmatprep.subr.mxu0 0.0
    %2405 = vmatpush2.msra.mxu0 0.0
    %2406 = vmatprep.subr.mxu0 0.0
    %2407 = vmatpush2.msra.mxu0 0.0
    %2408 = vmatprep.subr.mxu0 0.0
    %2409 = vmatpush2.msra.mxu0 0.0
    %2410 = vmatprep.subr.mxu0 0.0
    %2411 = vmatpush2.msra.mxu0 0.0
    %2412 = vmatprep.subr.mxu0 0.0
    %2413 = vmatpush2.msra.mxu0 0.0
    %2414 = vmatprep.subr.mxu0 0.0
    %2415 = vmatpush2.msra.mxu0 0.0
    %2416 = vmatprep.subr.mxu0 0.0
    %2417 = vmatpush2.msra.mxu0 0.0
    %2418 = vmatprep.subr.mxu0 0.0
    %2419 = vmatpush2.msra.mxu0 0.0
    %2420 = vmatprep.subr.mxu0 0.0
    %2421 = vmatpush2.msra.mxu0 0.0
    %2422 = vmatprep.mubr.f32.mxu0 0.0
    %2423 = vmatmul.mubr.f32.gmra.mxu0 %v2356
    %v2424 = vpop.f32.mrf.mxu0
    %v2425 = vadd.f32 0.0, %v2424
    %v2426 = vpop.f32.mrf.mxu0
    %v2427 = vadd.f32 0.0, %v2426
    %2428 = vdwg.mxu0
    %v2429 = vlaneseq
    %v2430 = vshrl.u32 %v2429, 7
    %v2431 = vsub.s32 0, %v2430
    %v2432 = vrot.slane %v2425, %v2431
    %v2433 = vlaneseq
    %v2434 = vshrl.u32 %v2433, 7
    %v2435 = vsub.s32 0, %v2434
    %v2436 = vrot.slane %v2427, %v2435
    %v2437 = vsub.f32 %v2226, %v2432
    %v2438 = vsub.f32 %v2227, %v2436
    %v2439 = vsub.f32 %v2228, %v2432
    %v2440 = vsub.f32 %v2229, %v2436
    %v2441 = vmul.f32 %v2437, %v2437
    %v2442 = vmul.f32 %v2438, %v2438
    %v2443 = vmul.f32 %v2439, %v2439
    %v2444 = vmul.f32 %v2440, %v2440
    %v2445 = vadd.f32 %v2441, %v2443
    %v2446 = vrot.slane %v2445, 4
    %v2447 = vadd.f32 %v2445, %v2446
    %v2448 = vrot.slane %v2447, 2
    %v2449 = vadd.f32 %v2447, %v2448
    %v2450 = vrot.slane %v2449, 1
    %v2451 = vadd.f32 %v2449, %v2450
    %v2452 = vadd.f32 %v2442, %v2444
    %v2453 = vrot.slane %v2452, 4
    %v2454 = vadd.f32 %v2452, %v2453
    %v2455 = vrot.slane %v2454, 2
    %v2456 = vadd.f32 %v2454, %v2455
    %v2457 = vrot.slane %v2456, 1
    %v2458 = vadd.f32 %v2456, %v2457
    %2459 = vmatprep.subr.mxu0 0.0
    %2460 = vmatpush1.msra.mxu0 %v2259
    %2461 = vmatprep.subr.mxu0 0.0
    %2462 = vmatpush1.msra.mxu0 %v2258
    %2463 = vmatprep.subr.mxu0 0.0
    %2464 = vmatpush1.msra.mxu0 %v2257
    %2465 = vmatprep.subr.mxu0 0.0
    %2466 = vmatpush1.msra.mxu0 %v2256
    %2467 = vmatprep.subr.mxu0 0.0
    %2468 = vmatpush1.msra.mxu0 %v2255
    %2469 = vmatprep.subr.mxu0 0.0
    %2470 = vmatpush1.msra.mxu0 %v2254
    %2471 = vmatprep.subr.mxu0 0.0
    %2472 = vmatpush1.msra.mxu0 %v2253
    %2473 = vmatprep.subr.mxu0 0.0
    %2474 = vmatpush1.msra.mxu0 %v2252
    %2475 = vmatprep.subr.mxu0 0.0
    %2476 = vmatpush1.msra.mxu0 %v2251
    %2477 = vmatprep.subr.mxu0 0.0
    %2478 = vmatpush1.msra.mxu0 %v2250
    %2479 = vmatprep.subr.mxu0 0.0
    %2480 = vmatpush1.msra.mxu0 %v2249
    %2481 = vmatprep.subr.mxu0 0.0
    %2482 = vmatpush1.msra.mxu0 %v2248
    %2483 = vmatprep.subr.mxu0 0.0
    %2484 = vmatpush1.msra.mxu0 %v2247
    %2485 = vmatprep.subr.mxu0 0.0
    %2486 = vmatpush1.msra.mxu0 %v2246
    %2487 = vmatprep.subr.mxu0 0.0
    %2488 = vmatpush1.msra.mxu0 %v2245
    %2489 = vmatprep.subr.mxu0 0.0
    %2490 = vmatpush1.msra.mxu0 %v2244
    %2491 = vmatprep.subr.mxu0 0.0
    %2492 = vmatpush2.msra.mxu0 %v2275
    %2493 = vmatprep.subr.mxu0 0.0
    %2494 = vmatpush2.msra.mxu0 %v2274
    %2495 = vmatprep.subr.mxu0 0.0
    %2496 = vmatpush2.msra.mxu0 %v2273
    %2497 = vmatprep.subr.mxu0 0.0
    %2498 = vmatpush2.msra.mxu0 %v2272
    %2499 = vmatprep.subr.mxu0 0.0
    %2500 = vmatpush2.msra.mxu0 %v2271
    %2501 = vmatprep.subr.mxu0 0.0
    %2502 = vmatpush2.msra.mxu0 %v2270
    %2503 = vmatprep.subr.mxu0 0.0
    %2504 = vmatpush2.msra.mxu0 %v2269
    %2505 = vmatprep.subr.mxu0 0.0
    %2506 = vmatpush2.msra.mxu0 %v2268
    %2507 = vmatprep.subr.mxu0 0.0
    %2508 = vmatpush2.msra.mxu0 %v2267
    %2509 = vmatprep.subr.mxu0 0.0
    %2510 = vmatpush2.msra.mxu0 %v2266
    %2511 = vmatprep.subr.mxu0 0.0
    %2512 = vmatpush2.msra.mxu0 %v2265
    %2513 = vmatprep.subr.mxu0 0.0
    %2514 = vmatpush2.msra.mxu0 %v2264
    %2515 = vmatprep.subr.mxu0 0.0
    %2516 = vmatpush2.msra.mxu0 %v2263
    %2517 = vmatprep.subr.mxu0 0.0
    %2518 = vmatpush2.msra.mxu0 %v2262
    %2519 = vmatprep.subr.mxu0 0.0
    %2520 = vmatpush2.msra.mxu0 %v2261
    %2521 = vmatprep.subr.mxu0 0.0
    %2522 = vmatpush2.msra.mxu0 %v2260
    %2523 = vmatprep.mubr.f32.mxu0 %v2458
    %2524 = vmatmul.mubr.f32.gmra.mxu0 %v2451
    %v2525 = vpop.f32.mrf.mxu0
    %v2526 = vadd.f32 0.0, %v2525
    %v2527 = vpop.f32.mrf.mxu0
    %2528 = vdwg.mxu0
    %v2529 = vmul.f32 %v2526, 0.0078125
    %v2531 = vsel %vm136, %v2529, 0
    %2533 = vmatprep.subr.mxu0 0.0
    %2534 = vmatpush1.msra.mxu0 0.0
    %2535 = vmatprep.subr.mxu0 0.0
    %2536 = vmatpush1.msra.mxu0 0.0
    %2537 = vmatprep.subr.mxu0 0.0
    %2538 = vmatpush1.msra.mxu0 0.0
    %2539 = vmatprep.subr.mxu0 0.0
    %2540 = vmatpush1.msra.mxu0 0.0
    %2541 = vmatprep.subr.mxu0 0.0
    %2542 = vmatpush1.msra.mxu0 0.0
    %2543 = vmatprep.subr.mxu0 0.0
    %2544 = vmatpush1.msra.mxu0 0.0
    %2545 = vmatprep.subr.mxu0 0.0
    %2546 = vmatpush1.msra.mxu0 0.0
    %2547 = vmatprep.subr.mxu0 0.0
    %2548 = vmatpush1.msra.mxu0 0.0
    %2549 = vmatprep.subr.mxu0 0.0
    %2550 = vmatpush1.msra.mxu0 0.0
    %2551 = vmatprep.subr.mxu0 0.0
    %2552 = vmatpush1.msra.mxu0 0.0
    %2553 = vmatprep.subr.mxu0 0.0
    %2554 = vmatpush1.msra.mxu0 0.0
    %2555 = vmatprep.subr.mxu0 0.0
    %2556 = vmatpush1.msra.mxu0 0.0
    %2557 = vmatprep.subr.mxu0 %v2354
    %2558 = vmatpush1.msra.mxu0 %v2353
    %2559 = vmatprep.subr.mxu0 %v2352
    %2560 = vmatpush1.msra.mxu0 %v2351
    %2561 = vmatprep.subr.mxu0 %v2350
    %2562 = vmatpush1.msra.mxu0 %v2349
    %2563 = vmatprep.subr.mxu0 %v2348
    %2564 = vmatpush1.msra.mxu0 %v2347
    %2565 = vmatprep.subr.mxu0 0.0
    %2566 = vmatpush2.msra.mxu0 0.0
    %2567 = vmatprep.subr.mxu0 0.0
    %2568 = vmatpush2.msra.mxu0 0.0
    %2569 = vmatprep.subr.mxu0 0.0
    %2570 = vmatpush2.msra.mxu0 0.0
    %2571 = vmatprep.subr.mxu0 0.0
    %2572 = vmatpush2.msra.mxu0 0.0
    %2573 = vmatprep.subr.mxu0 0.0
    %2574 = vmatpush2.msra.mxu0 0.0
    %2575 = vmatprep.subr.mxu0 0.0
    %2576 = vmatpush2.msra.mxu0 0.0
    %2577 = vmatprep.subr.mxu0 0.0
    %2578 = vmatpush2.msra.mxu0 0.0
    %2579 = vmatprep.subr.mxu0 0.0
    %2580 = vmatpush2.msra.mxu0 0.0
    %2581 = vmatprep.subr.mxu0 0.0
    %2582 = vmatpush2.msra.mxu0 0.0
    %2583 = vmatprep.subr.mxu0 0.0
    %2584 = vmatpush2.msra.mxu0 0.0
    %2585 = vmatprep.subr.mxu0 0.0
    %2586 = vmatpush2.msra.mxu0 0.0
    %2587 = vmatprep.subr.mxu0 0.0
    %2588 = vmatpush2.msra.mxu0 0.0
    %2589 = vmatprep.subr.mxu0 0.0
    %2590 = vmatpush2.msra.mxu0 0.0
    %2591 = vmatprep.subr.mxu0 0.0
    %2592 = vmatpush2.msra.mxu0 0.0
    %2593 = vmatprep.subr.mxu0 0.0
    %2594 = vmatpush2.msra.mxu0 0.0
    %2595 = vmatprep.subr.mxu0 0.0
    %2596 = vmatpush2.msra.mxu0 0.0
    %2597 = vmatprep.mubr.f32.mxu0 0.0
    %2598 = vmatmul.mubr.f32.gmra.mxu0 %v2531
    %v2599 = vpop.f32.mrf.mxu0
    %v2600 = vadd.f32 1e-05, %v2599
    %v2601 = vpop.f32.mrf.mxu0
    %v2602 = vadd.f32 1e-05, %v2601
    %2603 = vdwg.mxu0
    %v2604 = vrsqrt.pop %v2600
    %v2605 = vrsqrt.pop %v2602
    %v2606 = vlaneseq
    %v2607 = vshrl.u32 %v2606, 7
    %v2608 = vsub.s32 0, %v2607
    %v2609 = vrot.slane %v2604, %v2608
    %v2610 = vlaneseq
    %v2611 = vshrl.u32 %v2610, 7
    %v2612 = vsub.s32 0, %v2611
    %v2613 = vrot.slane %v2605, %v2612
    %v2614 = vmul.f32 %v2437, %v2609
    %v2615 = vmul.f32 %v2438, %v2613
    %v2616 = vmul.f32 %v2439, %v2609
    %v2617 = vmul.f32 %v2440, %v2613
    %s2618 = scalar_lea.vmem [#allocation8], 2
    %v2619 = vld [vmem:[%s2618] sm:$0x3]
    %v2621 = vlaneseq
    %v2622 = vshrl.u32 %v2621, 7
    %v2623 = vsub.s32 0, %v2622
    %v2624 = vrot.slane %v2619, %v2623
    %v2625 = vlaneseq
    %v2626 = vshrl.u32 %v2625, 7
    %v2627 = vsub.s32 1, %v2626
    %v2628 = vrot.slane %v2619, %v2627
    %v2631 = vmul.f32 %v2614, %v2624
    %v2632 = vmul.f32 %v2615, %v2628
    %v2633 = vmul.f32 %v2616, %v2624
    %v2634 = vmul.f32 %v2617, %v2628
    %s2635 = scalar_lea.vmem [#allocation8], 4
    %v2636 = vld [vmem:[%s2635] sm:$0x3]
    %v2638 = vlaneseq
    %v2639 = vshrl.u32 %v2638, 7
    %v2640 = vsub.s32 0, %v2639
    %v2641 = vrot.slane %v2636, %v2640
    %v2642 = vlaneseq
    %v2643 = vshrl.u32 %v2642, 7
    %v2644 = vsub.s32 1, %v2643
    %v2645 = vrot.slane %v2636, %v2644
    %v2648 = vadd.f32 %v2631, %v2641
    %v2649 = vadd.f32 %v2632, %v2645
    %v2650 = vadd.f32 %v2633, %v2641
    %v2651 = vadd.f32 %v2634, %v2645
    %v2652 = vmax.f32 %v2648, 0.0
    %v2653 = vmax.f32 %v2649, 0.0
    %v2654 = vmax.f32 %v2650, 0.0
    %v2655 = vmax.f32 %v2651, 0.0
    %v2656 = vld [vmem:[%s13] sm:$0xff]
    %v2658 = vsel %vm345, %v2656, 0
    %2660 = vmatprep.subr.mxu0 0.0
    %2661 = vmatpush1.msra.mxu0 0.0
    %2662 = vmatprep.subr.mxu0 0.0
    %2663 = vmatpush1.msra.mxu0 0.0
    %2664 = vmatprep.subr.mxu0 0.0
    %2665 = vmatpush1.msra.mxu0 0.0
    %2666 = vmatprep.subr.mxu0 0.0
    %2667 = vmatpush1.msra.mxu0 0.0
    %2668 = vmatprep.subr.mxu0 0.0
    %2669 = vmatpush1.msra.mxu0 0.0
    %2670 = vmatprep.subr.mxu0 0.0
    %2671 = vmatpush1.msra.mxu0 0.0
    %2672 = vmatprep.subr.mxu0 0.0
    %2673 = vmatpush1.msra.mxu0 0.0
    %2674 = vmatprep.subr.mxu0 0.0
    %2675 = vmatpush1.msra.mxu0 0.0
    %2676 = vmatprep.subr.mxu0 0.0
    %2677 = vmatpush1.msra.mxu0 0.0
    %2678 = vmatprep.subr.mxu0 0.0
    %2679 = vmatpush1.msra.mxu0 0.0
    %2680 = vmatprep.subr.mxu0 0.0
    %2681 = vmatpush1.msra.mxu0 0.0
    %2682 = vmatprep.subr.mxu0 0.0
    %2683 = vmatpush1.msra.mxu0 0.0
    %2684 = vmatprep.subr.mxu0 0.0
    %2685 = vmatpush1.msra.mxu0 0.0
    %2686 = vmatprep.subr.mxu0 0.0
    %2687 = vmatpush1.msra.mxu0 0.0
    %2688 = vmatprep.subr.mxu0 %v2655
    %2689 = vmatpush1.msra.mxu0 %v2654
    %2690 = vmatprep.subr.mxu0 %v2653
    %2691 = vmatpush1.msra.mxu0 %v2652
    %2692 = vmatprep.subr.mxu0 0.0
    %2693 = vmatpush2.msra.mxu0 0.0
    %2694 = vmatprep.subr.mxu0 0.0
    %2695 = vmatpush2.msra.mxu0 0.0
    %2696 = vmatprep.subr.mxu0 0.0
    %2697 = vmatpush2.msra.mxu0 0.0
    %2698 = vmatprep.subr.mxu0 0.0
    %2699 = vmatpush2.msra.mxu0 0.0
    %2700 = vmatprep.subr.mxu0 0.0
    %2701 = vmatpush2.msra.mxu0 0.0
    %2702 = vmatprep.subr.mxu0 0.0
    %2703 = vmatpush2.msra.mxu0 0.0
    %2704 = vmatprep.subr.mxu0 0.0
    %2705 = vmatpush2.msra.mxu0 0.0
    %2706 = vmatprep.subr.mxu0 0.0
    %2707 = vmatpush2.msra.mxu0 0.0
    %2708 = vmatprep.subr.mxu0 0.0
    %2709 = vmatpush2.msra.mxu0 0.0
    %2710 = vmatprep.subr.mxu0 0.0
    %2711 = vmatpush2.msra.mxu0 0.0
    %2712 = vmatprep.subr.mxu0 0.0
    %2713 = vmatpush2.msra.mxu0 0.0
    %2714 = vmatprep.subr.mxu0 0.0
    %2715 = vmatpush2.msra.mxu0 0.0
    %2716 = vmatprep.subr.mxu0 0.0
    %2717 = vmatpush2.msra.mxu0 0.0
    %2718 = vmatprep.subr.mxu0 0.0
    %2719 = vmatpush2.msra.mxu0 0.0
    %2720 = vmatprep.subr.mxu0 0.0
    %2721 = vmatpush2.msra.mxu0 0.0
    %2722 = vmatprep.subr.mxu0 0.0
    %2723 = vmatpush2.msra.mxu0 0.0
    %2724 = vmatprep.mubr.f32.mxu0 0.0
    %2725 = vmatmul.mubr.f32.gmra.mxu0 %v2658
    %v2726 = vpop.f32.mrf.mxu0
    %v2727 = vadd.f32 0.0, %v2726
    %v2728 = vpop.f32.mrf.mxu0
    %v2729 = vadd.f32 0.0, %v2728
    %2730 = vdwg.mxu0
    %s2731 = scalar_lea.vmem %s13, 8
    %v2732 = vld [vmem:[%s2731] sm:$0xff]
    %v2734 = vsel %vm345, %v2732, 0
    %2736 = vmatprep.subr.mxu0 0.0
    %2737 = vmatpush1.msra.mxu0 0.0
    %2738 = vmatprep.subr.mxu0 0.0
    %2739 = vmatpush1.msra.mxu0 0.0
    %2740 = vmatprep.subr.mxu0 0.0
    %2741 = vmatpush1.msra.mxu0 0.0
    %2742 = vmatprep.subr.mxu0 0.0
    %2743 = vmatpush1.msra.mxu0 0.0
    %2744 = vmatprep.subr.mxu0 0.0
    %2745 = vmatpush1.msra.mxu0 0.0
    %2746 = vmatprep.subr.mxu0 0.0
    %2747 = vmatpush1.msra.mxu0 0.0
    %2748 = vmatprep.subr.mxu0 0.0
    %2749 = vmatpush1.msra.mxu0 0.0
    %2750 = vmatprep.subr.mxu0 0.0
    %2751 = vmatpush1.msra.mxu0 0.0
    %2752 = vmatprep.subr.mxu0 0.0
    %2753 = vmatpush1.msra.mxu0 0.0
    %2754 = vmatprep.subr.mxu0 0.0
    %2755 = vmatpush1.msra.mxu0 0.0
    %2756 = vmatprep.subr.mxu0 0.0
    %2757 = vmatpush1.msra.mxu0 0.0
    %2758 = vmatprep.subr.mxu0 0.0
    %2759 = vmatpush1.msra.mxu0 0.0
    %2760 = vmatprep.subr.mxu0 0.0
    %2761 = vmatpush1.msra.mxu0 0.0
    %2762 = vmatprep.subr.mxu0 0.0
    %2763 = vmatpush1.msra.mxu0 0.0
    %2764 = vmatprep.subr.mxu0 %v2655
    %2765 = vmatpush1.msra.mxu0 %v2654
    %2766 = vmatprep.subr.mxu0 %v2653
    %2767 = vmatpush1.msra.mxu0 %v2652
    %2768 = vmatprep.subr.mxu0 0.0
    %2769 = vmatpush2.msra.mxu0 0.0
    %2770 = vmatprep.subr.mxu0 0.0
    %2771 = vmatpush2.msra.mxu0 0.0
    %2772 = vmatprep.subr.mxu0 0.0
    %2773 = vmatpush2.msra.mxu0 0.0
    %2774 = vmatprep.subr.mxu0 0.0
    %2775 = vmatpush2.msra.mxu0 0.0
    %2776 = vmatprep.subr.mxu0 0.0
    %2777 = vmatpush2.msra.mxu0 0.0
    %2778 = vmatprep.subr.mxu0 0.0
    %2779 = vmatpush2.msra.mxu0 0.0
    %2780 = vmatprep.subr.mxu0 0.0
    %2781 = vmatpush2.msra.mxu0 0.0
    %2782 = vmatprep.subr.mxu0 0.0
    %2783 = vmatpush2.msra.mxu0 0.0
    %2784 = vmatprep.subr.mxu0 0.0
    %2785 = vmatpush2.msra.mxu0 0.0
    %2786 = vmatprep.subr.mxu0 0.0
    %2787 = vmatpush2.msra.mxu0 0.0
    %2788 = vmatprep.subr.mxu0 0.0
    %2789 = vmatpush2.msra.mxu0 0.0
    %2790 = vmatprep.subr.mxu0 0.0
    %2791 = vmatpush2.msra.mxu0 0.0
    %2792 = vmatprep.subr.mxu0 0.0
    %2793 = vmatpush2.msra.mxu0 0.0
    %2794 = vmatprep.subr.mxu0 0.0
    %2795 = vmatpush2.msra.mxu0 0.0
    %2796 = vmatprep.subr.mxu0 0.0
    %2797 = vmatpush2.msra.mxu0 0.0
    %2798 = vmatprep.subr.mxu0 0.0
    %2799 = vmatpush2.msra.mxu0 0.0
    %2800 = vmatprep.mubr.f32.mxu0 0.0
    %2801 = vmatmul.mubr.f32.gmra.mxu0 %v2734
    %v2802 = vpop.f32.mrf.mxu0
    %v2803 = vadd.f32 0.0, %v2802
    %v2804 = vpop.f32.mrf.mxu0
    %v2805 = vadd.f32 0.0, %v2804
    %2806 = vdwg.mxu0
    %v2807 = vmax.f32 %v2727, %v2803
    %v2808 = vmax.f32 %v2729, %v2805
    %v2809 = vld [vmem:[#allocation10] sm:$0xff]
    %v2810 = vld [vmem:[#allocation10 + $0x8] sm:$0xff]
    %v2811 = vld [vmem:[#allocation10 + $0x10] sm:$0xff]
    %v2812 = vld [vmem:[#allocation10 + $0x18] sm:$0xff]
    %v2813 = vld [vmem:[#allocation10 + $0x20] sm:$0xff]
    %v2814 = vld [vmem:[#allocation10 + $0x28] sm:$0xff]
    %v2815 = vld [vmem:[#allocation10 + $0x30] sm:$0xff]
    %v2816 = vld [vmem:[#allocation10 + $0x38] sm:$0xff]
    %v2817 = vld [vmem:[#allocation10 + $0x40] sm:$0xff]
    %v2818 = vld [vmem:[#allocation10 + $0x48] sm:$0xff]
    %v2819 = vld [vmem:[#allocation10 + $0x50] sm:$0xff]
    %v2820 = vld [vmem:[#allocation10 + $0x58] sm:$0xff]
    %v2821 = vld [vmem:[#allocation10 + $0x60] sm:$0xff]
    %v2822 = vld [vmem:[#allocation10 + $0x68] sm:$0xff]
    %v2823 = vld [vmem:[#allocation10 + $0x70] sm:$0xff]
    %v2824 = vld [vmem:[#allocation10 + $0x78] sm:$0xff]
    %v2825 = vld [vmem:[#allocation10 + $0x80] sm:$0xff]
    %v2826 = vld [vmem:[#allocation10 + $0x88] sm:$0xff]
    %v2827 = vld [vmem:[#allocation10 + $0x90] sm:$0xff]
    %v2828 = vld [vmem:[#allocation10 + $0x98] sm:$0xff]
    %v2829 = vld [vmem:[#allocation10 + $0xa0] sm:$0xff]
    %v2830 = vld [vmem:[#allocation10 + $0xa8] sm:$0xff]
    %v2831 = vld [vmem:[#allocation10 + $0xb0] sm:$0xff]
    %v2832 = vld [vmem:[#allocation10 + $0xb8] sm:$0xff]
    %v2833 = vld [vmem:[#allocation10 + $0xc0] sm:$0xff]
    %v2834 = vld [vmem:[#allocation10 + $0xc8] sm:$0xff]
    %v2835 = vld [vmem:[#allocation10 + $0xd0] sm:$0xff]
    %v2836 = vld [vmem:[#allocation10 + $0xd8] sm:$0xff]
    %v2837 = vld [vmem:[#allocation10 + $0xe0] sm:$0xff]
    %v2838 = vld [vmem:[#allocation10 + $0xe8] sm:$0xff]
    %v2839 = vld [vmem:[#allocation10 + $0xf0] sm:$0xff]
    %v2840 = vld [vmem:[#allocation10 + $0xf8] sm:$0xff]
    %2841 = vmatprep.subr.mxu0 0.0
    %2842 = vmatpush1.msra.mxu0 %v2824
    %2843 = vmatprep.subr.mxu0 0.0
    %2844 = vmatpush1.msra.mxu0 %v2823
    %2845 = vmatprep.subr.mxu0 0.0
    %2846 = vmatpush1.msra.mxu0 %v2822
    %2847 = vmatprep.subr.mxu0 0.0
    %2848 = vmatpush1.msra.mxu0 %v2821
    %2849 = vmatprep.subr.mxu0 0.0
    %2850 = vmatpush1.msra.mxu0 %v2820
    %2851 = vmatprep.subr.mxu0 0.0
    %2852 = vmatpush1.msra.mxu0 %v2819
    %2853 = vmatprep.subr.mxu0 0.0
    %2854 = vmatpush1.msra.mxu0 %v2818
    %2855 = vmatprep.subr.mxu0 0.0
    %2856 = vmatpush1.msra.mxu0 %v2817
    %2857 = vmatprep.subr.mxu0 0.0
    %2858 = vmatpush1.msra.mxu0 %v2816
    %2859 = vmatprep.subr.mxu0 0.0
    %2860 = vmatpush1.msra.mxu0 %v2815
    %2861 = vmatprep.subr.mxu0 0.0
    %2862 = vmatpush1.msra.mxu0 %v2814
    %2863 = vmatprep.subr.mxu0 0.0
    %2864 = vmatpush1.msra.mxu0 %v2813
    %2865 = vmatprep.subr.mxu0 0.0
    %2866 = vmatpush1.msra.mxu0 %v2812
    %2867 = vmatprep.subr.mxu0 0.0
    %2868 = vmatpush1.msra.mxu0 %v2811
    %2869 = vmatprep.subr.mxu0 0.0
    %2870 = vmatpush1.msra.mxu0 %v2810
    %2871 = vmatprep.subr.mxu0 0.0
    %2872 = vmatpush1.msra.mxu0 %v2809
    %2873 = vmatprep.subr.mxu0 0.0
    %2874 = vmatpush2.msra.mxu0 %v2840
    %2875 = vmatprep.subr.mxu0 0.0
    %2876 = vmatpush2.msra.mxu0 %v2839
    %2877 = vmatprep.subr.mxu0 0.0
    %2878 = vmatpush2.msra.mxu0 %v2838
    %2879 = vmatprep.subr.mxu0 0.0
    %2880 = vmatpush2.msra.mxu0 %v2837
    %2881 = vmatprep.subr.mxu0 0.0
    %2882 = vmatpush2.msra.mxu0 %v2836
    %2883 = vmatprep.subr.mxu0 0.0
    %2884 = vmatpush2.msra.mxu0 %v2835
    %2885 = vmatprep.subr.mxu0 0.0
    %2886 = vmatpush2.msra.mxu0 %v2834
    %2887 = vmatprep.subr.mxu0 0.0
    %2888 = vmatpush2.msra.mxu0 %v2833
    %2889 = vmatprep.subr.mxu0 0.0
    %2890 = vmatpush2.msra.mxu0 %v2832
    %2891 = vmatprep.subr.mxu0 0.0
    %2892 = vmatpush2.msra.mxu0 %v2831
    %2893 = vmatprep.subr.mxu0 0.0
    %2894 = vmatpush2.msra.mxu0 %v2830
    %2895 = vmatprep.subr.mxu0 0.0
    %2896 = vmatpush2.msra.mxu0 %v2829
    %2897 = vmatprep.subr.mxu0 0.0
    %2898 = vmatpush2.msra.mxu0 %v2828
    %2899 = vmatprep.subr.mxu0 0.0
    %2900 = vmatpush2.msra.mxu0 %v2827
    %2901 = vmatprep.subr.mxu0 0.0
    %2902 = vmatpush2.msra.mxu0 %v2826
    %2903 = vmatprep.subr.mxu0 0.0
    %2904 = vmatpush2.msra.mxu0 %v2825
    %2905 = vmatprep.mubr.f32.mxu0 %v2808
    %2906 = vmatmul.mubr.f32.gmra.mxu0 %v2807
    %v2907 = vpop.f32.mrf.mxu0
    %v2908 = vadd.f32 0.0, %v2907
    %v2909 = vpop.f32.mrf.mxu0
    %2910 = vdwg.mxu0
    %s2911 = scalar_lea.vmem [#allocation10], 256
    %v2912 = vld [vmem:[%s2911] sm:$0xff]
    %v2913 = vld [vmem:[%s2911 + $0x8] sm:$0xff]
    %v2914 = vld [vmem:[%s2911 + $0x10] sm:$0xff]
    %v2915 = vld [vmem:[%s2911 + $0x18] sm:$0xff]
    %v2916 = vld [vmem:[%s2911 + $0x20] sm:$0xff]
    %v2917 = vld [vmem:[%s2911 + $0x28] sm:$0xff]
    %v2918 = vld [vmem:[%s2911 + $0x30] sm:$0xff]
    %v2919 = vld [vmem:[%s2911 + $0x38] sm:$0xff]
    %v2920 = vld [vmem:[%s2911 + $0x40] sm:$0xff]
    %v2921 = vld [vmem:[%s2911 + $0x48] sm:$0xff]
    %v2922 = vld [vmem:[%s2911 + $0x50] sm:$0xff]
    %v2923 = vld [vmem:[%s2911 + $0x58] sm:$0xff]
    %v2924 = vld [vmem:[%s2911 + $0x60] sm:$0xff]
    %v2925 = vld [vmem:[%s2911 + $0x68] sm:$0xff]
    %v2926 = vld [vmem:[%s2911 + $0x70] sm:$0xff]
    %v2927 = vld [vmem:[%s2911 + $0x78] sm:$0xff]
    %v2928 = vld [vmem:[%s2911 + $0x80] sm:$0xff]
    %v2929 = vld [vmem:[%s2911 + $0x88] sm:$0xff]
    %v2930 = vld [vmem:[%s2911 + $0x90] sm:$0xff]
    %v2931 = vld [vmem:[%s2911 + $0x98] sm:$0xff]
    %v2932 = vld [vmem:[%s2911 + $0xa0] sm:$0xff]
    %v2933 = vld [vmem:[%s2911 + $0xa8] sm:$0xff]
    %v2934 = vld [vmem:[%s2911 + $0xb0] sm:$0xff]
    %v2935 = vld [vmem:[%s2911 + $0xb8] sm:$0xff]
    %v2936 = vld [vmem:[%s2911 + $0xc0] sm:$0xff]
    %v2937 = vld [vmem:[%s2911 + $0xc8] sm:$0xff]
    %v2938 = vld [vmem:[%s2911 + $0xd0] sm:$0xff]
    %v2939 = vld [vmem:[%s2911 + $0xd8] sm:$0xff]
    %v2940 = vld [vmem:[%s2911 + $0xe0] sm:$0xff]
    %v2941 = vld [vmem:[%s2911 + $0xe8] sm:$0xff]
    %v2942 = vld [vmem:[%s2911 + $0xf0] sm:$0xff]
    %v2943 = vld [vmem:[%s2911 + $0xf8] sm:$0xff]
    %2944 = vmatprep.subr.mxu0 0.0
    %2945 = vmatpush1.msra.mxu0 %v2927
    %2946 = vmatprep.subr.mxu0 0.0
    %2947 = vmatpush1.msra.mxu0 %v2926
    %2948 = vmatprep.subr.mxu0 0.0
    %2949 = vmatpush1.msra.mxu0 %v2925
    %2950 = vmatprep.subr.mxu0 0.0
    %2951 = vmatpush1.msra.mxu0 %v2924
    %2952 = vmatprep.subr.mxu0 0.0
    %2953 = vmatpush1.msra.mxu0 %v2923
    %2954 = vmatprep.subr.mxu0 0.0
    %2955 = vmatpush1.msra.mxu0 %v2922
    %2956 = vmatprep.subr.mxu0 0.0
    %2957 = vmatpush1.msra.mxu0 %v2921
    %2958 = vmatprep.subr.mxu0 0.0
    %2959 = vmatpush1.msra.mxu0 %v2920
    %2960 = vmatprep.subr.mxu0 0.0
    %2961 = vmatpush1.msra.mxu0 %v2919
    %2962 = vmatprep.subr.mxu0 0.0
    %2963 = vmatpush1.msra.mxu0 %v2918
    %2964 = vmatprep.subr.mxu0 0.0
    %2965 = vmatpush1.msra.mxu0 %v2917
    %2966 = vmatprep.subr.mxu0 0.0
    %2967 = vmatpush1.msra.mxu0 %v2916
    %2968 = vmatprep.subr.mxu0 0.0
    %2969 = vmatpush1.msra.mxu0 %v2915
    %2970 = vmatprep.subr.mxu0 0.0
    %2971 = vmatpush1.msra.mxu0 %v2914
    %2972 = vmatprep.subr.mxu0 0.0
    %2973 = vmatpush1.msra.mxu0 %v2913
    %2974 = vmatprep.subr.mxu0 0.0
    %2975 = vmatpush1.msra.mxu0 %v2912
    %2976 = vmatprep.subr.mxu0 0.0
    %2977 = vmatpush2.msra.mxu0 %v2943
    %2978 = vmatprep.subr.mxu0 0.0
    %2979 = vmatpush2.msra.mxu0 %v2942
    %2980 = vmatprep.subr.mxu0 0.0
    %2981 = vmatpush2.msra.mxu0 %v2941
    %2982 = vmatprep.subr.mxu0 0.0
    %2983 = vmatpush2.msra.mxu0 %v2940
    %2984 = vmatprep.subr.mxu0 0.0
    %2985 = vmatpush2.msra.mxu0 %v2939
    %2986 = vmatprep.subr.mxu0 0.0
    %2987 = vmatpush2.msra.mxu0 %v2938
    %2988 = vmatprep.subr.mxu0 0.0
    %2989 = vmatpush2.msra.mxu0 %v2937
    %2990 = vmatprep.subr.mxu0 0.0
    %2991 = vmatpush2.msra.mxu0 %v2936
    %2992 = vmatprep.subr.mxu0 0.0
    %2993 = vmatpush2.msra.mxu0 %v2935
    %2994 = vmatprep.subr.mxu0 0.0
    %2995 = vmatpush2.msra.mxu0 %v2934
    %2996 = vmatprep.subr.mxu0 0.0
    %2997 = vmatpush2.msra.mxu0 %v2933
    %2998 = vmatprep.subr.mxu0 0.0
    %2999 = vmatpush2.msra.mxu0 %v2932
    %3000 = vmatprep.subr.mxu0 0.0
    %3001 = vmatpush2.msra.mxu0 %v2931
    %3002 = vmatprep.subr.mxu0 0.0
    %3003 = vmatpush2.msra.mxu0 %v2930
    %3004 = vmatprep.subr.mxu0 0.0
    %3005 = vmatpush2.msra.mxu0 %v2929
    %3006 = vmatprep.subr.mxu0 0.0
    %3007 = vmatpush2.msra.mxu0 %v2928
    %3008 = vmatprep.mubr.f32.mxu0 %v2808
    %3009 = vmatmul.mubr.f32.gmra.mxu0 %v2807
    %v3010 = vpop.f32.mrf.mxu0
    %v3011 = vadd.f32 0.0, %v3010
    %v3012 = vpop.f32.mrf.mxu0
    %3013 = vdwg.mxu0
    %v3014 = vmax.f32 %v2908, %v3011
    %v3015 = vld [vmem:[%s15] sm:$0x3]
    %vm3016 = vcmask 64512
    %v3018 = vsel %vm3016, %v3015, 0
    %3020 = vmatprep.subr.mxu0 0.0
    %3021 = vmatpush1.msra.mxu0 0.0
    %3022 = vmatprep.subr.mxu0 0.0
    %3023 = vmatpush1.msra.mxu0 0.0
    %3024 = vmatprep.subr.mxu0 0.0
    %3025 = vmatpush1.msra.mxu0 0.0
    %3026 = vmatprep.subr.mxu0 0.0
    %3027 = vmatpush1.msra.mxu0 0.0
    %3028 = vmatprep.subr.mxu0 0.0
    %3029 = vmatpush1.msra.mxu0 0.0
    %3030 = vmatprep.subr.mxu0 0.0
    %3031 = vmatpush1.msra.mxu0 0.0
    %3032 = vmatprep.subr.mxu0 0.0
    %3033 = vmatpush1.msra.mxu0 0.0
    %3034 = vmatprep.subr.mxu0 0.0
    %3035 = vmatpush1.msra.mxu0 0.0
    %3036 = vmatprep.subr.mxu0 0.0
    %3037 = vmatpush1.msra.mxu0 0.0
    %3038 = vmatprep.subr.mxu0 0.0
    %3039 = vmatpush1.msra.mxu0 0.0
    %3040 = vmatprep.subr.mxu0 0.0
    %3041 = vmatpush1.msra.mxu0 0.0
    %3042 = vmatprep.subr.mxu0 0.0
    %3043 = vmatpush1.msra.mxu0 0.0
    %3044 = vmatprep.subr.mxu0 0.0
    %3045 = vmatpush1.msra.mxu0 0.0
    %3046 = vmatprep.subr.mxu0 0.0
    %3047 = vmatpush1.msra.mxu0 0.0
    %3048 = vmatprep.subr.mxu0 0.0
    %3049 = vmatpush1.msra.mxu0 0.0
    %3050 = vmatprep.subr.mxu0 0.0
    %3051 = vmatpush1.msra.mxu0 %v3014
    %3052 = vmatprep.subr.mxu0 0.0
    %3053 = vmatpush2.msra.mxu0 0.0
    %3054 = vmatprep.subr.mxu0 0.0
    %3055 = vmatpush2.msra.mxu0 0.0
    %3056 = vmatprep.subr.mxu0 0.0
    %3057 = vmatpush2.msra.mxu0 0.0
    %3058 = vmatprep.subr.mxu0 0.0
    %3059 = vmatpush2.msra.mxu0 0.0
    %3060 = vmatprep.subr.mxu0 0.0
    %3061 = vmatpush2.msra.mxu0 0.0
    %3062 = vmatprep.subr.mxu0 0.0
    %3063 = vmatpush2.msra.mxu0 0.0
    %3064 = vmatprep.subr.mxu0 0.0
    %3065 = vmatpush2.msra.mxu0 0.0
    %3066 = vmatprep.subr.mxu0 0.0
    %3067 = vmatpush2.msra.mxu0 0.0
    %3068 = vmatprep.subr.mxu0 0.0
    %3069 = vmatpush2.msra.mxu0 0.0
    %3070 = vmatprep.subr.mxu0 0.0
    %3071 = vmatpush2.msra.mxu0 0.0
    %3072 = vmatprep.subr.mxu0 0.0
    %3073 = vmatpush2.msra.mxu0 0.0
    %3074 = vmatprep.subr.mxu0 0.0
    %3075 = vmatpush2.msra.mxu0 0.0
    %3076 = vmatprep.subr.mxu0 0.0
    %3077 = vmatpush2.msra.mxu0 0.0
    %3078 = vmatprep.subr.mxu0 0.0
    %3079 = vmatpush2.msra.mxu0 0.0
    %3080 = vmatprep.subr.mxu0 0.0
    %3081 = vmatpush2.msra.mxu0 0.0
    %3082 = vmatprep.subr.mxu0 0.0
    %3083 = vmatpush2.msra.mxu0 0.0
    %3084 = vmatprep.mubr.f32.mxu0 0.0
    %3085 = vmatmul.mubr.f32.gmra.mxu0 %v3018
    %v3086 = vpop.f32.mrf.mxu0
    %v3087 = vadd.f32 0.0, %v3086
    %v3088 = vpop.f32.mrf.mxu0
    %3089 = vdwg.mxu0
    %v3090 = vld [vmem:[%s16] sm:$0xff]
    %v3091 = vld [vmem:[%s16 + $0x8] sm:$0xff]
    %v3092 = vld [vmem:[%s16 + $0x10] sm:$0xff]
    %v3093 = vld [vmem:[%s16 + $0x18] sm:$0xff]
    %v3094 = vld [vmem:[%s16 + $0x20] sm:$0xff]
    %v3095 = vld [vmem:[%s16 + $0x28] sm:$0xff]
    %v3096 = vld [vmem:[%s16 + $0x30] sm:$0xff]
    %v3097 = vld [vmem:[%s16 + $0x38] sm:$0xff]
    %v3098 = vld [vmem:[%s16 + $0x40] sm:$0xff]
    %v3099 = vld [vmem:[%s16 + $0x48] sm:$0xff]
    %v3100 = vld [vmem:[%s16 + $0x50] sm:$0xff]
    %v3101 = vld [vmem:[%s16 + $0x58] sm:$0xff]
    %v3102 = vld [vmem:[%s16 + $0x60] sm:$0xff]
    %v3103 = vld [vmem:[%s16 + $0x68] sm:$0xff]
    %v3104 = vld [vmem:[%s16 + $0x70] sm:$0xff]
    %v3105 = vld [vmem:[%s16 + $0x78] sm:$0xff]
    %s3106 = scalar_lea.vmem %s15, 2
    %v3107 = vld [vmem:[%s3106] sm:$0x3]
    %v3109 = vsel %vm3016, %v3107, 0
    %3111 = vmatprep.subr.mxu0 0.0
    %3112 = vmatpush1.msra.mxu0 0.0
    %3113 = vmatprep.subr.mxu0 0.0
    %3114 = vmatpush1.msra.mxu0 0.0
    %3115 = vmatprep.subr.mxu0 0.0
    %3116 = vmatpush1.msra.mxu0 0.0
    %3117 = vmatprep.subr.mxu0 0.0
    %3118 = vmatpush1.msra.mxu0 0.0
    %3119 = vmatprep.subr.mxu0 0.0
    %3120 = vmatpush1.msra.mxu0 0.0
    %3121 = vmatprep.subr.mxu0 0.0
    %3122 = vmatpush1.msra.mxu0 0.0
    %3123 = vmatprep.subr.mxu0 0.0
    %3124 = vmatpush1.msra.mxu0 0.0
    %3125 = vmatprep.subr.mxu0 0.0
    %3126 = vmatpush1.msra.mxu0 0.0
    %3127 = vmatprep.subr.mxu0 0.0
    %3128 = vmatpush1.msra.mxu0 0.0
    %3129 = vmatprep.subr.mxu0 0.0
    %3130 = vmatpush1.msra.mxu0 0.0
    %3131 = vmatprep.subr.mxu0 0.0
    %3132 = vmatpush1.msra.mxu0 0.0
    %3133 = vmatprep.subr.mxu0 0.0
    %3134 = vmatpush1.msra.mxu0 0.0
    %3135 = vmatprep.subr.mxu0 0.0
    %3136 = vmatpush1.msra.mxu0 0.0
    %3137 = vmatprep.subr.mxu0 0.0
    %3138 = vmatpush1.msra.mxu0 0.0
    %3139 = vmatprep.subr.mxu0 0.0
    %3140 = vmatpush1.msra.mxu0 0.0
    %3141 = vmatprep.subr.mxu0 0.0
    %3142 = vmatpush1.msra.mxu0 %v3014
    %3143 = vmatprep.subr.mxu0 0.0
    %3144 = vmatpush2.msra.mxu0 0.0
    %3145 = vmatprep.subr.mxu0 0.0
    %3146 = vmatpush2.msra.mxu0 0.0
    %3147 = vmatprep.subr.mxu0 0.0
    %3148 = vmatpush2.msra.mxu0 0.0
    %3149 = vmatprep.subr.mxu0 0.0
    %3150 = vmatpush2.msra.mxu0 0.0
    %3151 = vmatprep.subr.mxu0 0.0
    %3152 = vmatpush2.msra.mxu0 0.0
    %3153 = vmatprep.subr.mxu0 0.0
    %3154 = vmatpush2.msra.mxu0 0.0
    %3155 = vmatprep.subr.mxu0 0.0
    %3156 = vmatpush2.msra.mxu0 0.0
    %3157 = vmatprep.subr.mxu0 0.0
    %3158 = vmatpush2.msra.mxu0 0.0
    %3159 = vmatprep.subr.mxu0 0.0
    %3160 = vmatpush2.msra.mxu0 0.0
    %3161 = vmatprep.subr.mxu0 0.0
    %3162 = vmatpush2.msra.mxu0 0.0
    %3163 = vmatprep.subr.mxu0 0.0
    %3164 = vmatpush2.msra.mxu0 0.0
    %3165 = vmatprep.subr.mxu0 0.0
    %3166 = vmatpush2.msra.mxu0 0.0
    %3167 = vmatprep.subr.mxu0 0.0
    %3168 = vmatpush2.msra.mxu0 0.0
    %3169 = vmatprep.subr.mxu0 0.0
    %3170 = vmatpush2.msra.mxu0 0.0
    %3171 = vmatprep.subr.mxu0 0.0
    %3172 = vmatpush2.msra.mxu0 0.0
    %3173 = vmatprep.subr.mxu0 0.0
    %3174 = vmatpush2.msra.mxu0 0.0
    %3175 = vmatprep.mubr.f32.mxu0 0.0
    %3176 = vmatmul.mubr.f32.gmra.mxu0 %v3109
    %v3177 = vpop.f32.mrf.mxu0
    %v3178 = vadd.f32 0.0, %v3177
    %v3179 = vpop.f32.mrf.mxu0
    %3180 = vdwg.mxu0
    %s3181 = scalar_lea.vmem %s16, 128
    %v3182 = vld [vmem:[%s3181] sm:$0xff]
    %v3183 = vld [vmem:[%s3181 + $0x8] sm:$0xff]
    %v3184 = vld [vmem:[%s3181 + $0x10] sm:$0xff]
    %v3185 = vld [vmem:[%s3181 + $0x18] sm:$0xff]
    %v3186 = vld [vmem:[%s3181 + $0x20] sm:$0xff]
    %v3187 = vld [vmem:[%s3181 + $0x28] sm:$0xff]
    %v3188 = vld [vmem:[%s3181 + $0x30] sm:$0xff]
    %v3189 = vld [vmem:[%s3181 + $0x38] sm:$0xff]
    %v3190 = vld [vmem:[%s3181 + $0x40] sm:$0xff]
    %v3191 = vld [vmem:[%s3181 + $0x48] sm:$0xff]
    %v3192 = vld [vmem:[%s3181 + $0x50] sm:$0xff]
    %v3193 = vld [vmem:[%s3181 + $0x58] sm:$0xff]
    %v3194 = vld [vmem:[%s3181 + $0x60] sm:$0xff]
    %v3195 = vld [vmem:[%s3181 + $0x68] sm:$0xff]
    %v3196 = vld [vmem:[%s3181 + $0x70] sm:$0xff]
    %v3197 = vld [vmem:[%s3181 + $0x78] sm:$0xff]
    %3198 = vmatprep.subr.mxu0 0.0
    %3199 = vmatpush1.msra.mxu0 %v3197
    %3200 = vmatprep.subr.mxu0 0.0
    %3201 = vmatpush1.msra.mxu0 %v3196
    %3202 = vmatprep.subr.mxu0 0.0
    %3203 = vmatpush1.msra.mxu0 %v3195
    %3204 = vmatprep.subr.mxu0 0.0
    %3205 = vmatpush1.msra.mxu0 %v3194
    %3206 = vmatprep.subr.mxu0 0.0
    %3207 = vmatpush1.msra.mxu0 %v3193
    %3208 = vmatprep.subr.mxu0 0.0
    %3209 = vmatpush1.msra.mxu0 %v3192
    %3210 = vmatprep.subr.mxu0 0.0
    %3211 = vmatpush1.msra.mxu0 %v3191
    %3212 = vmatprep.subr.mxu0 0.0
    %3213 = vmatpush1.msra.mxu0 %v3190
    %3214 = vmatprep.subr.mxu0 0.0
    %3215 = vmatpush1.msra.mxu0 %v3189
    %3216 = vmatprep.subr.mxu0 0.0
    %3217 = vmatpush1.msra.mxu0 %v3188
    %3218 = vmatprep.subr.mxu0 0.0
    %3219 = vmatpush1.msra.mxu0 %v3187
    %3220 = vmatprep.subr.mxu0 0.0
    %3221 = vmatpush1.msra.mxu0 %v3186
    %3222 = vmatprep.subr.mxu0 0.0
    %3223 = vmatpush1.msra.mxu0 %v3185
    %3224 = vmatprep.subr.mxu0 0.0
    %3225 = vmatpush1.msra.mxu0 %v3184
    %3226 = vmatprep.subr.mxu0 0.0
    %3227 = vmatpush1.msra.mxu0 %v3183
    %3228 = vmatprep.subr.mxu0 0.0
    %3229 = vmatpush1.msra.mxu0 %v3182
    %3230 = vmatprep.subr.mxu0 0.0
    %3231 = vmatpush2.msra.mxu0 0.0
    %3232 = vmatprep.subr.mxu0 0.0
    %3233 = vmatpush2.msra.mxu0 0.0
    %3234 = vmatprep.subr.mxu0 0.0
    %3235 = vmatpush2.msra.mxu0 0.0
    %3236 = vmatprep.subr.mxu0 0.0
    %3237 = vmatpush2.msra.mxu0 0.0
    %3238 = vmatprep.subr.mxu0 0.0
    %3239 = vmatpush2.msra.mxu0 0.0
    %3240 = vmatprep.subr.mxu0 0.0
    %3241 = vmatpush2.msra.mxu0 0.0
    %3242 = vmatprep.subr.mxu0 0.0
    %3243 = vmatpush2.msra.mxu0 0.0
    %3244 = vmatprep.subr.mxu0 0.0
    %3245 = vmatpush2.msra.mxu0 0.0
    %3246 = vmatprep.subr.mxu0 0.0
    %3247 = vmatpush2.msra.mxu0 0.0
    %3248 = vmatprep.subr.mxu0 0.0
    %3249 = vmatpush2.msra.mxu0 0.0
    %3250 = vmatprep.subr.mxu0 0.0
    %3251 = vmatpush2.msra.mxu0 0.0
    %3252 = vmatprep.subr.mxu0 0.0
    %3253 = vmatpush2.msra.mxu0 0.0
    %3254 = vmatprep.subr.mxu0 0.0
    %3255 = vmatpush2.msra.mxu0 0.0
    %3256 = vmatprep.subr.mxu0 0.0
    %3257 = vmatpush2.msra.mxu0 0.0
    %3258 = vmatprep.subr.mxu0 0.0
    %3259 = vmatpush2.msra.mxu0 0.0
    %3260 = vmatprep.subr.mxu0 0.0
    %3261 = vmatpush2.msra.mxu0 0.0
    %3262 = vmatprep.mubr.f32.mxu0 0.0
    %3263 = vmatmul.mubr.f32.gmra.mxu0 %v3178
    %v3264 = vpop.f32.mrf.mxu0
    %v3265 = vadd.f32 0.0, %v3264
    %v3266 = vpop.f32.mrf.mxu0
    %3267 = vdwg.mxu0
    %3268 = vmatprep.subr.mxu0 0.0
    %3269 = vmatpush1.msra.mxu0 %v3105
    %3270 = vmatprep.subr.mxu0 0.0
    %3271 = vmatpush1.msra.mxu0 %v3104
    %3272 = vmatprep.subr.mxu0 0.0
    %3273 = vmatpush1.msra.mxu0 %v3103
    %3274 = vmatprep.subr.mxu0 0.0
    %3275 = vmatpush1.msra.mxu0 %v3102
    %3276 = vmatprep.subr.mxu0 0.0
    %3277 = vmatpush1.msra.mxu0 %v3101
    %3278 = vmatprep.subr.mxu0 0.0
    %3279 = vmatpush1.msra.mxu0 %v3100
    %3280 = vmatprep.subr.mxu0 0.0
    %3281 = vmatpush1.msra.mxu0 %v3099
    %3282 = vmatprep.subr.mxu0 0.0
    %3283 = vmatpush1.msra.mxu0 %v3098
    %3284 = vmatprep.subr.mxu0 0.0
    %3285 = vmatpush1.msra.mxu0 %v3097
    %3286 = vmatprep.subr.mxu0 0.0
    %3287 = vmatpush1.msra.mxu0 %v3096
    %3288 = vmatprep.subr.mxu0 0.0
    %3289 = vmatpush1.msra.mxu0 %v3095
    %3290 = vmatprep.subr.mxu0 0.0
    %3291 = vmatpush1.msra.mxu0 %v3094
    %3292 = vmatprep.subr.mxu0 0.0
    %3293 = vmatpush1.msra.mxu0 %v3093
    %3294 = vmatprep.subr.mxu0 0.0
    %3295 = vmatpush1.msra.mxu0 %v3092
    %3296 = vmatprep.subr.mxu0 0.0
    %3297 = vmatpush1.msra.mxu0 %v3091
    %3298 = vmatprep.subr.mxu0 0.0
    %3299 = vmatpush1.msra.mxu0 %v3090
    %3300 = vmatprep.subr.mxu0 0.0
    %3301 = vmatpush2.msra.mxu0 0.0
    %3302 = vmatprep.subr.mxu0 0.0
    %3303 = vmatpush2.msra.mxu0 0.0
    %3304 = vmatprep.subr.mxu0 0.0
    %3305 = vmatpush2.msra.mxu0 0.0
    %3306 = vmatprep.subr.mxu0 0.0
    %3307 = vmatpush2.msra.mxu0 0.0
    %3308 = vmatprep.subr.mxu0 0.0
    %3309 = vmatpush2.msra.mxu0 0.0
    %3310 = vmatprep.subr.mxu0 0.0
    %3311 = vmatpush2.msra.mxu0 0.0
    %3312 = vmatprep.subr.mxu0 0.0
    %3313 = vmatpush2.msra.mxu0 0.0
    %3314 = vmatprep.subr.mxu0 0.0
    %3315 = vmatpush2.msra.mxu0 0.0
    %3316 = vmatprep.subr.mxu0 0.0
    %3317 = vmatpush2.msra.mxu0 0.0
    %3318 = vmatprep.subr.mxu0 0.0
    %3319 = vmatpush2.msra.mxu0 0.0
    %3320 = vmatprep.subr.mxu0 0.0
    %3321 = vmatpush2.msra.mxu0 0.0
    %3322 = vmatprep.subr.mxu0 0.0
    %3323 = vmatpush2.msra.mxu0 0.0
    %3324 = vmatprep.subr.mxu0 0.0
    %3325 = vmatpush2.msra.mxu0 0.0
    %3326 = vmatprep.subr.mxu0 0.0
    %3327 = vmatpush2.msra.mxu0 0.0
    %3328 = vmatprep.subr.mxu0 0.0
    %3329 = vmatpush2.msra.mxu0 0.0
    %3330 = vmatprep.subr.mxu0 0.0
    %3331 = vmatpush2.msra.mxu0 0.0
    %3332 = vmatprep.mubr.f32.mxu0 0.0
    %3333 = vmatmul.mubr.f32.gmra.mxu0 %v3087
    %v3334 = vpop.f32.mrf.mxu0
    %v3335 = vadd.f32 %v3265, %v3334
    %v3336 = vpop.f32.mrf.mxu0
    %3337 = vdwg.mxu0
    %s3338 = scalar_lea.vmem %s15, 4
    %v3339 = vld [vmem:[%s3338] sm:$0x3]
    %v3341 = vsel %vm3016, %v3339, 0
    %3343 = vmatprep.subr.mxu0 0.0
    %3344 = vmatpush1.msra.mxu0 0.0
    %3345 = vmatprep.subr.mxu0 0.0
    %3346 = vmatpush1.msra.mxu0 0.0
    %3347 = vmatprep.subr.mxu0 0.0
    %3348 = vmatpush1.msra.mxu0 0.0
    %3349 = vmatprep.subr.mxu0 0.0
    %3350 = vmatpush1.msra.mxu0 0.0
    %3351 = vmatprep.subr.mxu0 0.0
    %3352 = vmatpush1.msra.mxu0 0.0
    %3353 = vmatprep.subr.mxu0 0.0
    %3354 = vmatpush1.msra.mxu0 0.0
    %3355 = vmatprep.subr.mxu0 0.0
    %3356 = vmatpush1.msra.mxu0 0.0
    %3357 = vmatprep.subr.mxu0 0.0
    %3358 = vmatpush1.msra.mxu0 0.0
    %3359 = vmatprep.subr.mxu0 0.0
    %3360 = vmatpush1.msra.mxu0 0.0
    %3361 = vmatprep.subr.mxu0 0.0
    %3362 = vmatpush1.msra.mxu0 0.0
    %3363 = vmatprep.subr.mxu0 0.0
    %3364 = vmatpush1.msra.mxu0 0.0
    %3365 = vmatprep.subr.mxu0 0.0
    %3366 = vmatpush1.msra.mxu0 0.0
    %3367 = vmatprep.subr.mxu0 0.0
    %3368 = vmatpush1.msra.mxu0 0.0
    %3369 = vmatprep.subr.mxu0 0.0
    %3370 = vmatpush1.msra.mxu0 0.0
    %3371 = vmatprep.subr.mxu0 0.0
    %3372 = vmatpush1.msra.mxu0 0.0
    %3373 = vmatprep.subr.mxu0 0.0
    %3374 = vmatpush1.msra.mxu0 %v3014
    %3375 = vmatprep.subr.mxu0 0.0
    %3376 = vmatpush2.msra.mxu0 0.0
    %3377 = vmatprep.subr.mxu0 0.0
    %3378 = vmatpush2.msra.mxu0 0.0
    %3379 = vmatprep.subr.mxu0 0.0
    %3380 = vmatpush2.msra.mxu0 0.0
    %3381 = vmatprep.subr.mxu0 0.0
    %3382 = vmatpush2.msra.mxu0 0.0
    %3383 = vmatprep.subr.mxu0 0.0
    %3384 = vmatpush2.msra.mxu0 0.0
    %3385 = vmatprep.subr.mxu0 0.0
    %3386 = vmatpush2.msra.mxu0 0.0
    %3387 = vmatprep.subr.mxu0 0.0
    %3388 = vmatpush2.msra.mxu0 0.0
    %3389 = vmatprep.subr.mxu0 0.0
    %3390 = vmatpush2.msra.mxu0 0.0
    %3391 = vmatprep.subr.mxu0 0.0
    %3392 = vmatpush2.msra.mxu0 0.0
    %3393 = vmatprep.subr.mxu0 0.0
    %3394 = vmatpush2.msra.mxu0 0.0
    %3395 = vmatprep.subr.mxu0 0.0
    %3396 = vmatpush2.msra.mxu0 0.0
    %3397 = vmatprep.subr.mxu0 0.0
    %3398 = vmatpush2.msra.mxu0 0.0
    %3399 = vmatprep.subr.mxu0 0.0
    %3400 = vmatpush2.msra.mxu0 0.0
    %3401 = vmatprep.subr.mxu0 0.0
    %3402 = vmatpush2.msra.mxu0 0.0
    %3403 = vmatprep.subr.mxu0 0.0
    %3404 = vmatpush2.msra.mxu0 0.0
    %3405 = vmatprep.subr.mxu0 0.0
    %3406 = vmatpush2.msra.mxu0 0.0
    %3407 = vmatprep.mubr.f32.mxu0 0.0
    %3408 = vmatmul.mubr.f32.gmra.mxu0 %v3341
    %v3409 = vpop.f32.mrf.mxu0
    %v3410 = vadd.f32 0.0, %v3409
    %v3411 = vpop.f32.mrf.mxu0
    %3412 = vdwg.mxu0
    %s3413 = scalar_lea.vmem %s16, 256
    %v3414 = vld [vmem:[%s3413] sm:$0xff]
    %v3415 = vld [vmem:[%s3413 + $0x8] sm:$0xff]
    %v3416 = vld [vmem:[%s3413 + $0x10] sm:$0xff]
    %v3417 = vld [vmem:[%s3413 + $0x18] sm:$0xff]
    %v3418 = vld [vmem:[%s3413 + $0x20] sm:$0xff]
    %v3419 = vld [vmem:[%s3413 + $0x28] sm:$0xff]
    %v3420 = vld [vmem:[%s3413 + $0x30] sm:$0xff]
    %v3421 = vld [vmem:[%s3413 + $0x38] sm:$0xff]
    %v3422 = vld [vmem:[%s3413 + $0x40] sm:$0xff]
    %v3423 = vld [vmem:[%s3413 + $0x48] sm:$0xff]
    %v3424 = vld [vmem:[%s3413 + $0x50] sm:$0xff]
    %v3425 = vld [vmem:[%s3413 + $0x58] sm:$0xff]
    %v3426 = vld [vmem:[%s3413 + $0x60] sm:$0xff]
    %v3427 = vld [vmem:[%s3413 + $0x68] sm:$0xff]
    %v3428 = vld [vmem:[%s3413 + $0x70] sm:$0xff]
    %v3429 = vld [vmem:[%s3413 + $0x78] sm:$0xff]
    %3430 = vmatprep.subr.mxu0 0.0
    %3431 = vmatpush1.msra.mxu0 %v3429
    %3432 = vmatprep.subr.mxu0 0.0
    %3433 = vmatpush1.msra.mxu0 %v3428
    %3434 = vmatprep.subr.mxu0 0.0
    %3435 = vmatpush1.msra.mxu0 %v3427
    %3436 = vmatprep.subr.mxu0 0.0
    %3437 = vmatpush1.msra.mxu0 %v3426
    %3438 = vmatprep.subr.mxu0 0.0
    %3439 = vmatpush1.msra.mxu0 %v3425
    %3440 = vmatprep.subr.mxu0 0.0
    %3441 = vmatpush1.msra.mxu0 %v3424
    %3442 = vmatprep.subr.mxu0 0.0
    %3443 = vmatpush1.msra.mxu0 %v3423
    %3444 = vmatprep.subr.mxu0 0.0
    %3445 = vmatpush1.msra.mxu0 %v3422
    %3446 = vmatprep.subr.mxu0 0.0
    %3447 = vmatpush1.msra.mxu0 %v3421
    %3448 = vmatprep.subr.mxu0 0.0
    %3449 = vmatpush1.msra.mxu0 %v3420
    %3450 = vmatprep.subr.mxu0 0.0
    %3451 = vmatpush1.msra.mxu0 %v3419
    %3452 = vmatprep.subr.mxu0 0.0
    %3453 = vmatpush1.msra.mxu0 %v3418
    %3454 = vmatprep.subr.mxu0 0.0
    %3455 = vmatpush1.msra.mxu0 %v3417
    %3456 = vmatprep.subr.mxu0 0.0
    %3457 = vmatpush1.msra.mxu0 %v3416
    %3458 = vmatprep.subr.mxu0 0.0
    %3459 = vmatpush1.msra.mxu0 %v3415
    %3460 = vmatprep.subr.mxu0 0.0
    %3461 = vmatpush1.msra.mxu0 %v3414
    %3462 = vmatprep.subr.mxu0 0.0
    %3463 = vmatpush2.msra.mxu0 0.0
    %3464 = vmatprep.subr.mxu0 0.0
    %3465 = vmatpush2.msra.mxu0 0.0
    %3466 = vmatprep.subr.mxu0 0.0
    %3467 = vmatpush2.msra.mxu0 0.0
    %3468 = vmatprep.subr.mxu0 0.0
    %3469 = vmatpush2.msra.mxu0 0.0
    %3470 = vmatprep.subr.mxu0 0.0
    %3471 = vmatpush2.msra.mxu0 0.0
    %3472 = vmatprep.subr.mxu0 0.0
    %3473 = vmatpush2.msra.mxu0 0.0
    %3474 = vmatprep.subr.mxu0 0.0
    %3475 = vmatpush2.msra.mxu0 0.0
    %3476 = vmatprep.subr.mxu0 0.0
    %3477 = vmatpush2.msra.mxu0 0.0
    %3478 = vmatprep.subr.mxu0 0.0
    %3479 = vmatpush2.msra.mxu0 0.0
    %3480 = vmatprep.subr.mxu0 0.0
    %3481 = vmatpush2.msra.mxu0 0.0
    %3482 = vmatprep.subr.mxu0 0.0
    %3483 = vmatpush2.msra.mxu0 0.0
    %3484 = vmatprep.subr.mxu0 0.0
    %3485 = vmatpush2.msra.mxu0 0.0
    %3486 = vmatprep.subr.mxu0 0.0
    %3487 = vmatpush2.msra.mxu0 0.0
    %3488 = vmatprep.subr.mxu0 0.0
    %3489 = vmatpush2.msra.mxu0 0.0
    %3490 = vmatprep.subr.mxu0 0.0
    %3491 = vmatpush2.msra.mxu0 0.0
    %3492 = vmatprep.subr.mxu0 0.0
    %3493 = vmatpush2.msra.mxu0 0.0
    %3494 = vmatprep.mubr.f32.mxu0 0.0
    %3495 = vmatmul.mubr.f32.gmra.mxu0 %v3410
    %v3496 = vpop.f32.mrf.mxu0
    %v3497 = vadd.f32 0.0, %v3496
    %v3498 = vpop.f32.mrf.mxu0
    %3499 = vdwg.mxu0
    %v3500 = vadd.f32 %v3335, %v3497
    %s3501 = scalar_lea.vmem %s15, 6
    %v3502 = vld [vmem:[%s3501] sm:$0x3]
    %v3504 = vsel %vm3016, %v3502, 0
    %3506 = vmatprep.subr.mxu0 0.0
    %3507 = vmatpush1.msra.mxu0 0.0
    %3508 = vmatprep.subr.mxu0 0.0
    %3509 = vmatpush1.msra.mxu0 0.0
    %3510 = vmatprep.subr.mxu0 0.0
    %3511 = vmatpush1.msra.mxu0 0.0
    %3512 = vmatprep.subr.mxu0 0.0
    %3513 = vmatpush1.msra.mxu0 0.0
    %3514 = vmatprep.subr.mxu0 0.0
    %3515 = vmatpush1.msra.mxu0 0.0
    %3516 = vmatprep.subr.mxu0 0.0
    %3517 = vmatpush1.msra.mxu0 0.0
    %3518 = vmatprep.subr.mxu0 0.0
    %3519 = vmatpush1.msra.mxu0 0.0
    %3520 = vmatprep.subr.mxu0 0.0
    %3521 = vmatpush1.msra.mxu0 0.0
    %3522 = vmatprep.subr.mxu0 0.0
    %3523 = vmatpush1.msra.mxu0 0.0
    %3524 = vmatprep.subr.mxu0 0.0
    %3525 = vmatpush1.msra.mxu0 0.0
    %3526 = vmatprep.subr.mxu0 0.0
    %3527 = vmatpush1.msra.mxu0 0.0
    %3528 = vmatprep.subr.mxu0 0.0
    %3529 = vmatpush1.msra.mxu0 0.0
    %3530 = vmatprep.subr.mxu0 0.0
    %3531 = vmatpush1.msra.mxu0 0.0
    %3532 = vmatprep.subr.mxu0 0.0
    %3533 = vmatpush1.msra.mxu0 0.0
    %3534 = vmatprep.subr.mxu0 0.0
    %3535 = vmatpush1.msra.mxu0 0.0
    %3536 = vmatprep.subr.mxu0 0.0
    %3537 = vmatpush1.msra.mxu0 %v3014
    %3538 = vmatprep.subr.mxu0 0.0
    %3539 = vmatpush2.msra.mxu0 0.0
    %3540 = vmatprep.subr.mxu0 0.0
    %3541 = vmatpush2.msra.mxu0 0.0
    %3542 = vmatprep.subr.mxu0 0.0
    %3543 = vmatpush2.msra.mxu0 0.0
    %3544 = vmatprep.subr.mxu0 0.0
    %3545 = vmatpush2.msra.mxu0 0.0
    %3546 = vmatprep.subr.mxu0 0.0
    %3547 = vmatpush2.msra.mxu0 0.0
    %3548 = vmatprep.subr.mxu0 0.0
    %3549 = vmatpush2.msra.mxu0 0.0
    %3550 = vmatprep.subr.mxu0 0.0
    %3551 = vmatpush2.msra.mxu0 0.0
    %3552 = vmatprep.subr.mxu0 0.0
    %3553 = vmatpush2.msra.mxu0 0.0
    %3554 = vmatprep.subr.mxu0 0.0
    %3555 = vmatpush2.msra.mxu0 0.0
    %3556 = vmatprep.subr.mxu0 0.0
    %3557 = vmatpush2.msra.mxu0 0.0
    %3558 = vmatprep.subr.mxu0 0.0
    %3559 = vmatpush2.msra.mxu0 0.0
    %3560 = vmatprep.subr.mxu0 0.0
    %3561 = vmatpush2.msra.mxu0 0.0
    %3562 = vmatprep.subr.mxu0 0.0
    %3563 = vmatpush2.msra.mxu0 0.0
    %3564 = vmatprep.subr.mxu0 0.0
    %3565 = vmatpush2.msra.mxu0 0.0
    %3566 = vmatprep.subr.mxu0 0.0
    %3567 = vmatpush2.msra.mxu0 0.0
    %3568 = vmatprep.subr.mxu0 0.0
    %3569 = vmatpush2.msra.mxu0 0.0
    %3570 = vmatprep.mubr.f32.mxu0 0.0
    %3571 = vmatmul.mubr.f32.gmra.mxu0 %v3504
    %v3572 = vpop.f32.mrf.mxu0
    %v3573 = vadd.f32 0.0, %v3572
    %v3574 = vpop.f32.mrf.mxu0
    %3575 = vdwg.mxu0
    %s3576 = scalar_lea.vmem %s16, 384
    %v3577 = vld [vmem:[%s3576] sm:$0xff]
    %v3578 = vld [vmem:[%s3576 + $0x8] sm:$0xff]
    %v3579 = vld [vmem:[%s3576 + $0x10] sm:$0xff]
    %v3580 = vld [vmem:[%s3576 + $0x18] sm:$0xff]
    %v3581 = vld [vmem:[%s3576 + $0x20] sm:$0xff]
    %v3582 = vld [vmem:[%s3576 + $0x28] sm:$0xff]
    %v3583 = vld [vmem:[%s3576 + $0x30] sm:$0xff]
    %v3584 = vld [vmem:[%s3576 + $0x38] sm:$0xff]
    %v3585 = vld [vmem:[%s3576 + $0x40] sm:$0xff]
    %v3586 = vld [vmem:[%s3576 + $0x48] sm:$0xff]
    %v3587 = vld [vmem:[%s3576 + $0x50] sm:$0xff]
    %v3588 = vld [vmem:[%s3576 + $0x58] sm:$0xff]
    %v3589 = vld [vmem:[%s3576 + $0x60] sm:$0xff]
    %v3590 = vld [vmem:[%s3576 + $0x68] sm:$0xff]
    %v3591 = vld [vmem:[%s3576 + $0x70] sm:$0xff]
    %v3592 = vld [vmem:[%s3576 + $0x78] sm:$0xff]
    %3593 = vmatprep.subr.mxu0 0.0
    %3594 = vmatpush1.msra.mxu0 %v3592
    %3595 = vmatprep.subr.mxu0 0.0
    %3596 = vmatpush1.msra.mxu0 %v3591
    %3597 = vmatprep.subr.mxu0 0.0
    %3598 = vmatpush1.msra.mxu0 %v3590
    %3599 = vmatprep.subr.mxu0 0.0
    %3600 = vmatpush1.msra.mxu0 %v3589
    %3601 = vmatprep.subr.mxu0 0.0
    %3602 = vmatpush1.msra.mxu0 %v3588
    %3603 = vmatprep.subr.mxu0 0.0
    %3604 = vmatpush1.msra.mxu0 %v3587
    %3605 = vmatprep.subr.mxu0 0.0
    %3606 = vmatpush1.msra.mxu0 %v3586
    %3607 = vmatprep.subr.mxu0 0.0
    %3608 = vmatpush1.msra.mxu0 %v3585
    %3609 = vmatprep.subr.mxu0 0.0
    %3610 = vmatpush1.msra.mxu0 %v3584
    %3611 = vmatprep.subr.mxu0 0.0
    %3612 = vmatpush1.msra.mxu0 %v3583
    %3613 = vmatprep.subr.mxu0 0.0
    %3614 = vmatpush1.msra.mxu0 %v3582
    %3615 = vmatprep.subr.mxu0 0.0
    %3616 = vmatpush1.msra.mxu0 %v3581
    %3617 = vmatprep.subr.mxu0 0.0
    %3618 = vmatpush1.msra.mxu0 %v3580
    %3619 = vmatprep.subr.mxu0 0.0
    %3620 = vmatpush1.msra.mxu0 %v3579
    %3621 = vmatprep.subr.mxu0 0.0
    %3622 = vmatpush1.msra.mxu0 %v3578
    %3623 = vmatprep.subr.mxu0 0.0
    %3624 = vmatpush1.msra.mxu0 %v3577
    %3625 = vmatprep.subr.mxu0 0.0
    %3626 = vmatpush2.msra.mxu0 0.0
    %3627 = vmatprep.subr.mxu0 0.0
    %3628 = vmatpush2.msra.mxu0 0.0
    %3629 = vmatprep.subr.mxu0 0.0
    %3630 = vmatpush2.msra.mxu0 0.0
    %3631 = vmatprep.subr.mxu0 0.0
    %3632 = vmatpush2.msra.mxu0 0.0
    %3633 = vmatprep.subr.mxu0 0.0
    %3634 = vmatpush2.msra.mxu0 0.0
    %3635 = vmatprep.subr.mxu0 0.0
    %3636 = vmatpush2.msra.mxu0 0.0
    %3637 = vmatprep.subr.mxu0 0.0
    %3638 = vmatpush2.msra.mxu0 0.0
    %3639 = vmatprep.subr.mxu0 0.0
    %3640 = vmatpush2.msra.mxu0 0.0
    %3641 = vmatprep.subr.mxu0 0.0
    %3642 = vmatpush2.msra.mxu0 0.0
    %3643 = vmatprep.subr.mxu0 0.0
    %3644 = vmatpush2.msra.mxu0 0.0
    %3645 = vmatprep.subr.mxu0 0.0
    %3646 = vmatpush2.msra.mxu0 0.0
    %3647 = vmatprep.subr.mxu0 0.0
    %3648 = vmatpush2.msra.mxu0 0.0
    %3649 = vmatprep.subr.mxu0 0.0
    %3650 = vmatpush2.msra.mxu0 0.0
    %3651 = vmatprep.subr.mxu0 0.0
    %3652 = vmatpush2.msra.mxu0 0.0
    %3653 = vmatprep.subr.mxu0 0.0
    %3654 = vmatpush2.msra.mxu0 0.0
    %3655 = vmatprep.subr.mxu0 0.0
    %3656 = vmatpush2.msra.mxu0 0.0
    %3657 = vmatprep.mubr.f32.mxu0 0.0
    %3658 = vmatmul.mubr.f32.gmra.mxu0 %v3573
    %v3659 = vpop.f32.mrf.mxu0
    %v3660 = vadd.f32 0.0, %v3659
    %v3661 = vpop.f32.mrf.mxu0
    %3662 = vdwg.mxu0
    %v3663 = vadd.f32 %v3500, %v3660
    %v3664 = vld [vmem:[%s17] sm:$0x1]
    %v3666 = vlaneseq
    %v3667 = vshrl.u32 %v3666, 7
    %v3668 = vsub.s32 0, %v3667
    %v3669 = vrot.slane %v3664, %v3668
    %v3671 = vadd.f32 %v3663, %v3669
    %v3672 = vmax.f32 %v3671, 0.0
    %vm3673 = vcmask 74752
    %3674 = vst.msk [vmem:[#allocation11] sm:$0x3] %vm3673, %v3672
    // Predicated region
    $region94: #{tpu_custom_call.1} parent=1 // pred_check
      _
    $region95: #{tpu_custom_call.1} parent=1 // pred_check_branch
      %3676 = sbr.rel (0) target = $region97
    $region96: #{tpu_custom_call.1} parent=1 // pred_region
      %s3678 = ssub.s32 32, 32
      %3679 = vsyncadd [#allocation4], %s3678
      %s3681 = sshll.u32 [#allocation11], 4
      %s3682 = int_to_ptr.vmem [resolvable:$true] %s3681
      %3684 = dma.vmem_to_hbm [thread:$0]  %s3682, 32, %s18, [#allocation4]
    $region97: #{tpu_custom_call.1} parent=1 // pred_fallthru
      _
    // Predicated region
    $region98: #{tpu_custom_call.1} parent=1 // pred_check
      _
    $region99: #{tpu_custom_call.1} parent=1 // pred_check_branch
      %3686 = sbr.rel (0) target = $region101
    $region100: #{tpu_custom_call.1} parent=1 // pred_region
      %3687 = dma.done [#allocation4], 32
    $region101: #{tpu_custom_call.1} parent=1 // pred_fallthru
      _
    %3688 = vsyncpa [#allocation3], 1
    %3689 = vsyncpa [#allocation6], 1
    %3690 = vsyncpa [#allocation9], 1
    %3691 = vsyncpa [#allocation4], 1

</llo_original>
